<compile_context>
chip_gen: v7x
topology: tpu7x:2x2x1
jax: 0.10.0
libtpu: 0.0.40
codegen_flags: <defaults>
</compile_context>

<pallas_src>
import functools

import numpy as np

import jax
import jax.numpy as jnp
from jax.experimental import pallas as pl
from jax.experimental.pallas import tpu as pltpu


# ----------------------------------------------------------------------------
# Helpers (host side)
# ----------------------------------------------------------------------------
def _interp_matrix(out_size, in_size):
    """Dense 1-D bilinear interpolation matrix, align_corners=True (PyTorch)."""
    M = np.zeros((out_size, in_size), np.float32)
    if in_size == 1 or out_size == 1:
        M[:, 0] = 1.0
        return M
    scale = (in_size - 1) / (out_size - 1)
    for i in range(out_size):
        s = i * scale
        i0 = min(int(np.floor(s)), in_size - 2)
        t = s - i0
        M[i, i0] += 1.0 - t
        M[i, i0 + 1] += t
    return M


def _fold_bn(bias, gamma, beta, mean, var, eps):
    """Fold conv bias + inference-mode BN into (per-channel scale, shift)."""
    s = gamma / jnp.sqrt(var + eps)
    return s, beta + (bias - mean) * s


def _vmem_capacity_bytes(default=64 * 1024 * 1024):
    """Physical VMEM of the local chip; conservative (v7x-safe) fallback."""
    try:
        cap = getattr(pltpu.get_tpu_info(), "vmem_capacity_bytes", None)
        if cap:
            return int(cap)
    except Exception:
        pass
    return default


def _pick_tile_h(H, W, x, c_out, c_h, h_pad, wp, out_bytes, *,
                 budget_bytes, min_tiles, tile_h=None):
    """Largest divisor of H whose per-step VMEM working set fits the budget,
    while keeping at least `min_tiles` row tiles (grid parallelism)."""
    if tile_h is not None:
        assert H % tile_h == 0, "tile_h must divide the upsampled height"
        return tile_h
    divs = sorted((d for d in range(1, H + 1) if H % d == 0), reverse=True)
    cands = [d for d in divs if H // d >= min_tiles] or [divs[-1]]
    # Resident / double-buffered constants.
    fixed = 2 * 2 * h_pad * wp * c_out                     # low slab (bf16, x2 buffers)
    fixed += 2 * 4 * 10 * W * c_out                        # dw taps + bias (f32, x2)
    fixed += 2 * 2 * (c_out * c_out + c_h * c_out)         # 1x1 weights (bf16, x2)
    fixed += 4 * 2 * c_out * 2                             # 1x1 biases
    for th in cands:
        rows = th + 2 * x
        per = 2 * 2 * rows * h_pad                         # interp window (bf16, x2)
        per += 2 * 2 * th * W * c_h                        # higher tile (bf16, x2)
        per += 2 * out_bytes * th * W * c_out              # output tile (x2)
        per += 4 * rows * wp * c_out                       # upsampled tile (f32)
        per += 3 * 4 * th * W * c_out                      # dw acc + matmul temporaries
        if fixed + per <= budget_bytes:
            return th
    return cands[-1]


# ----------------------------------------------------------------------------
# Pallas kernel
# ----------------------------------------------------------------------------
def _ffm_kernel(r_ref, low_ref, hi_ref, wdw_ref, bdw_ref, wl_ref, bl_ref,
                wh_ref, bh_ref, o_ref, *, x, tile_h, w_out, c_out):
    """One grid step = one (batch element, output-row tile).

    r_ref   : (1, tile_h + 2x, h_pad)   bf16 row-interp window (incl. zero pad rows)
    low_ref : (1, h_pad, (W+2x)*c_out)  bf16 W-upsampled + padded lower feature, flat (col, ch)
    hi_ref  : (1, tile_h, W, c_h)       bf16 higher-res feature tile
    wdw_ref : (9, W*c_out)              f32  depthwise taps (BN folded, tiled over W)
    bdw_ref : (1, W*c_out)              f32  depthwise folded bias (tiled over W)
    wl_ref  : (c_out, c_out)            bf16 lower-branch 1x1 weights (BN folded)
    bl_ref  : (1, c_out)                f32
    wh_ref  : (c_h, c_out)              bf16 higher-branch 1x1 weights (BN folded)
    bh_ref  : (1, c_out)                f32
    o_ref   : (1, tile_h, W, c_out)     out_dtype (bf16 by default)
    """
    # 1) Bilinear H-upsample (one bf16 matmul, f32 accumulation).  The window
    #    already encodes the dilated conv's zero padding rows.
    u = jnp.dot(r_ref[0], low_ref[0], preferred_element_type=jnp.float32)
    # u: (tile_h + 2x, (W + 2x) * c_out), lane layout = (column, channel).

    # 2) 3x3 depthwise conv with dilation=x: nine static slices of the flat
    #    padded tile, each scaled by its BN-folded per-channel tap weight.
    wdw = wdw_ref[...]
    acc = None
    for kh in range(3):
        for kw in range(3):
            k = kh * 3 + kw
            tap = u[kh * x: kh * x + tile_h,
                    kw * x * c_out: (kw * x + w_out) * c_out]
            term = tap * wdw[k:k + 1, :]
            acc = term if acc is None else acc + term
    dw = jnp.maximum(acc + bdw_ref[...], 0.0)                # (tile_h, W*c_out)

    # 3) Lower-branch 1x1 conv + BN (folded): lane-dense bf16 MXU matmul.
    dw2 = dw.reshape(tile_h * w_out, c_out).astype(jnp.bfloat16)
    lower = jnp.dot(dw2, wl_ref[...],
                    preferred_element_type=jnp.float32) + bl_ref[...]

    # 4) Higher-branch 1x1 conv + BN (folded).
    hi = hi_ref[0].reshape(tile_h * w_out, -1)
    higher = jnp.dot(hi, wh_ref[...],
                     preferred_element_type=jnp.float32) + bh_ref[...]

    # 5) Fuse: add + ReLU, lane-dense store (c_out on the 128-lane axis).
    out = jnp.maximum(lower + higher, 0.0)
    o_ref[...] = out.reshape(1, tile_h, w_out, c_out).astype(o_ref.dtype)


# ----------------------------------------------------------------------------
# Primary module wrapper: NHWC in / NHWC out (no layout ops on the hot path)
# ----------------------------------------------------------------------------
def feature_fusion_forward_nhwc(higher_nhwc, lower_nhwc, params, *, x=4,
                                eps=1e-5, tile_h=None,
                                out_dtype=jnp.bfloat16,
                                vmem_budget_bytes=None,
                                vmem_limit_bytes=None):
    N, H, W, c_h = higher_nhwc.shape
    Nl, h_lo, w_lo, c_l = lower_nhwc.shape
    assert N == Nl
    assert H == h_lo * x and W == w_lo * x, \
        "higher-res spatial must equal x * lower-res spatial"

    c_out = params['dw_weight'].shape[0]
    assert c_out % c_l == 0
    m = c_out // c_l                                   # depthwise channel multiplier

    # ---- fold inference-mode BatchNorm + conv bias into the conv params ----
    s_dw, b_dw = _fold_bn(params['dw_bias'], params['dw_gamma'],
                          params['dw_beta'], params['dw_mean'],
                          params['dw_var'], eps)
    # (c_out, 1, 3, 3) -> (3, 3, c_out), BN scale folded per output channel.
    w_dw = jnp.transpose(params['dw_weight'][:, 0, :, :], (1, 2, 0)) * s_dw[None, None, :]

    s_l, b_l = _fold_bn(params['cl_bias'], params['cl_gamma'],
                        params['cl_beta'], params['cl_mean'],
                        params['cl_var'], eps)
    w_l = (params['cl_weight'][:, :, 0, 0] * s_l[:, None]).T     # (c_out, c_out)

    s_h, b_h = _fold_bn(params['ch_bias'], params['ch_gamma'],
                        params['ch_beta'], params['ch_mean'],
                        params['ch_var'], eps)
    w_h = (params['ch_weight'][:, :, 0, 0] * s_h[:, None]).T     # (c_h, c_out)

    higher = higher_nhwc.astype(jnp.bfloat16)                    # (N,H,W,c_h)
    lower = lower_nhwc.astype(jnp.float32)                       # (N,h,w,c_l)

    wp = W + 2 * x                              # padded width for the dilated conv
    h_pad = max(16, -(-h_lo // 16) * 16)        # bf16-packed row-interp contraction dim

    # W-axis bilinear upsample (+ zero pad columns) on the small low-res tensor.
    # TODO(synk): fuse the W-axis interpolation into the kernel as well.
    C = _interp_matrix(W, w_lo)
    Cp = np.zeros((wp, w_lo), np.float32)
    Cp[x:x + W] = C
    low_up = jnp.einsum('Jw,nhwc->nhJc', jnp.asarray(Cp), lower)            # (N,h,wp,c_l)
    if m > 1:
        low_up = jnp.repeat(low_up, m, axis=-1)                             # (N,h,wp,c_out)
    low_flat = low_up.reshape(N, h_lo, wp * c_out)
    if h_pad > h_lo:
        low_flat = jnp.pad(low_flat, ((0, 0), (0, h_pad - h_lo), (0, 0)))
    low_flat = low_flat.astype(jnp.bfloat16)    # halves HBM DMA + VMEM residency

    # ---- VMEM sizing from the local chip (v5e/v6e 128 MiB, v7x 64 MiB) ----
    vmem_cap = _vmem_capacity_bytes()
    if vmem_budget_bytes is None:
        vmem_budget_bytes = int(vmem_cap * 0.6)
    if vmem_limit_bytes is None:
        vmem_limit_bytes = int(vmem_cap * 0.8)

    out_bytes = jnp.dtype(out_dtype).itemsize
    min_tiles = 1 if N >= 2 else 2              # keep >=2 grid steps at batch=1
    tile_h = _pick_tile_h(H, W, x, c_out, c_h, h_pad, wp, out_bytes,
                          budget_bytes=vmem_budget_bytes,
                          min_tiles=min_tiles, tile_h=tile_h)
    T = H // tile_h

    # Per-tile H-interpolation windows (overlapping halos; conv zero-padding
    # rows are all-zero interpolation rows -> exact zero padding).
    R = _interp_matrix(H, h_lo)
    Rp = np.zeros((H + 2 * x, h_pad), np.float32)
    Rp[x:x + H, :h_lo] = R
    r_win = jnp.asarray(
        np.stack([Rp[t * tile_h: t * tile_h + tile_h + 2 * x] for t in range(T)]),
        dtype=jnp.bfloat16)

    # Depthwise tap weights / bias tiled across W so the kernel applies them to
    # the flat (column, channel) lane layout with plain broadcasts.
    wdw_tiled = jnp.tile(w_dw.reshape(9, c_out), (1, W)).astype(jnp.float32)  # (9, W*c_out)
    bdw_tiled = jnp.tile(b_dw.reshape(1, c_out), (1, W)).astype(jnp.float32)  # (1, W*c_out)

    w_l_bf = w_l.astype(jnp.bfloat16)
    w_h_bf = w_h.astype(jnp.bfloat16)
    b_l2 = b_l.reshape(1, c_out).astype(jnp.float32)
    b_h2 = b_h.reshape(1, c_out).astype(jnp.float32)

    kernel = functools.partial(_ffm_kernel, x=x, tile_h=tile_h, w_out=W, c_out=c_out)

    # Advisory cost model: mem-bound custom call.
    flops = int(2 * N * T * (tile_h + 2 * x) * h_pad * wp * c_out   # H-upsample
                + 18 * N * H * W * c_out                            # depthwise taps
                + 2 * N * H * W * c_out * (c_out + c_h))            # 1x1 convs
    bytes_accessed = int(higher.size * 2 + low_flat.size * 2
                         + N * r_win.size * 2
                         + wdw_tiled.size * 4 + bdw_tiled.size * 4
                         + (w_l_bf.size + w_h_bf.size) * 2
                         + (b_l2.size + b_h2.size) * 4
                         + N * H * W * c_out * out_bytes)
    cost = pl.CostEstimate(flops=flops, transcendentals=0,
                           bytes_accessed=bytes_accessed)

    out_nhwc = pl.pallas_call(
        kernel,
        out_shape=jax.ShapeDtypeStruct((N, H, W, c_out), out_dtype),
        grid_spec=pltpu.PrefetchScalarGridSpec(
            num_scalar_prefetch=0,
            grid=(N, T),
            in_specs=[
                pl.BlockSpec((1, tile_h + 2 * x, h_pad), lambda n, t: (t, 0, 0)),
                pl.BlockSpec((1, h_pad, wp * c_out), lambda n, t: (n, 0, 0)),
                pl.BlockSpec((1, tile_h, W, c_h), lambda n, t: (n, t, 0, 0)),
                pl.BlockSpec((9, W * c_out), lambda n, t: (0, 0)),
                pl.BlockSpec((1, W * c_out), lambda n, t: (0, 0)),
                pl.BlockSpec((c_out, c_out), lambda n, t: (0, 0)),
                pl.BlockSpec((1, c_out), lambda n, t: (0, 0)),
                pl.BlockSpec((c_h, c_out), lambda n, t: (0, 0)),
                pl.BlockSpec((1, c_out), lambda n, t: (0, 0)),
            ],
            out_specs=pl.BlockSpec((1, tile_h, W, c_out), lambda n, t: (n, t, 0, 0)),
        ),
        compiler_params=pltpu.CompilerParams(
            dimension_semantics=("parallel", "parallel"),
            vmem_limit_bytes=vmem_limit_bytes),
        cost_estimate=cost,
    )(r_win, low_flat, higher, wdw_tiled, bdw_tiled, w_l_bf, b_l2, w_h_bf, b_h2)

    return out_nhwc


# ----------------------------------------------------------------------------
# NCHW drop-in wrapper (PyTorch contract parity only; prefer the NHWC API)
# ----------------------------------------------------------------------------
def feature_fusion_forward(higher_nchw, lower_nchw, params, *, x=4, eps=1e-5,
                           tile_h=None, out_dtype=jnp.float32, **kwargs):
    higher = jnp.transpose(higher_nchw, (0, 2, 3, 1))
    lower = jnp.transpose(lower_nchw, (0, 2, 3, 1))
    out = feature_fusion_forward_nhwc(higher, lower, params, x=x, eps=eps,
                                      tile_h=tile_h, out_dtype=out_dtype,
                                      **kwargs)
    return jnp.transpose(out, (0, 3, 1, 2))


# ----------------------------------------------------------------------------
# Plain-JAX reference (mirrors the PyTorch module, f32, NCHW)
# ----------------------------------------------------------------------------
def _bn_nchw(y, gamma, beta, mean, var, eps):
    return ((y - mean.reshape(1, -1, 1, 1))
            / jnp.sqrt(var.reshape(1, -1, 1, 1) + eps)
            * gamma.reshape(1, -1, 1, 1) + beta.reshape(1, -1, 1, 1))


def _reference(higher, lower, p, *, x=4, eps=1e-5):
    N, c_l, h, w = lower.shape
    H, W = h * x, w * x
    R = jnp.asarray(_interp_matrix(H, h))
    C = jnp.asarray(_interp_matrix(W, w))
    up = jnp.einsum('Hh,nchw->ncHw', R, lower)
    up = jnp.einsum('Ww,ncHw->ncHW', C, up)
    y = jax.lax.conv_general_dilated(
        up, p['dw_weight'], window_strides=(1, 1),
        padding=[(x, x), (x, x)], rhs_dilation=(x, x),
        dimension_numbers=('NCHW', 'OIHW', 'NCHW'),
        feature_group_count=c_l)
    y = y + p['dw_bias'].reshape(1, -1, 1, 1)
    y = _bn_nchw(y, p['dw_gamma'], p['dw_beta'], p['dw_mean'], p['dw_var'], eps)
    y = jnp.maximum(y, 0.0)
    y = jax.lax.conv_general_dilated(
        y, p['cl_weight'], (1, 1), 'VALID',
        dimension_numbers=('NCHW', 'OIHW', 'NCHW'))
    y = y + p['cl_bias'].reshape(1, -1, 1, 1)
    y = _bn_nchw(y, p['cl_gamma'], p['cl_beta'], p['cl_mean'], p['cl_var'], eps)
    z = jax.lax.conv_general_dilated(
        higher, p['ch_weight'], (1, 1), 'VALID',
        dimension_numbers=('NCHW', 'OIHW', 'NCHW'))
    z = z + p['ch_bias'].reshape(1, -1, 1, 1)
    z = _bn_nchw(z, p['ch_gamma'], p['ch_beta'], p['ch_mean'], p['ch_var'], eps)
    return jnp.maximum(y + z, 0.0)


# ----------------------------------------------------------------------------
# Demo / self-test
# ----------------------------------------------------------------------------
if __name__ == "__main__":
    key = jax.random.PRNGKey(0)
    keys = jax.random.split(key, 20)

    # Fast-SCNN FFM config (higher_in=64, lower_in=128, out=128, x=4) at small
    # spatial size: higher 16x16, lower 4x4, batch 2.  Channels are lane-dense.
    N = 2
    higher_in, lower_in, out_ch, x = 64, 128, 128, 4
    h_lo, w_lo = 4, 4
    H, W = h_lo * x, w_lo * x

    higher = jax.random.normal(keys[0], (N, higher_in, H, W), jnp.float32)
    lower = jax.random.normal(keys[1], (N, lower_in, h_lo, w_lo), jnp.float32)

    def nrm(k, shape, s=0.1):
        return s * jax.random.normal(k, shape, jnp.float32)

    params = dict(
        dw_weight=nrm(keys[2], (out_ch, 1, 3, 3)),
        dw_bias=nrm(keys[3], (out_ch,)),
        dw_gamma=1.0 + nrm(keys[4], (out_ch,)),
        dw_beta=nrm(keys[5], (out_ch,)),
        dw_mean=nrm(keys[6], (out_ch,)),
        dw_var=1.0 + 0.1 * jnp.abs(jax.random.normal(keys[7], (out_ch,))),
        cl_weight=nrm(keys[8], (out_ch, out_ch, 1, 1)),
        cl_bias=nrm(keys[9], (out_ch,)),
        cl_gamma=1.0 + nrm(keys[10], (out_ch,)),
        cl_beta=nrm(keys[11], (out_ch,)),
        cl_mean=nrm(keys[12], (out_ch,)),
        cl_var=1.0 + 0.1 * jnp.abs(jax.random.normal(keys[13], (out_ch,))),
        ch_weight=nrm(keys[14], (out_ch, higher_in, 1, 1)),
        ch_bias=nrm(keys[15], (out_ch,)),
        ch_gamma=1.0 + nrm(keys[16], (out_ch,)),
        ch_beta=nrm(keys[17], (out_ch,)),
        ch_mean=nrm(keys[18], (out_ch,)),
        ch_var=1.0 + 0.1 * jnp.abs(jax.random.normal(keys[19], (out_ch,))),
    )

    ref = _reference(higher, lower, params, x=x)
    ref_nhwc = jnp.transpose(ref, (0, 2, 3, 1))

    # 1) Primary NHWC path (bf16 output, tile_h=8 -> 2 halo-tiled row tiles).
    higher_nhwc = jnp.transpose(higher, (0, 2, 3, 1))
    lower_nhwc = jnp.transpose(lower, (0, 2, 3, 1))
    out_nhwc = feature_fusion_forward_nhwc(higher_nhwc, lower_nhwc, params,
                                           x=x, tile_h=8)
    out_nhwc = jax.block_until_ready(out_nhwc)
    assert out_nhwc.shape == (N, H, W, out_ch), out_nhwc.shape
    assert out_nhwc.dtype == jnp.bfloat16, out_nhwc.dtype
    err1 = float(jnp.max(jnp.abs(out_nhwc.astype(jnp.float32) - ref_nhwc)))
    assert jnp.allclose(out_nhwc.astype(jnp.float32), ref_nhwc,
                        atol=5e-2, rtol=5e-2), \
        f"NHWC path mismatch vs reference, max abs err {err1}"

    # 2) NCHW drop-in wrapper (f32 output, auto tile_h from the VMEM budget).
    out_nchw = feature_fusion_forward(higher, lower, params, x=x,
                                      out_dtype=jnp.float32)
    out_nchw = jax.block_until_ready(out_nchw)
    assert out_nchw.shape == (N, out_ch, H, W), out_nchw.shape
    err2 = float(jnp.max(jnp.abs(out_nchw - ref)))
    assert jnp.allclose(out_nchw, ref, atol=5e-2, rtol=5e-2), \
        f"NCHW wrapper mismatch vs reference, max abs err {err2}"

    print("KERNEL_OK")
</pallas_src>

<mosaic_0001>
module attributes {stable_mosaic.version = 11 : i64} {
  func.func @_ffm_kernel(%arg0: i32, %arg1: i32, %arg2: memref<1x16x16xbf16, #tpu.memory_space<vmem>>, %arg3: memref<1x16x3072xbf16, #tpu.memory_space<vmem>>, %arg4: memref<1x8x16x64xbf16, #tpu.memory_space<vmem>>, %arg5: memref<9x2048xf32, #tpu.memory_space<vmem>>, %arg6: memref<1x2048xf32, #tpu.memory_space<vmem>>, %arg7: memref<128x128xbf16, #tpu.memory_space<vmem>>, %arg8: memref<1x128xf32, #tpu.memory_space<vmem>>, %arg9: memref<64x128xbf16, #tpu.memory_space<vmem>>, %arg10: memref<1x128xf32, #tpu.memory_space<vmem>>, %arg11: memref<1x8x16x128xbf16, #tpu.memory_space<vmem>>) attributes {dimension_semantics = [#tpu.dimension_semantics<parallel>, #tpu.dimension_semantics<parallel>], iteration_bounds = array<i64: 2, 2>, scalar_prefetch = 0 : i64, scratch_operands = 0 : i64, tpu.core_type = #tpu.core_type<tc>, window_params = [{transform_indices = @transform_0, window_bounds = array<i64: 1, 16, 16>}, {transform_indices = @transform_1, window_bounds = array<i64: 1, 16, 3072>}, {transform_indices = @transform_2, window_bounds = array<i64: 1, 8, 16, 64>}, {pipeline_mode = #tpu.pipeline_mode<synchronous>, transform_indices = @transform_3, window_bounds = array<i64: 9, 2048>}, {pipeline_mode = #tpu.pipeline_mode<synchronous>, transform_indices = @transform_4, window_bounds = array<i64: 1, 2048>}, {pipeline_mode = #tpu.pipeline_mode<synchronous>, transform_indices = @transform_5, window_bounds = array<i64: 128, 128>}, {pipeline_mode = #tpu.pipeline_mode<synchronous>, transform_indices = @transform_6, window_bounds = array<i64: 1, 128>}, {pipeline_mode = #tpu.pipeline_mode<synchronous>, transform_indices = @transform_7, window_bounds = array<i64: 64, 128>}, {pipeline_mode = #tpu.pipeline_mode<synchronous>, transform_indices = @transform_8, window_bounds = array<i64: 1, 128>}, {transform_indices = @transform_9, window_bounds = array<i64: 1, 8, 16, 128>}]} {
    %c0 = arith.constant 0 : index
    %c0_0 = arith.constant 0 : index
    %c0_1 = arith.constant 0 : index
    %0 = vector.load %arg2[%c0, %c0_0, %c0_1] : memref<1x16x16xbf16, #tpu.memory_space<vmem>>, vector<1x16x16xbf16>
    %1 = vector.shape_cast %0 : vector<1x16x16xbf16> to vector<16x16xbf16>
    %c0_2 = arith.constant 0 : index
    %c0_3 = arith.constant 0 : index
    %c0_4 = arith.constant 0 : index
    %2 = vector.load %arg3[%c0_2, %c0_3, %c0_4] : memref<1x16x3072xbf16, #tpu.memory_space<vmem>>, vector<1x16x3072xbf16>
    %3 = vector.shape_cast %2 : vector<1x16x3072xbf16> to vector<16x3072xbf16>
    %cst = arith.constant dense<0.000000e+00> : vector<16x3072xf32>
    %4 = tpu.matmul %1, %3, %cst {dimension_numbers = #tpu.dot_dimension_numbers<[1], [0], [0], [1], [0, 0, 1, 1], [], []>} : vector<16x16xbf16>, vector<16x3072xbf16>, vector<16x3072xf32> -> vector<16x3072xf32>
    %c0_5 = arith.constant 0 : index
    %c0_6 = arith.constant 0 : index
    %5 = vector.load %arg5[%c0_5, %c0_6] : memref<9x2048xf32, #tpu.memory_space<vmem>>, vector<9x2048xf32>
    %6 = vector.extract_strided_slice %4 {offsets = [0, 0], sizes = [8, 2048], strides = [1, 1]} : vector<16x3072xf32> to vector<8x2048xf32>
    %7 = vector.extract_strided_slice %5 {offsets = [0, 0], sizes = [1, 2048], strides = [1, 1]} : vector<9x2048xf32> to vector<1x2048xf32>
    %8 = vector.broadcast %7 : vector<1x2048xf32> to vector<8x2048xf32>
    %9 = arith.mulf %6, %8 : vector<8x2048xf32>
    %10 = vector.extract_strided_slice %4 {offsets = [0, 512], sizes = [8, 2048], strides = [1, 1]} : vector<16x3072xf32> to vector<8x2048xf32>
    %11 = vector.extract_strided_slice %5 {offsets = [1, 0], sizes = [1, 2048], strides = [1, 1]} : vector<9x2048xf32> to vector<1x2048xf32>
    %12 = vector.broadcast %11 : vector<1x2048xf32> to vector<8x2048xf32>
    %13 = arith.mulf %10, %12 : vector<8x2048xf32>
    %14 = arith.addf %9, %13 : vector<8x2048xf32>
    %15 = vector.extract_strided_slice %4 {offsets = [0, 1024], sizes = [8, 2048], strides = [1, 1]} : vector<16x3072xf32> to vector<8x2048xf32>
    %16 = vector.extract_strided_slice %5 {offsets = [2, 0], sizes = [1, 2048], strides = [1, 1]} : vector<9x2048xf32> to vector<1x2048xf32>
    %17 = vector.broadcast %16 : vector<1x2048xf32> to vector<8x2048xf32>
    %18 = arith.mulf %15, %17 : vector<8x2048xf32>
    %19 = arith.addf %14, %18 : vector<8x2048xf32>
    %20 = vector.extract_strided_slice %4 {offsets = [4, 0], sizes = [8, 2048], strides = [1, 1]} : vector<16x3072xf32> to vector<8x2048xf32>
    %21 = vector.extract_strided_slice %5 {offsets = [3, 0], sizes = [1, 2048], strides = [1, 1]} : vector<9x2048xf32> to vector<1x2048xf32>
    %22 = vector.broadcast %21 : vector<1x2048xf32> to vector<8x2048xf32>
    %23 = arith.mulf %20, %22 : vector<8x2048xf32>
    %24 = arith.addf %19, %23 : vector<8x2048xf32>
    %25 = vector.extract_strided_slice %4 {offsets = [4, 512], sizes = [8, 2048], strides = [1, 1]} : vector<16x3072xf32> to vector<8x2048xf32>
    %26 = vector.extract_strided_slice %5 {offsets = [4, 0], sizes = [1, 2048], strides = [1, 1]} : vector<9x2048xf32> to vector<1x2048xf32>
    %27 = vector.broadcast %26 : vector<1x2048xf32> to vector<8x2048xf32>
    %28 = arith.mulf %25, %27 : vector<8x2048xf32>
    %29 = arith.addf %24, %28 : vector<8x2048xf32>
    %30 = vector.extract_strided_slice %4 {offsets = [4, 1024], sizes = [8, 2048], strides = [1, 1]} : vector<16x3072xf32> to vector<8x2048xf32>
    %31 = vector.extract_strided_slice %5 {offsets = [5, 0], sizes = [1, 2048], strides = [1, 1]} : vector<9x2048xf32> to vector<1x2048xf32>
    %32 = vector.broadcast %31 : vector<1x2048xf32> to vector<8x2048xf32>
    %33 = arith.mulf %30, %32 : vector<8x2048xf32>
    %34 = arith.addf %29, %33 : vector<8x2048xf32>
    %35 = vector.extract_strided_slice %4 {offsets = [8, 0], sizes = [8, 2048], strides = [1, 1]} : vector<16x3072xf32> to vector<8x2048xf32>
    %36 = vector.extract_strided_slice %5 {offsets = [6, 0], sizes = [1, 2048], strides = [1, 1]} : vector<9x2048xf32> to vector<1x2048xf32>
    %37 = vector.broadcast %36 : vector<1x2048xf32> to vector<8x2048xf32>
    %38 = arith.mulf %35, %37 : vector<8x2048xf32>
    %39 = arith.addf %34, %38 : vector<8x2048xf32>
    %40 = vector.extract_strided_slice %4 {offsets = [8, 512], sizes = [8, 2048], strides = [1, 1]} : vector<16x3072xf32> to vector<8x2048xf32>
    %41 = vector.extract_strided_slice %5 {offsets = [7, 0], sizes = [1, 2048], strides = [1, 1]} : vector<9x2048xf32> to vector<1x2048xf32>
    %42 = vector.broadcast %41 : vector<1x2048xf32> to vector<8x2048xf32>
    %43 = arith.mulf %40, %42 : vector<8x2048xf32>
    %44 = arith.addf %39, %43 : vector<8x2048xf32>
    %45 = vector.extract_strided_slice %4 {offsets = [8, 1024], sizes = [8, 2048], strides = [1, 1]} : vector<16x3072xf32> to vector<8x2048xf32>
    %46 = vector.extract_strided_slice %5 {offsets = [8, 0], sizes = [1, 2048], strides = [1, 1]} : vector<9x2048xf32> to vector<1x2048xf32>
    %47 = vector.broadcast %46 : vector<1x2048xf32> to vector<8x2048xf32>
    %48 = arith.mulf %45, %47 : vector<8x2048xf32>
    %49 = arith.addf %44, %48 : vector<8x2048xf32>
    %c0_7 = arith.constant 0 : index
    %c0_8 = arith.constant 0 : index
    %50 = vector.load %arg6[%c0_7, %c0_8] : memref<1x2048xf32, #tpu.memory_space<vmem>>, vector<1x2048xf32>
    %51 = vector.broadcast %50 : vector<1x2048xf32> to vector<8x2048xf32>
    %52 = arith.addf %49, %51 : vector<8x2048xf32>
    %cst_9 = arith.constant 0.000000e+00 : f32
    %53 = vector.broadcast %cst_9 : f32 to vector<8x2048xf32>
    %54 = arith.maximumf %52, %53 : vector<8x2048xf32>
    %55 = vector.shape_cast %54 : vector<8x2048xf32> to vector<128x128xf32>
    %56 = arith.truncf %55 : vector<128x128xf32> to vector<128x128xbf16>
    %c0_10 = arith.constant 0 : index
    %c0_11 = arith.constant 0 : index
    %57 = vector.load %arg7[%c0_10, %c0_11] : memref<128x128xbf16, #tpu.memory_space<vmem>>, vector<128x128xbf16>
    %cst_12 = arith.constant dense<0.000000e+00> : vector<128x128xf32>
    %58 = tpu.matmul %56, %57, %cst_12 {dimension_numbers = #tpu.dot_dimension_numbers<[1], [0], [0], [1], [0, 0, 1, 1], [], []>} : vector<128x128xbf16>, vector<128x128xbf16>, vector<128x128xf32> -> vector<128x128xf32>
    %c0_13 = arith.constant 0 : index
    %c0_14 = arith.constant 0 : index
    %59 = vector.load %arg8[%c0_13, %c0_14] : memref<1x128xf32, #tpu.memory_space<vmem>>, vector<1x128xf32>
    %60 = vector.broadcast %59 : vector<1x128xf32> to vector<128x128xf32>
    %61 = arith.addf %58, %60 : vector<128x128xf32>
    %c0_15 = arith.constant 0 : index
    %c0_16 = arith.constant 0 : index
    %c0_17 = arith.constant 0 : index
    %c0_18 = arith.constant 0 : index
    %62 = vector.load %arg4[%c0_15, %c0_16, %c0_17, %c0_18] : memref<1x8x16x64xbf16, #tpu.memory_space<vmem>>, vector<1x8x16x64xbf16>
    %63 = vector.shape_cast %62 : vector<1x8x16x64xbf16> to vector<8x16x64xbf16>
    %64 = vector.shape_cast %63 : vector<8x16x64xbf16> to vector<128x64xbf16>
    %c0_19 = arith.constant 0 : index
    %c0_20 = arith.constant 0 : index
    %65 = vector.load %arg9[%c0_19, %c0_20] : memref<64x128xbf16, #tpu.memory_space<vmem>>, vector<64x128xbf16>
    %cst_21 = arith.constant dense<0.000000e+00> : vector<128x128xf32>
    %66 = tpu.matmul %64, %65, %cst_21 {dimension_numbers = #tpu.dot_dimension_numbers<[1], [0], [0], [1], [0, 0, 1, 1], [], []>} : vector<128x64xbf16>, vector<64x128xbf16>, vector<128x128xf32> -> vector<128x128xf32>
    %c0_22 = arith.constant 0 : index
    %c0_23 = arith.constant 0 : index
    %67 = vector.load %arg10[%c0_22, %c0_23] : memref<1x128xf32, #tpu.memory_space<vmem>>, vector<1x128xf32>
    %68 = vector.broadcast %67 : vector<1x128xf32> to vector<128x128xf32>
    %69 = arith.addf %66, %68 : vector<128x128xf32>
    %70 = arith.addf %61, %69 : vector<128x128xf32>
    %cst_24 = arith.constant 0.000000e+00 : f32
    %71 = vector.broadcast %cst_24 : f32 to vector<128x128xf32>
    %72 = arith.maximumf %70, %71 : vector<128x128xf32>
    %73 = vector.shape_cast %72 : vector<128x128xf32> to vector<1x8x16x128xf32>
    %74 = arith.truncf %73 : vector<1x8x16x128xf32> to vector<1x8x16x128xbf16>
    %c0_25 = arith.constant 0 : index
    %c0_26 = arith.constant 0 : index
    %c0_27 = arith.constant 0 : index
    %c0_28 = arith.constant 0 : index
    %75 = vector.load %arg11[%c0_25, %c0_26, %c0_27, %c0_28] : memref<1x8x16x128xbf16, #tpu.memory_space<vmem>>, vector<1x8x16x128xbf16>
    tpu.vector_store %arg11[%c0_25, %c0_26, %c0_27, %c0_28], %74 {strides = array<i32>} : memref<1x8x16x128xbf16, #tpu.memory_space<vmem>>, vector<1x8x16x128xbf16>,
    return
  }
  func.func @transform_0(%arg0: i32, %arg1: i32) -> (i32, i32, i32) {
    %c0_i32 = arith.constant 0 : i32
    %c0_i32_0 = arith.constant 0 : i32
    %c0_i32_1 = arith.constant 0 : i32
    return %arg1, %c0_i32, %c0_i32_0 : i32, i32, i32
  }
  func.func @transform_1(%arg0: i32, %arg1: i32) -> (i32, i32, i32) {
    %c0_i32 = arith.constant 0 : i32
    %c0_i32_0 = arith.constant 0 : i32
    %c0_i32_1 = arith.constant 0 : i32
    return %arg0, %c0_i32, %c0_i32_0 : i32, i32, i32
  }
  func.func @transform_2(%arg0: i32, %arg1: i32) -> (i32, i32, i32, i32) {
    %c0_i32 = arith.constant 0 : i32
    %c0_i32_0 = arith.constant 0 : i32
    %c0_i32_1 = arith.constant 0 : i32
    return %arg0, %arg1, %c0_i32, %c0_i32_0 : i32, i32, i32, i32
  }
  func.func @transform_3(%arg0: i32, %arg1: i32) -> (i32, i32) {
    %c0_i32 = arith.constant 0 : i32
    %c0_i32_0 = arith.constant 0 : i32
    %c0_i32_1 = arith.constant 0 : i32
    return %c0_i32, %c0_i32_0 : i32, i32
  }
  func.func @transform_4(%arg0: i32, %arg1: i32) -> (i32, i32) {
    %c0_i32 = arith.constant 0 : i32
    %c0_i32_0 = arith.constant 0 : i32
    %c0_i32_1 = arith.constant 0 : i32
    return %c0_i32, %c0_i32_0 : i32, i32
  }
  func.func @transform_5(%arg0: i32, %arg1: i32) -> (i32, i32) {
    %c0_i32 = arith.constant 0 : i32
    %c0_i32_0 = arith.constant 0 : i32
    %c0_i32_1 = arith.constant 0 : i32
    return %c0_i32, %c0_i32_0 : i32, i32
  }
  func.func @transform_6(%arg0: i32, %arg1: i32) -> (i32, i32) {
    %c0_i32 = arith.constant 0 : i32
    %c0_i32_0 = arith.constant 0 : i32
    %c0_i32_1 = arith.constant 0 : i32
    return %c0_i32, %c0_i32_0 : i32, i32
  }
  func.func @transform_7(%arg0: i32, %arg1: i32) -> (i32, i32) {
    %c0_i32 = arith.constant 0 : i32
    %c0_i32_0 = arith.constant 0 : i32
    %c0_i32_1 = arith.constant 0 : i32
    return %c0_i32, %c0_i32_0 : i32, i32
  }
  func.func @transform_8(%arg0: i32, %arg1: i32) -> (i32, i32) {
    %c0_i32 = arith.constant 0 : i32
    %c0_i32_0 = arith.constant 0 : i32
    %c0_i32_1 = arith.constant 0 : i32
    return %c0_i32, %c0_i32_0 : i32, i32
  }
  func.func @transform_9(%arg0: i32, %arg1: i32) -> (i32, i32, i32, i32) {
    %c0_i32 = arith.constant 0 : i32
    %c0_i32_0 = arith.constant 0 : i32
    %c0_i32_1 = arith.constant 0 : i32
    return %arg0, %arg1, %c0_i32, %c0_i32_0 : i32, i32, i32, i32
  }
}

</mosaic_0001>

<llo_original>
// kernel: tpu_custom_call.1
$region0: #{tpu_custom_call.1}
  #allocation0 [shape = 'u32[]', space=smem, size = 0x4, offset = 0x4, fixed_abs, tag = 'smem constant byte address 0x4 - core index']
  #allocation1 [shape = 'u32[144,128]{1,0:T(1,128)}', space=vmem, size = 0x12000, scoped, tag = 'internal scratch']
  %s0 = inlined_call_operand.hbm [shape: bf16[2,16,16], index: 0, kind: input, shape index: {}]
  %s1 = inlined_call_operand.hbm [shape: bf16[2,16,3072], index: 1, kind: input, shape index: {}]
  %s2 = inlined_call_operand.hbm [shape: bf16[2,16,16,64], index: 2, kind: input, shape index: {}]
  %s3 = inlined_call_operand.hbm [shape: f32[9,2048], index: 3, kind: input, shape index: {}]
  %s4 = inlined_call_operand.hbm [shape: f32[1,2048], index: 4, kind: input, shape index: {}]
  %s5 = inlined_call_operand.hbm [shape: bf16[128,128], index: 5, kind: input, shape index: {}]
  %s6 = inlined_call_operand.vmem [shape: f32[1,128], index: 6, kind: input, shape index: {}]
  %s7 = inlined_call_operand.hbm [shape: bf16[64,128], index: 7, kind: input, shape index: {}]
  %s8 = inlined_call_operand.vmem [shape: f32[1,128], index: 8, kind: input, shape index: {}]
  %s9 = inlined_call_operand.hbm [shape: bf16[2,16,16,128], index: 9, kind: output, shape index: {}]
  %s10 = sld [smem:[#allocation0]]
  $region97: #{tpu_custom_call.1} parent=0
    _
  %s12 = ssub.s32 1, %s10
  %s13 = scalar_select 0, %s12, %s10
  $region1: #{tpu_custom_call.1} parent=0
    #allocation2 [shape = 'u8[8192]{0}', space=vmem, size = 0x2000, scoped, tag = 'input window, operand 0']
    #allocation3 [shape = 's32[2]{0}', space=sflag, size = 0x8, scoped, tag = 'scoped memory for tpu_custom_call.1']
    #allocation4 [shape = 's32[2]{0}', space=sflag, size = 0x8, scoped, tag = 'scoped memory for tpu_custom_call.1']
    #allocation5 [shape = 'u8[196608]{0}', space=vmem, size = 0x30000, scoped, tag = 'input window, operand 1']
    #allocation6 [shape = 's32[2]{0}', space=sflag, size = 0x8, scoped, tag = 'scoped memory for tpu_custom_call.1']
    #allocation7 [shape = 'u8[65536]{0}', space=vmem, size = 0x10000, scoped, tag = 'input window, operand 2']
    #allocation8 [shape = 'u8[131072]{0}', space=vmem, size = 0x20000, scoped, tag = 'input window, operand 3, single buffered']
    #allocation9 [shape = 's32[1]{0}', space=sflag, size = 0x4, scoped, tag = 'scoped memory for tpu_custom_call.1']
    #allocation10 [shape = 'u8[8192]{0}', space=vmem, size = 0x2000, scoped, tag = 'input window, operand 4, single buffered']
    #allocation11 [shape = 'u8[32768]{0}', space=vmem, size = 0x8000, scoped, tag = 'input window, operand 5, single buffered']
    #allocation12 [shape = 's32[1]{0}', space=sflag, size = 0x4, scoped, tag = 'scoped memory for tpu_custom_call.1']
    #allocation13 [shape = 'u8[16384]{0}', space=vmem, size = 0x4000, scoped, tag = 'input window, operand 7, single buffered']
    #allocation14 [shape = 'u8[65536]{0}', space=vmem, size = 0x10000, scoped, tag = 'output window, operand 0']
    %14 = vsyncpa [#allocation3], 0
    %s15 = scalar_lea.sflag [#allocation3], 1
    %16 = vsyncpa %s15, 0
    %17 = vsyncpa [#allocation6], 0
    %s18 = scalar_lea.sflag [#allocation6], 1
    %19 = vsyncpa %s18, 0
    %20 = vsyncpa [#allocation9], 0
    %21 = vsyncpa [#allocation12], 0
    %22 = vsyncpa [#allocation4], 0
    %s23 = scalar_lea.sflag [#allocation4], 1
    %24 = vsyncpa %s23, 0
    loop: start=0, step=1, limit=6
    $region2: #{tpu_custom_call.1} parent=1 // loop_pre_header
      _
    $region3: #{tpu_custom_call.1} parent=1 // loop_header
      %s26 = sphi 0, %s30
      %p27 = scmp.ge.s32.totalorder %s26, 6
      %s33 = sphi 0, %s45
      %s34 = sphi 0, %s41
      %s35 = sphi 0, %s33
      %s36 = sphi 0, %s34
      %s37 = sphi 0, %s35
      %s38 = sphi 0, %s36
      %s48 = sphi 0, %s50
      %s51 = sphi 0, %s48
      %s52 = sphi 0, %s51
      %s68 = sphi 0, %s52
      %s74 = sphi 0, %s76
      %s77 = sphi 0, %s74
      %s78 = sphi 0, %s77
      %s94 = sphi 0, %s78
      %s102 = sphi 0, %s104
      %s105 = sphi 0, %s102
      %s106 = sphi 0, %s105
      %s122 = sphi 0, %s106
      %s126 = sphi 0, %s126
      %s128 = sphi 0, %s126
      %s129 = sphi 0, %s128
      %s143 = sphi 0, %s129
      %s147 = sphi 0, %s147
      %s149 = sphi 0, %s147
      %s150 = sphi 0, %s149
      %s164 = sphi 0, %s150
      %s168 = sphi 0, %s168
      %s170 = sphi 0, %s168
      %s171 = sphi 0, %s170
      %s185 = sphi 0, %s171
      %s189 = sphi 0, %s189
      %s191 = sphi 0, %s189
      %s192 = sphi 0, %s191
      %s206 = sphi 0, %s192
      %s210 = sphi 0, %s210
      %s212 = sphi 0, %s210
      %s213 = sphi 0, %s212
      %s227 = sphi 0, %s213
      %s231 = sphi 0, %s231
      %s233 = sphi 0, %s231
      %s234 = sphi 0, %s233
      %s248 = sphi 0, %s234
      %s256 = sphi 0, %s258
      %s259 = sphi 0, %s256
      %s260 = sphi 0, %s259
      %s276 = sphi 0, %s260
    $region4: #{tpu_custom_call.1} parent=1 // loop_header_branch
      %29 = sbr.rel (%p27) target = $region8
    $region5: #{tpu_custom_call.1} parent=1 // loop_body
      %s31 = ssub.s32 %s26, 1
      %s32 = ssub.s32 %s26, 2
      %s39 = sadd.s32 1, %s34
      %p40 = scmp.ge.s32.totalorder %s39, 2
      %s41 = scalar_select %p40, 0, %s39
      %s42 = sadd.s32 1, %s33
      %s43 = scalar_select %p40, %s42, %s33
      %p44 = scmp.ge.s32.totalorder %s43, 2
      %s45 = scalar_select %p44, 0, %s43
      %s46 = ssub.s32 %s34, %s41
      %p47 = scmp.eq.s32.totalorder %s46, 0
      %s49 = sadd.s32 %s48, 1
      %s50 = scalar_select %p47, %s48, %s49
      %p53 = pneg %p47
      %p54 = scmp.eq.s32.totalorder %s26, 3
      %p55 = por %p53, %p54
      %p56 = scmp.ne.s32.totalorder %s48, %s51
      %p57 = scmp.eq.s32.totalorder %s26, 0
      %p58 = por %p56, %p57
      %p59 = scmp.ne.s32.totalorder %s48, %s51
      %p60 = scmp.eq.s32.totalorder %s31, 3
      %p61 = por %p59, %p60
      %p62 = scmp.ne.s32.totalorder %s51, %s52
      %p63 = scmp.eq.s32.totalorder %s31, 0
      %p64 = por %p62, %p63
      %p65 = scmp.ne.s32.totalorder %s51, %s52
      %p66 = scmp.eq.s32.totalorder %s32, 3
      %p67 = por %p65, %p66
      %p69 = scmp.ne.s32.totalorder %s52, %s68
      %p70 = scmp.eq.s32.totalorder %s32, 0
      %p71 = por %p69, %p70
      %s72 = ssub.s32 %s33, %s45
      %p73 = scmp.eq.s32.totalorder %s72, 0
      %s75 = sadd.s32 %s74, 1
      %s76 = scalar_select %p73, %s74, %s75
      %p79 = pneg %p73
      %p80 = scmp.eq.s32.totalorder %s26, 3
      %p81 = por %p79, %p80
      %p82 = scmp.ne.s32.totalorder %s74, %s77
      %p83 = scmp.eq.s32.totalorder %s26, 0
      %p84 = por %p82, %p83
      %p85 = scmp.ne.s32.totalorder %s74, %s77
      %p86 = scmp.eq.s32.totalorder %s31, 3
      %p87 = por %p85, %p86
      %p88 = scmp.ne.s32.totalorder %s77, %s78
      %p89 = scmp.eq.s32.totalorder %s31, 0
      %p90 = por %p88, %p89
      %p91 = scmp.ne.s32.totalorder %s77, %s78
      %p92 = scmp.eq.s32.totalorder %s32, 3
      %p93 = por %p91, %p92
      %p95 = scmp.ne.s32.totalorder %s78, %s94
      %p96 = scmp.eq.s32.totalorder %s32, 0
      %p97 = por %p95, %p96
      %s98 = ssub.s32 %s33, %s45
      %s99 = ssub.s32 %s34, %s41
      %s100 = sor.u32 %s98, %s99
      %p101 = scmp.eq.s32.totalorder %s100, 0
      %s103 = sadd.s32 %s102, 1
      %s104 = scalar_select %p101, %s102, %s103
      %p107 = pneg %p101
      %p108 = scmp.eq.s32.totalorder %s26, 3
      %p109 = por %p107, %p108
      %p110 = scmp.ne.s32.totalorder %s102, %s105
      %p111 = scmp.eq.s32.totalorder %s26, 0
      %p112 = por %p110, %p111
      %p113 = scmp.ne.s32.totalorder %s102, %s105
      %p114 = scmp.eq.s32.totalorder %s31, 3
      %p115 = por %p113, %p114
      %p116 = scmp.ne.s32.totalorder %s105, %s106
      %p117 = scmp.eq.s32.totalorder %s31, 0
      %p118 = por %p116, %p117
      %p119 = scmp.ne.s32.totalorder %s105, %s106
      %p120 = scmp.eq.s32.totalorder %s32, 3
      %p121 = por %p119, %p120
      %p123 = scmp.ne.s32.totalorder %s106, %s122
      %p124 = scmp.eq.s32.totalorder %s32, 0
      %p125 = por %p123, %p124
      %s127 = sadd.s32 %s126, 1
      %p130 = scmp.eq.s32.totalorder %s26, 3
      %p131 = scmp.ne.s32.totalorder %s126, %s128
      %p132 = scmp.eq.s32.totalorder %s26, 0
      %p133 = por %p131, %p132
      %p134 = scmp.ne.s32.totalorder %s126, %s128
      %p135 = scmp.eq.s32.totalorder %s31, 3
      %p136 = por %p134, %p135
      %p137 = scmp.ne.s32.totalorder %s128, %s129
      %p138 = scmp.eq.s32.totalorder %s31, 0
      %p139 = por %p137, %p138
      %p140 = scmp.ne.s32.totalorder %s128, %s129
      %p141 = scmp.eq.s32.totalorder %s32, 3
      %p142 = por %p140, %p141
      %p144 = scmp.ne.s32.totalorder %s129, %s143
      %p145 = scmp.eq.s32.totalorder %s32, 0
      %p146 = por %p144, %p145
      %s148 = sadd.s32 %s147, 1
      %p151 = scmp.eq.s32.totalorder %s26, 3
      %p152 = scmp.ne.s32.totalorder %s147, %s149
      %p153 = scmp.eq.s32.totalorder %s26, 0
      %p154 = por %p152, %p153
      %p155 = scmp.ne.s32.totalorder %s147, %s149
      %p156 = scmp.eq.s32.totalorder %s31, 3
      %p157 = por %p155, %p156
      %p158 = scmp.ne.s32.totalorder %s149, %s150
      %p159 = scmp.eq.s32.totalorder %s31, 0
      %p160 = por %p158, %p159
      %p161 = scmp.ne.s32.totalorder %s149, %s150
      %p162 = scmp.eq.s32.totalorder %s32, 3
      %p163 = por %p161, %p162
      %p165 = scmp.ne.s32.totalorder %s150, %s164
      %p166 = scmp.eq.s32.totalorder %s32, 0
      %p167 = por %p165, %p166
      %s169 = sadd.s32 %s168, 1
      %p172 = scmp.eq.s32.totalorder %s26, 3
      %p173 = scmp.ne.s32.totalorder %s168, %s170
      %p174 = scmp.eq.s32.totalorder %s26, 0
      %p175 = por %p173, %p174
      %p176 = scmp.ne.s32.totalorder %s168, %s170
      %p177 = scmp.eq.s32.totalorder %s31, 3
      %p178 = por %p176, %p177
      %p179 = scmp.ne.s32.totalorder %s170, %s171
      %p180 = scmp.eq.s32.totalorder %s31, 0
      %p181 = por %p179, %p180
      %p182 = scmp.ne.s32.totalorder %s170, %s171
      %p183 = scmp.eq.s32.totalorder %s32, 3
      %p184 = por %p182, %p183
      %p186 = scmp.ne.s32.totalorder %s171, %s185
      %p187 = scmp.eq.s32.totalorder %s32, 0
      %p188 = por %p186, %p187
      %s190 = sadd.s32 %s189, 1
      %p193 = scmp.eq.s32.totalorder %s26, 3
      %p194 = scmp.ne.s32.totalorder %s189, %s191
      %p195 = scmp.eq.s32.totalorder %s26, 0
      %p196 = por %p194, %p195
      %p197 = scmp.ne.s32.totalorder %s189, %s191
      %p198 = scmp.eq.s32.totalorder %s31, 3
      %p199 = por %p197, %p198
      %p200 = scmp.ne.s32.totalorder %s191, %s192
      %p201 = scmp.eq.s32.totalorder %s31, 0
      %p202 = por %p200, %p201
      %p203 = scmp.ne.s32.totalorder %s191, %s192
      %p204 = scmp.eq.s32.totalorder %s32, 3
      %p205 = por %p203, %p204
      %p207 = scmp.ne.s32.totalorder %s192, %s206
      %p208 = scmp.eq.s32.totalorder %s32, 0
      %p209 = por %p207, %p208
      %s211 = sadd.s32 %s210, 1
      %p214 = scmp.eq.s32.totalorder %s26, 3
      %p215 = scmp.ne.s32.totalorder %s210, %s212
      %p216 = scmp.eq.s32.totalorder %s26, 0
      %p217 = por %p215, %p216
      %p218 = scmp.ne.s32.totalorder %s210, %s212
      %p219 = scmp.eq.s32.totalorder %s31, 3
      %p220 = por %p218, %p219
      %p221 = scmp.ne.s32.totalorder %s212, %s213
      %p222 = scmp.eq.s32.totalorder %s31, 0
      %p223 = por %p221, %p222
      %p224 = scmp.ne.s32.totalorder %s212, %s213
      %p225 = scmp.eq.s32.totalorder %s32, 3
      %p226 = por %p224, %p225
      %p228 = scmp.ne.s32.totalorder %s213, %s227
      %p229 = scmp.eq.s32.totalorder %s32, 0
      %p230 = por %p228, %p229
      %s232 = sadd.s32 %s231, 1
      %p235 = scmp.eq.s32.totalorder %s26, 3
      %p236 = scmp.ne.s32.totalorder %s231, %s233
      %p237 = scmp.eq.s32.totalorder %s26, 0
      %p238 = por %p236, %p237
      %p239 = scmp.ne.s32.totalorder %s231, %s233
      %p240 = scmp.eq.s32.totalorder %s31, 3
      %p241 = por %p239, %p240
      %p242 = scmp.ne.s32.totalorder %s233, %s234
      %p243 = scmp.eq.s32.totalorder %s31, 0
      %p244 = por %p242, %p243
      %p245 = scmp.ne.s32.totalorder %s233, %s234
      %p246 = scmp.eq.s32.totalorder %s32, 3
      %p247 = por %p245, %p246
      %p249 = scmp.ne.s32.totalorder %s234, %s248
      %p250 = scmp.eq.s32.totalorder %s32, 0
      %p251 = por %p249, %p250
      %s252 = ssub.s32 %s33, %s45
      %s253 = ssub.s32 %s34, %s41
      %s254 = sor.u32 %s252, %s253
      %p255 = scmp.eq.s32.totalorder %s254, 0
      %s257 = sadd.s32 %s256, 1
      %s258 = scalar_select %p255, %s256, %s257
      %p261 = pneg %p255
      %p262 = scmp.eq.s32.totalorder %s26, 3
      %p263 = por %p261, %p262
      %p264 = scmp.ne.s32.totalorder %s256, %s259
      %p265 = scmp.eq.s32.totalorder %s26, 0
      %p266 = por %p264, %p265
      %p267 = scmp.ne.s32.totalorder %s256, %s259
      %p268 = scmp.eq.s32.totalorder %s31, 3
      %p269 = por %p267, %p268
      %p270 = scmp.ne.s32.totalorder %s259, %s260
      %p271 = scmp.eq.s32.totalorder %s31, 0
      %p272 = por %p270, %p271
      %p273 = scmp.ne.s32.totalorder %s259, %s260
      %p274 = scmp.eq.s32.totalorder %s32, 3
      %p275 = por %p273, %p274
      %p277 = scmp.ne.s32.totalorder %s260, %s276
      %p278 = scmp.eq.s32.totalorder %s32, 0
      %p279 = por %p277, %p278
      %p280 = scmp.le.s32.totalorder 1, %s26
      %p281 = scmp.lt.s32.totalorder %s26, 5
      %p282 = pnand %p280, %p281
      %p283 = pneg %p282
      // Predicated region
      $region9: #{tpu_custom_call.1} parent=5 // pred_check
        _
      $region10: #{tpu_custom_call.1} parent=5 // pred_check_branch
        %285 = sbr.rel (%p282) target = $region12
      $region11: #{tpu_custom_call.1} parent=5 // pred_region
        %s286 = ssub.s32 %s26, 1
        // Predicated region
        $region13: #{tpu_custom_call.1} parent=11 // pred_check
          %p287 = pneg %p139
        $region14: #{tpu_custom_call.1} parent=11 // pred_check_branch
          %289 = sbr.rel (%p287) target = $region16
        $region15: #{tpu_custom_call.1} parent=11 // pred_region
          %s291 = ssub.s32 4096, 4096
          %292 = vsyncadd [#allocation9], %s291
          %s293 = sshll.u32 [#allocation8], 4
          %s294 = int_to_ptr.vmem [resolvable:$true] %s293
          %299 = dma.hbm_to_vmem [thread:$0]  %s3, 4096, %s294, [#allocation9], 2048, 2048, 128
        $region16: #{tpu_custom_call.1} parent=11 // pred_fallthru
          _
        // Predicated region
        $region17: #{tpu_custom_call.1} parent=11 // pred_check
          %p300 = pneg %p160
        $region18: #{tpu_custom_call.1} parent=11 // pred_check_branch
          %302 = sbr.rel (%p300) target = $region20
        $region19: #{tpu_custom_call.1} parent=11 // pred_region
          %s304 = ssub.s32 256, 256
          %305 = vsyncadd [#allocation9], %s304
          %s307 = sshll.u32 [#allocation10], 4
          %s308 = int_to_ptr.vmem [resolvable:$true] %s307
          %310 = dma.hbm_to_vmem [thread:$0]  %s4, 256, %s308, [#allocation9]
        $region20: #{tpu_custom_call.1} parent=11 // pred_fallthru
          _
        // Predicated region
        $region21: #{tpu_custom_call.1} parent=11 // pred_check
          %p311 = pneg %p181
        $region22: #{tpu_custom_call.1} parent=11 // pred_check_branch
          %313 = sbr.rel (%p311) target = $region24
        $region23: #{tpu_custom_call.1} parent=11 // pred_region
          %s315 = ssub.s32 1024, 1024
          %316 = vsyncadd [#allocation12], %s315
          %s317 = sshll.u32 [#allocation11], 4
          %s318 = int_to_ptr.vmem [resolvable:$true] %s317
          %323 = dma.hbm_to_vmem [thread:$0]  %s5, 1024, %s318, [#allocation12], 64, 64, 4
        $region24: #{tpu_custom_call.1} parent=11 // pred_fallthru
          _
        // Predicated region
        $region25: #{tpu_custom_call.1} parent=11 // pred_check
          %p324 = pneg %p202
        $region26: #{tpu_custom_call.1} parent=11 // pred_check_branch
          %326 = sbr.rel (%p324) target = $region28
        $region27: #{tpu_custom_call.1} parent=11 // pred_region
          _
        $region28: #{tpu_custom_call.1} parent=11 // pred_fallthru
          _
        // Predicated region
        $region29: #{tpu_custom_call.1} parent=11 // pred_check
          %p327 = pneg %p223
        $region30: #{tpu_custom_call.1} parent=11 // pred_check_branch
          %329 = sbr.rel (%p327) target = $region32
        $region31: #{tpu_custom_call.1} parent=11 // pred_region
          %s331 = ssub.s32 512, 512
          %332 = vsyncadd [#allocation12], %s331
          %s333 = sshll.u32 [#allocation13], 4
          %s334 = int_to_ptr.vmem [resolvable:$true] %s333
          %339 = dma.hbm_to_vmem [thread:$0]  %s7, 512, %s334, [#allocation12], 64, 64, 4
        $region32: #{tpu_custom_call.1} parent=11 // pred_fallthru
          _
        // Predicated region
        $region33: #{tpu_custom_call.1} parent=11 // pred_check
          %p340 = pneg %p244
        $region34: #{tpu_custom_call.1} parent=11 // pred_check_branch
          %342 = sbr.rel (%p340) target = $region36
        $region35: #{tpu_custom_call.1} parent=11 // pred_region
          _
        $region36: #{tpu_custom_call.1} parent=11 // pred_fallthru
          _
      $region12: #{tpu_custom_call.1} parent=5 // pred_fallthru
        _
      %p343 = scmp.lt.s32.totalorder %s26, 4
      // Predicated region
      $region37: #{tpu_custom_call.1} parent=5 // pred_check
        %p344 = pneg %p343
      $region38: #{tpu_custom_call.1} parent=5 // pred_check_branch
        %346 = sbr.rel (%p344) target = $region40
      $region39: #{tpu_custom_call.1} parent=5 // pred_region
        // Predicated region
        $region41: #{tpu_custom_call.1} parent=39 // pred_check
          %p347 = pneg %p58
        $region42: #{tpu_custom_call.1} parent=39 // pred_check_branch
          %349 = sbr.rel (%p347) target = $region44
        $region43: #{tpu_custom_call.1} parent=39 // pred_region
          %s350 = sand.u32 %s48, 1
          %s351 = scalar_lea.sflag [#allocation3], %s350
          %s352 = sand.u32 %s48, 1
          %s353 = smul.addr %s352, 8
          %s354 = scalar_lea.vmem [#allocation2], %s353
          %s356 = ssub.s32 128, 128
          %357 = vsyncadd %s351, %s356
          %s358 = smul.addr %s34, 2
          %s359 = smul.addr %s358, 64
          %s360 = scalar_lea.hbm %s0, %s359
          %s361 = sshll.u32 %s354, 4
          %s362 = int_to_ptr.vmem [resolvable:$true] %s361
          %367 = dma.hbm_to_vmem [thread:$0]  %s360, 128, %s362, %s351, 64, 64, 4
        $region44: #{tpu_custom_call.1} parent=39 // pred_fallthru
          _
        // Predicated region
        $region45: #{tpu_custom_call.1} parent=39 // pred_check
          %p368 = pneg %p84
        $region46: #{tpu_custom_call.1} parent=39 // pred_check_branch
          %370 = sbr.rel (%p368) target = $region48
        $region47: #{tpu_custom_call.1} parent=39 // pred_region
          %s371 = sand.u32 %s26, 1
          %s372 = scalar_lea.sflag [#allocation6], %s371
          %s373 = sand.u32 %s74, 1
          %s374 = smul.addr %s373, 192
          %s375 = scalar_lea.vmem [#allocation5], %s374
          %s377 = ssub.s32 3072, 3072
          %378 = vsyncadd %s372, %s377
          %s379 = smul.addr %s33, 48
          %s380 = smul.addr %s379, 64
          %s381 = scalar_lea.hbm %s1, %s380
          %s382 = sshll.u32 %s375, 4
          %s383 = int_to_ptr.vmem [resolvable:$true] %s382
          %388 = dma.hbm_to_vmem [thread:$0]  %s381, 3072, %s383, %s372, 1536, 1536, 96
        $region48: #{tpu_custom_call.1} parent=39 // pred_fallthru
          _
        // Predicated region
        $region49: #{tpu_custom_call.1} parent=39 // pred_check
          %p389 = pneg %p112
        $region50: #{tpu_custom_call.1} parent=39 // pred_check_branch
          %391 = sbr.rel (%p389) target = $region52
        $region51: #{tpu_custom_call.1} parent=39 // pred_region
          %s392 = sand.u32 %s26, 1
          %s393 = scalar_lea.sflag [#allocation6], %s392
          %s394 = sand.u32 %s102, 1
          %s395 = smul.addr %s394, 64
          %s396 = scalar_lea.vmem [#allocation7], %s395
          %s397 = smul.u32 8, %s34
          %s399 = ssub.s32 1024, 1024
          %400 = vsyncadd %s393, %s399
          %s401 = smul.addr %s397, 2
          %s402 = smul.addr %s33, 32
          %s403 = sadd.s32 %s401, %s402
          %s404 = smul.addr %s403, 64
          %s405 = scalar_lea.hbm %s2, %s404
          %s406 = sshll.u32 %s396, 4
          %s407 = int_to_ptr.vmem [resolvable:$true] %s406
          %412 = dma.hbm_to_vmem [thread:$0]  %s405, 1024, %s407, %s393, 64, 64, 4
        $region52: #{tpu_custom_call.1} parent=39 // pred_fallthru
          _
      $region40: #{tpu_custom_call.1} parent=5 // pred_fallthru
        _
      %p413 = scmp.le.s32.totalorder 1, %s26
      %p414 = scmp.lt.s32.totalorder %s26, 5
      %p415 = pnand %p413, %p414
      %p416 = pneg %p415
      // Predicated region
      $region53: #{tpu_custom_call.1} parent=5 // pred_check
        _
      $region54: #{tpu_custom_call.1} parent=5 // pred_check_branch
        %418 = sbr.rel (%p415) target = $region56
      $region55: #{tpu_custom_call.1} parent=5 // pred_region
        %s419 = ssub.s32 %s26, 1
        %s420 = sand.u32 %s51, 1
        %s421 = scalar_lea.sflag [#allocation3], %s420
        %s422 = sand.u32 %s51, 1
        %s423 = smul.addr %s422, 8
        %s424 = scalar_lea.vmem [#allocation2], %s423
        // Predicated region
        $region57: #{tpu_custom_call.1} parent=55 // pred_check
          %p425 = pneg %p64
        $region58: #{tpu_custom_call.1} parent=55 // pred_check_branch
          %427 = sbr.rel (%p425) target = $region60
        $region59: #{tpu_custom_call.1} parent=55 // pred_region
          %428 = dma.done %s421, 128
        $region60: #{tpu_custom_call.1} parent=55 // pred_fallthru
          _
        %s429 = sand.u32 %s31, 1
        %s430 = scalar_lea.sflag [#allocation6], %s429
        %s431 = sand.u32 %s77, 1
        %s432 = smul.addr %s431, 192
        %s433 = scalar_lea.vmem [#allocation5], %s432
        // Predicated region
        $region61: #{tpu_custom_call.1} parent=55 // pred_check
          %p434 = pneg %p90
        $region62: #{tpu_custom_call.1} parent=55 // pred_check_branch
          %436 = sbr.rel (%p434) target = $region64
        $region63: #{tpu_custom_call.1} parent=55 // pred_region
          %437 = dma.done %s430, 3072
        $region64: #{tpu_custom_call.1} parent=55 // pred_fallthru
          _
        %s438 = sand.u32 %s31, 1
        %s439 = scalar_lea.sflag [#allocation6], %s438
        %s440 = sand.u32 %s105, 1
        %s441 = smul.addr %s440, 64
        %s442 = scalar_lea.vmem [#allocation7], %s441
        // Predicated region
        $region65: #{tpu_custom_call.1} parent=55 // pred_check
          %p443 = pneg %p118
        $region66: #{tpu_custom_call.1} parent=55 // pred_check_branch
          %445 = sbr.rel (%p443) target = $region68
        $region67: #{tpu_custom_call.1} parent=55 // pred_region
          %446 = dma.done %s439, 1024
        $region68: #{tpu_custom_call.1} parent=55 // pred_fallthru
          _
        // Predicated region
        $region69: #{tpu_custom_call.1} parent=55 // pred_check
          %p447 = pneg %p139
        $region70: #{tpu_custom_call.1} parent=55 // pred_check_branch
          %449 = sbr.rel (%p447) target = $region72
        $region71: #{tpu_custom_call.1} parent=55 // pred_region
          %450 = dma.done [#allocation9], 4096
        $region72: #{tpu_custom_call.1} parent=55 // pred_fallthru
          _
        // Predicated region
        $region73: #{tpu_custom_call.1} parent=55 // pred_check
          %p451 = pneg %p160
        $region74: #{tpu_custom_call.1} parent=55 // pred_check_branch
          %453 = sbr.rel (%p451) target = $region76
        $region75: #{tpu_custom_call.1} parent=55 // pred_region
          %454 = dma.done [#allocation9], 256
        $region76: #{tpu_custom_call.1} parent=55 // pred_fallthru
          _
        // Predicated region
        $region77: #{tpu_custom_call.1} parent=55 // pred_check
          %p455 = pneg %p181
        $region78: #{tpu_custom_call.1} parent=55 // pred_check_branch
          %457 = sbr.rel (%p455) target = $region80
        $region79: #{tpu_custom_call.1} parent=55 // pred_region
          %458 = dma.done [#allocation12], 1024
        $region80: #{tpu_custom_call.1} parent=55 // pred_fallthru
          _
        // Predicated region
        $region81: #{tpu_custom_call.1} parent=55 // pred_check
          %p459 = pneg %p223
        $region82: #{tpu_custom_call.1} parent=55 // pred_check_branch
          %461 = sbr.rel (%p459) target = $region84
        $region83: #{tpu_custom_call.1} parent=55 // pred_region
          %462 = dma.done [#allocation12], 512
        $region84: #{tpu_custom_call.1} parent=55 // pred_fallthru
          _
        %s463 = sand.u32 %s51, 1
        %s464 = scalar_lea.sflag [#allocation3], %s463
        %s465 = sand.u32 %s51, 1
        %s466 = smul.addr %s465, 8
        %s467 = scalar_lea.vmem [#allocation2], %s466
        %p468 = pneg %p64
        %p469 = pneg %p61
        %s470 = sand.u32 %s31, 1
        %s471 = scalar_lea.sflag [#allocation6], %s470
        %s472 = sand.u32 %s77, 1
        %s473 = smul.addr %s472, 192
        %s474 = scalar_lea.vmem [#allocation5], %s473
        %p475 = pneg %p90
        %p476 = pneg %p87
        %s477 = sand.u32 %s31, 1
        %s478 = scalar_lea.sflag [#allocation6], %s477
        %s479 = sand.u32 %s105, 1
        %s480 = smul.addr %s479, 64
        %s481 = scalar_lea.vmem [#allocation7], %s480
        %p482 = pneg %p118
        %p483 = pneg %p115
        %p484 = pneg %p139
        %p485 = pneg %p136
        %p486 = pneg %p160
        %p487 = pneg %p157
        %p488 = pneg %p181
        %p489 = pneg %p178
        %p490 = pneg %p202
        %p491 = pneg %p199
        %p492 = pneg %p223
        %p493 = pneg %p220
        %p494 = pneg %p244
        %p495 = pneg %p241
        %p496 = pneg %p272
        %p497 = pneg %p269
        %s498 = sand.u32 %s259, 1
        %s499 = scalar_lea.sflag [#allocation4], %s498
        %s500 = sand.u32 %s259, 1
        %s501 = smul.addr %s500, 64
        %s502 = scalar_lea.vmem [#allocation14], %s501
        %s503 = smul.u32 8, %s36
        %s504 = smul.u32 8, %s36
        %v506 = vld [vmem:[%s424] sm:$0xf]
        %v507 = vld [vmem:[%s424 + $0x4] sm:$0xf]
        %v508 = vld [vmem:[%s433] sm:$0xff]
        %v509 = vld [vmem:[%s433 + $0x8] sm:$0xff]
        %v510 = vld [vmem:[%s433 + $0x10] sm:$0xff]
        %v511 = vld [vmem:[%s433 + $0x18] sm:$0xff]
        %v512 = vld [vmem:[%s433 + $0x20] sm:$0xff]
        %v513 = vld [vmem:[%s433 + $0x28] sm:$0xff]
        %v514 = vld [vmem:[%s433 + $0x30] sm:$0xff]
        %v515 = vld [vmem:[%s433 + $0x38] sm:$0xff]
        %v516 = vld [vmem:[%s433 + $0x40] sm:$0xff]
        %v517 = vld [vmem:[%s433 + $0x48] sm:$0xff]
        %v518 = vld [vmem:[%s433 + $0x50] sm:$0xff]
        %v519 = vld [vmem:[%s433 + $0x58] sm:$0xff]
        %v520 = vld [vmem:[%s433 + $0x60] sm:$0xff]
        %v521 = vld [vmem:[%s433 + $0x68] sm:$0xff]
        %v522 = vld [vmem:[%s433 + $0x70] sm:$0xff]
        %v523 = vld [vmem:[%s433 + $0x78] sm:$0xff]
        %v524 = vld [vmem:[%s433 + $0x80] sm:$0xff]
        %v525 = vld [vmem:[%s433 + $0x88] sm:$0xff]
        %v526 = vld [vmem:[%s433 + $0x90] sm:$0xff]
        %v527 = vld [vmem:[%s433 + $0x98] sm:$0xff]
        %v528 = vld [vmem:[%s433 + $0xa0] sm:$0xff]
        %v529 = vld [vmem:[%s433 + $0xa8] sm:$0xff]
        %v530 = vld [vmem:[%s433 + $0xb0] sm:$0xff]
        %v531 = vld [vmem:[%s433 + $0xb8] sm:$0xff]
        %v534 = vunpack.c.l.b16 %v506
        %v535 = vunpack.c.l.b16 %v507
        %v536 = vpack.c.b16 %v535, %v534
        %v561 = vunpack.c.l.b16 %v508
        %v562 = vunpack.c.h.b16 %v508
        %v563 = vunpack.c.l.b16 %v509
        %v564 = vunpack.c.h.b16 %v509
        %v565 = vunpack.c.l.b16 %v510
        %v566 = vunpack.c.h.b16 %v510
        %v567 = vunpack.c.l.b16 %v511
        %v568 = vunpack.c.h.b16 %v511
        %v569 = vunpack.c.l.b16 %v512
        %v570 = vunpack.c.h.b16 %v512
        %v571 = vunpack.c.l.b16 %v513
        %v572 = vunpack.c.h.b16 %v513
        %v573 = vunpack.c.l.b16 %v514
        %v574 = vunpack.c.h.b16 %v514
        %v575 = vunpack.c.l.b16 %v515
        %v576 = vunpack.c.h.b16 %v515
        %v577 = vunpack.c.l.b16 %v516
        %v578 = vunpack.c.h.b16 %v516
        %v579 = vunpack.c.l.b16 %v517
        %v580 = vunpack.c.h.b16 %v517
        %v581 = vunpack.c.l.b16 %v518
        %v582 = vunpack.c.h.b16 %v518
        %v583 = vunpack.c.l.b16 %v519
        %v584 = vunpack.c.h.b16 %v519
        %v585 = vunpack.c.l.b16 %v520
        %v586 = vunpack.c.h.b16 %v520
        %v587 = vunpack.c.l.b16 %v521
        %v588 = vunpack.c.h.b16 %v521
        %v589 = vunpack.c.l.b16 %v522
        %v590 = vunpack.c.h.b16 %v522
        %v591 = vunpack.c.l.b16 %v523
        %v592 = vunpack.c.h.b16 %v523
        %v593 = vunpack.c.l.b16 %v524
        %v594 = vunpack.c.h.b16 %v524
        %v595 = vunpack.c.l.b16 %v525
        %v596 = vunpack.c.h.b16 %v525
        %v597 = vunpack.c.l.b16 %v526
        %v598 = vunpack.c.h.b16 %v526
        %v599 = vunpack.c.l.b16 %v527
        %v600 = vunpack.c.h.b16 %v527
        %v601 = vunpack.c.l.b16 %v528
        %v602 = vunpack.c.h.b16 %v528
        %v603 = vunpack.c.l.b16 %v529
        %v604 = vunpack.c.h.b16 %v529
        %v605 = vunpack.c.l.b16 %v530
        %v606 = vunpack.c.h.b16 %v530
        %v607 = vunpack.c.l.b16 %v531
        %v608 = vunpack.c.h.b16 %v531
        %v609 = vpack.c.b16 %v585, %v561
        %v610 = vpack.c.b16 %v586, %v562
        %v611 = vpack.c.b16 %v587, %v563
        %v612 = vpack.c.b16 %v588, %v564
        %v613 = vpack.c.b16 %v589, %v565
        %v614 = vpack.c.b16 %v590, %v566
        %v615 = vpack.c.b16 %v591, %v567
        %v616 = vpack.c.b16 %v592, %v568
        %v617 = vpack.c.b16 %v593, %v569
        %v618 = vpack.c.b16 %v594, %v570
        %v619 = vpack.c.b16 %v595, %v571
        %v620 = vpack.c.b16 %v596, %v572
        %v621 = vpack.c.b16 %v597, %v573
        %v622 = vpack.c.b16 %v598, %v574
        %v623 = vpack.c.b16 %v599, %v575
        %v624 = vpack.c.b16 %v600, %v576
        %v625 = vpack.c.b16 %v601, %v577
        %v626 = vpack.c.b16 %v602, %v578
        %v627 = vpack.c.b16 %v603, %v579
        %v628 = vpack.c.b16 %v604, %v580
        %v629 = vpack.c.b16 %v605, %v581
        %v630 = vpack.c.b16 %v606, %v582
        %v631 = vpack.c.b16 %v607, %v583
        %v632 = vpack.c.b16 %v608, %v584
        %vm657 = vcmask 130048
        %v659 = vsel %vm657, %v536, 0
        %661 = vmatprep.subr.bf16.mxu0 %v610
        %662 = vmatpush1.bf16.msra.mxu0 %v609
        %663 = vmatprep.subr.bf16.mxu0 0
        %664 = vmatpush1.bf16.msra.mxu0 0
        %665 = vmatprep.subr.bf16.mxu0 0
        %666 = vmatpush1.bf16.msra.mxu0 0
        %667 = vmatprep.subr.bf16.mxu0 0
        %668 = vmatpush1.bf16.msra.mxu0 0
        %669 = vmatprep.subr.bf16.mxu0 0
        %670 = vmatpush1.bf16.msra.mxu0 0
        %671 = vmatprep.subr.bf16.mxu0 0
        %672 = vmatpush1.bf16.msra.mxu0 0
        %673 = vmatprep.subr.bf16.mxu0 0
        %674 = vmatpush1.bf16.msra.mxu0 0
        %675 = vmatprep.subr.bf16.mxu0 0
        %676 = vmatpush1.bf16.msra.mxu0 0
        %677 = vmatprep.subr.bf16.mxu0 0
        %678 = vmatpush1.bf16.msra.mxu0 0
        %679 = vmatprep.subr.bf16.mxu0 0
        %680 = vmatpush1.bf16.msra.mxu0 0
        %681 = vmatprep.subr.bf16.mxu0 0
        %682 = vmatpush1.bf16.msra.mxu0 0
        %683 = vmatprep.subr.bf16.mxu0 0
        %684 = vmatpush1.bf16.msra.mxu0 0
        %685 = vmatprep.subr.bf16.mxu0 0
        %686 = vmatpush1.bf16.msra.mxu0 0
        %687 = vmatprep.subr.bf16.mxu0 0
        %688 = vmatpush1.bf16.msra.mxu0 0
        %689 = vmatprep.subr.bf16.mxu0 0
        %690 = vmatpush1.bf16.msra.mxu0 0
        %691 = vmatprep.subr.bf16.mxu0 0
        %692 = vmatpush1.bf16.msra.mxu0 0
        %693 = vmatprep.mubr.bf16.mxu0 0
        %694 = vmatmul.mubr.bf16.gmra.mrb[0].mxu0 %v659
        %v695 = vpop.f32.mrb[0].mxu0
        %v696 = vadd.f32 0.0, %v695
        %v697 = vpop.f32.mrb[0].mxu0
        %v698 = vadd.f32 0.0, %v697
        %v699 = vpop.f32.mrb[0].mxu0
        %v700 = vadd.f32 0.0, %v699
        %v701 = vpop.f32.mrb[0].mxu0
        %v702 = vadd.f32 0.0, %v701
        %703 = vdwg.mxu0
        %704 = vmatprep.subr.bf16.mxu0 %v612
        %705 = vmatpush1.bf16.msra.mxu0 %v611
        %706 = vmatprep.subr.bf16.mxu0 0
        %707 = vmatpush1.bf16.msra.mxu0 0
        %708 = vmatprep.subr.bf16.mxu0 0
        %709 = vmatpush1.bf16.msra.mxu0 0
        %710 = vmatprep.subr.bf16.mxu0 0
        %711 = vmatpush1.bf16.msra.mxu0 0
        %712 = vmatprep.subr.bf16.mxu0 0
        %713 = vmatpush1.bf16.msra.mxu0 0
        %714 = vmatprep.subr.bf16.mxu0 0
        %715 = vmatpush1.bf16.msra.mxu0 0
        %716 = vmatprep.subr.bf16.mxu0 0
        %717 = vmatpush1.bf16.msra.mxu0 0
        %718 = vmatprep.subr.bf16.mxu0 0
        %719 = vmatpush1.bf16.msra.mxu0 0
        %720 = vmatprep.subr.bf16.mxu0 0
        %721 = vmatpush1.bf16.msra.mxu0 0
        %722 = vmatprep.subr.bf16.mxu0 0
        %723 = vmatpush1.bf16.msra.mxu0 0
        %724 = vmatprep.subr.bf16.mxu0 0
        %725 = vmatpush1.bf16.msra.mxu0 0
        %726 = vmatprep.subr.bf16.mxu0 0
        %727 = vmatpush1.bf16.msra.mxu0 0
        %728 = vmatprep.subr.bf16.mxu0 0
        %729 = vmatpush1.bf16.msra.mxu0 0
        %730 = vmatprep.subr.bf16.mxu0 0
        %731 = vmatpush1.bf16.msra.mxu0 0
        %732 = vmatprep.subr.bf16.mxu0 0
        %733 = vmatpush1.bf16.msra.mxu0 0
        %734 = vmatprep.subr.bf16.mxu0 0
        %735 = vmatpush1.bf16.msra.mxu0 0
        %736 = vmatprep.mubr.bf16.mxu0 0
        %737 = vmatmul.mubr.bf16.gmra.mrb[0].mxu0 %v659
        %v738 = vpop.f32.mrb[0].mxu0
        %v739 = vadd.f32 0.0, %v738
        %v740 = vpop.f32.mrb[0].mxu0
        %v741 = vadd.f32 0.0, %v740
        %v742 = vpop.f32.mrb[0].mxu0
        %v743 = vadd.f32 0.0, %v742
        %v744 = vpop.f32.mrb[0].mxu0
        %v745 = vadd.f32 0.0, %v744
        %746 = vdwg.mxu0
        %747 = vmatprep.subr.bf16.mxu0 %v614
        %748 = vmatpush1.bf16.msra.mxu0 %v613
        %749 = vmatprep.subr.bf16.mxu0 0
        %750 = vmatpush1.bf16.msra.mxu0 0
        %751 = vmatprep.subr.bf16.mxu0 0
        %752 = vmatpush1.bf16.msra.mxu0 0
        %753 = vmatprep.subr.bf16.mxu0 0
        %754 = vmatpush1.bf16.msra.mxu0 0
        %755 = vmatprep.subr.bf16.mxu0 0
        %756 = vmatpush1.bf16.msra.mxu0 0
        %757 = vmatprep.subr.bf16.mxu0 0
        %758 = vmatpush1.bf16.msra.mxu0 0
        %759 = vmatprep.subr.bf16.mxu0 0
        %760 = vmatpush1.bf16.msra.mxu0 0
        %761 = vmatprep.subr.bf16.mxu0 0
        %762 = vmatpush1.bf16.msra.mxu0 0
        %763 = vmatprep.subr.bf16.mxu0 0
        %764 = vmatpush1.bf16.msra.mxu0 0
        %765 = vmatprep.subr.bf16.mxu0 0
        %766 = vmatpush1.bf16.msra.mxu0 0
        %767 = vmatprep.subr.bf16.mxu0 0
        %768 = vmatpush1.bf16.msra.mxu0 0
        %769 = vmatprep.subr.bf16.mxu0 0
        %770 = vmatpush1.bf16.msra.mxu0 0
        %771 = vmatprep.subr.bf16.mxu0 0
        %772 = vmatpush1.bf16.msra.mxu0 0
        %773 = vmatprep.subr.bf16.mxu0 0
        %774 = vmatpush1.bf16.msra.mxu0 0
        %775 = vmatprep.subr.bf16.mxu0 0
        %776 = vmatpush1.bf16.msra.mxu0 0
        %777 = vmatprep.subr.bf16.mxu0 0
        %778 = vmatpush1.bf16.msra.mxu0 0
        %779 = vmatprep.mubr.bf16.mxu0 0
        %780 = vmatmul.mubr.bf16.gmra.mrb[0].mxu0 %v659
        %v781 = vpop.f32.mrb[0].mxu0
        %v782 = vadd.f32 0.0, %v781
        %v783 = vpop.f32.mrb[0].mxu0
        %v784 = vadd.f32 0.0, %v783
        %v785 = vpop.f32.mrb[0].mxu0
        %v786 = vadd.f32 0.0, %v785
        %v787 = vpop.f32.mrb[0].mxu0
        %v788 = vadd.f32 0.0, %v787
        %789 = vdwg.mxu0
        %790 = vmatprep.subr.bf16.mxu0 %v616
        %791 = vmatpush1.bf16.msra.mxu0 %v615
        %792 = vmatprep.subr.bf16.mxu0 0
        %793 = vmatpush1.bf16.msra.mxu0 0
        %794 = vmatprep.subr.bf16.mxu0 0
        %795 = vmatpush1.bf16.msra.mxu0 0
        %796 = vmatprep.subr.bf16.mxu0 0
        %797 = vmatpush1.bf16.msra.mxu0 0
        %798 = vmatprep.subr.bf16.mxu0 0
        %799 = vmatpush1.bf16.msra.mxu0 0
        %800 = vmatprep.subr.bf16.mxu0 0
        %801 = vmatpush1.bf16.msra.mxu0 0
        %802 = vmatprep.subr.bf16.mxu0 0
        %803 = vmatpush1.bf16.msra.mxu0 0
        %804 = vmatprep.subr.bf16.mxu0 0
        %805 = vmatpush1.bf16.msra.mxu0 0
        %806 = vmatprep.subr.bf16.mxu0 0
        %807 = vmatpush1.bf16.msra.mxu0 0
        %808 = vmatprep.subr.bf16.mxu0 0
        %809 = vmatpush1.bf16.msra.mxu0 0
        %810 = vmatprep.subr.bf16.mxu0 0
        %811 = vmatpush1.bf16.msra.mxu0 0
        %812 = vmatprep.subr.bf16.mxu0 0
        %813 = vmatpush1.bf16.msra.mxu0 0
        %814 = vmatprep.subr.bf16.mxu0 0
        %815 = vmatpush1.bf16.msra.mxu0 0
        %816 = vmatprep.subr.bf16.mxu0 0
        %817 = vmatpush1.bf16.msra.mxu0 0
        %818 = vmatprep.subr.bf16.mxu0 0
        %819 = vmatpush1.bf16.msra.mxu0 0
        %820 = vmatprep.subr.bf16.mxu0 0
        %821 = vmatpush1.bf16.msra.mxu0 0
        %822 = vmatprep.mubr.bf16.mxu0 0
        %823 = vmatmul.mubr.bf16.gmra.mrb[0].mxu0 %v659
        %v824 = vpop.f32.mrb[0].mxu0
        %v825 = vadd.f32 0.0, %v824
        %v826 = vpop.f32.mrb[0].mxu0
        %v827 = vadd.f32 0.0, %v826
        %v828 = vpop.f32.mrb[0].mxu0
        %v829 = vadd.f32 0.0, %v828
        %v830 = vpop.f32.mrb[0].mxu0
        %v831 = vadd.f32 0.0, %v830
        %832 = vdwg.mxu0
        %833 = vmatprep.subr.bf16.mxu0 %v618
        %834 = vmatpush1.bf16.msra.mxu0 %v617
        %835 = vmatprep.subr.bf16.mxu0 0
        %836 = vmatpush1.bf16.msra.mxu0 0
        %837 = vmatprep.subr.bf16.mxu0 0
        %838 = vmatpush1.bf16.msra.mxu0 0
        %839 = vmatprep.subr.bf16.mxu0 0
        %840 = vmatpush1.bf16.msra.mxu0 0
        %841 = vmatprep.subr.bf16.mxu0 0
        %842 = vmatpush1.bf16.msra.mxu0 0
        %843 = vmatprep.subr.bf16.mxu0 0
        %844 = vmatpush1.bf16.msra.mxu0 0
        %845 = vmatprep.subr.bf16.mxu0 0
        %846 = vmatpush1.bf16.msra.mxu0 0
        %847 = vmatprep.subr.bf16.mxu0 0
        %848 = vmatpush1.bf16.msra.mxu0 0
        %849 = vmatprep.subr.bf16.mxu0 0
        %850 = vmatpush1.bf16.msra.mxu0 0
        %851 = vmatprep.subr.bf16.mxu0 0
        %852 = vmatpush1.bf16.msra.mxu0 0
        %853 = vmatprep.subr.bf16.mxu0 0
        %854 = vmatpush1.bf16.msra.mxu0 0
        %855 = vmatprep.subr.bf16.mxu0 0
        %856 = vmatpush1.bf16.msra.mxu0 0
        %857 = vmatprep.subr.bf16.mxu0 0
        %858 = vmatpush1.bf16.msra.mxu0 0
        %859 = vmatprep.subr.bf16.mxu0 0
        %860 = vmatpush1.bf16.msra.mxu0 0
        %861 = vmatprep.subr.bf16.mxu0 0
        %862 = vmatpush1.bf16.msra.mxu0 0
        %863 = vmatprep.subr.bf16.mxu0 0
        %864 = vmatpush1.bf16.msra.mxu0 0
        %865 = vmatprep.mubr.bf16.mxu0 0
        %866 = vmatmul.mubr.bf16.gmra.mrb[0].mxu0 %v659
        %v867 = vpop.f32.mrb[0].mxu0
        %v868 = vadd.f32 0.0, %v867
        %v869 = vpop.f32.mrb[0].mxu0
        %v870 = vadd.f32 0.0, %v869
        %v871 = vpop.f32.mrb[0].mxu0
        %v872 = vadd.f32 0.0, %v871
        %v873 = vpop.f32.mrb[0].mxu0
        %v874 = vadd.f32 0.0, %v873
        %875 = vdwg.mxu0
        %876 = vmatprep.subr.bf16.mxu0 %v620
        %877 = vmatpush1.bf16.msra.mxu0 %v619
        %878 = vmatprep.subr.bf16.mxu0 0
        %879 = vmatpush1.bf16.msra.mxu0 0
        %880 = vmatprep.subr.bf16.mxu0 0
        %881 = vmatpush1.bf16.msra.mxu0 0
        %882 = vmatprep.subr.bf16.mxu0 0
        %883 = vmatpush1.bf16.msra.mxu0 0
        %884 = vmatprep.subr.bf16.mxu0 0
        %885 = vmatpush1.bf16.msra.mxu0 0
        %886 = vmatprep.subr.bf16.mxu0 0
        %887 = vmatpush1.bf16.msra.mxu0 0
        %888 = vmatprep.subr.bf16.mxu0 0
        %889 = vmatpush1.bf16.msra.mxu0 0
        %890 = vmatprep.subr.bf16.mxu0 0
        %891 = vmatpush1.bf16.msra.mxu0 0
        %892 = vmatprep.subr.bf16.mxu0 0
        %893 = vmatpush1.bf16.msra.mxu0 0
        %894 = vmatprep.subr.bf16.mxu0 0
        %895 = vmatpush1.bf16.msra.mxu0 0
        %896 = vmatprep.subr.bf16.mxu0 0
        %897 = vmatpush1.bf16.msra.mxu0 0
        %898 = vmatprep.subr.bf16.mxu0 0
        %899 = vmatpush1.bf16.msra.mxu0 0
        %900 = vmatprep.subr.bf16.mxu0 0
        %901 = vmatpush1.bf16.msra.mxu0 0
        %902 = vmatprep.subr.bf16.mxu0 0
        %903 = vmatpush1.bf16.msra.mxu0 0
        %904 = vmatprep.subr.bf16.mxu0 0
        %905 = vmatpush1.bf16.msra.mxu0 0
        %906 = vmatprep.subr.bf16.mxu0 0
        %907 = vmatpush1.bf16.msra.mxu0 0
        %908 = vmatprep.mubr.bf16.mxu0 0
        %909 = vmatmul.mubr.bf16.gmra.mrb[0].mxu0 %v659
        %v910 = vpop.f32.mrb[0].mxu0
        %v911 = vadd.f32 0.0, %v910
        %v912 = vpop.f32.mrb[0].mxu0
        %v913 = vadd.f32 0.0, %v912
        %v914 = vpop.f32.mrb[0].mxu0
        %v915 = vadd.f32 0.0, %v914
        %v916 = vpop.f32.mrb[0].mxu0
        %v917 = vadd.f32 0.0, %v916
        %918 = vdwg.mxu0
        %919 = vmatprep.subr.bf16.mxu0 %v622
        %920 = vmatpush1.bf16.msra.mxu0 %v621
        %921 = vmatprep.subr.bf16.mxu0 0
        %922 = vmatpush1.bf16.msra.mxu0 0
        %923 = vmatprep.subr.bf16.mxu0 0
        %924 = vmatpush1.bf16.msra.mxu0 0
        %925 = vmatprep.subr.bf16.mxu0 0
        %926 = vmatpush1.bf16.msra.mxu0 0
        %927 = vmatprep.subr.bf16.mxu0 0
        %928 = vmatpush1.bf16.msra.mxu0 0
        %929 = vmatprep.subr.bf16.mxu0 0
        %930 = vmatpush1.bf16.msra.mxu0 0
        %931 = vmatprep.subr.bf16.mxu0 0
        %932 = vmatpush1.bf16.msra.mxu0 0
        %933 = vmatprep.subr.bf16.mxu0 0
        %934 = vmatpush1.bf16.msra.mxu0 0
        %935 = vmatprep.subr.bf16.mxu0 0
        %936 = vmatpush1.bf16.msra.mxu0 0
        %937 = vmatprep.subr.bf16.mxu0 0
        %938 = vmatpush1.bf16.msra.mxu0 0
        %939 = vmatprep.subr.bf16.mxu0 0
        %940 = vmatpush1.bf16.msra.mxu0 0
        %941 = vmatprep.subr.bf16.mxu0 0
        %942 = vmatpush1.bf16.msra.mxu0 0
        %943 = vmatprep.subr.bf16.mxu0 0
        %944 = vmatpush1.bf16.msra.mxu0 0
        %945 = vmatprep.subr.bf16.mxu0 0
        %946 = vmatpush1.bf16.msra.mxu0 0
        %947 = vmatprep.subr.bf16.mxu0 0
        %948 = vmatpush1.bf16.msra.mxu0 0
        %949 = vmatprep.subr.bf16.mxu0 0
        %950 = vmatpush1.bf16.msra.mxu0 0
        %951 = vmatprep.mubr.bf16.mxu0 0
        %952 = vmatmul.mubr.bf16.gmra.mrb[0].mxu0 %v659
        %v953 = vpop.f32.mrb[0].mxu0
        %v954 = vadd.f32 0.0, %v953
        %v955 = vpop.f32.mrb[0].mxu0
        %v956 = vadd.f32 0.0, %v955
        %v957 = vpop.f32.mrb[0].mxu0
        %v958 = vadd.f32 0.0, %v957
        %v959 = vpop.f32.mrb[0].mxu0
        %v960 = vadd.f32 0.0, %v959
        %961 = vdwg.mxu0
        %962 = vmatprep.subr.bf16.mxu0 %v624
        %963 = vmatpush1.bf16.msra.mxu0 %v623
        %964 = vmatprep.subr.bf16.mxu0 0
        %965 = vmatpush1.bf16.msra.mxu0 0
        %966 = vmatprep.subr.bf16.mxu0 0
        %967 = vmatpush1.bf16.msra.mxu0 0
        %968 = vmatprep.subr.bf16.mxu0 0
        %969 = vmatpush1.bf16.msra.mxu0 0
        %970 = vmatprep.subr.bf16.mxu0 0
        %971 = vmatpush1.bf16.msra.mxu0 0
        %972 = vmatprep.subr.bf16.mxu0 0
        %973 = vmatpush1.bf16.msra.mxu0 0
        %974 = vmatprep.subr.bf16.mxu0 0
        %975 = vmatpush1.bf16.msra.mxu0 0
        %976 = vmatprep.subr.bf16.mxu0 0
        %977 = vmatpush1.bf16.msra.mxu0 0
        %978 = vmatprep.subr.bf16.mxu0 0
        %979 = vmatpush1.bf16.msra.mxu0 0
        %980 = vmatprep.subr.bf16.mxu0 0
        %981 = vmatpush1.bf16.msra.mxu0 0
        %982 = vmatprep.subr.bf16.mxu0 0
        %983 = vmatpush1.bf16.msra.mxu0 0
        %984 = vmatprep.subr.bf16.mxu0 0
        %985 = vmatpush1.bf16.msra.mxu0 0
        %986 = vmatprep.subr.bf16.mxu0 0
        %987 = vmatpush1.bf16.msra.mxu0 0
        %988 = vmatprep.subr.bf16.mxu0 0
        %989 = vmatpush1.bf16.msra.mxu0 0
        %990 = vmatprep.subr.bf16.mxu0 0
        %991 = vmatpush1.bf16.msra.mxu0 0
        %992 = vmatprep.subr.bf16.mxu0 0
        %993 = vmatpush1.bf16.msra.mxu0 0
        %994 = vmatprep.mubr.bf16.mxu0 0
        %995 = vmatmul.mubr.bf16.gmra.mrb[0].mxu0 %v659
        %v996 = vpop.f32.mrb[0].mxu0
        %v997 = vadd.f32 0.0, %v996
        %v998 = vpop.f32.mrb[0].mxu0
        %v999 = vadd.f32 0.0, %v998
        %v1000 = vpop.f32.mrb[0].mxu0
        %v1001 = vadd.f32 0.0, %v1000
        %v1002 = vpop.f32.mrb[0].mxu0
        %v1003 = vadd.f32 0.0, %v1002
        %1004 = vdwg.mxu0
        %1005 = vmatprep.subr.bf16.mxu0 %v626
        %1006 = vmatpush1.bf16.msra.mxu0 %v625
        %1007 = vmatprep.subr.bf16.mxu0 0
        %1008 = vmatpush1.bf16.msra.mxu0 0
        %1009 = vmatprep.subr.bf16.mxu0 0
        %1010 = vmatpush1.bf16.msra.mxu0 0
        %1011 = vmatprep.subr.bf16.mxu0 0
        %1012 = vmatpush1.bf16.msra.mxu0 0
        %1013 = vmatprep.subr.bf16.mxu0 0
        %1014 = vmatpush1.bf16.msra.mxu0 0
        %1015 = vmatprep.subr.bf16.mxu0 0
        %1016 = vmatpush1.bf16.msra.mxu0 0
        %1017 = vmatprep.subr.bf16.mxu0 0
        %1018 = vmatpush1.bf16.msra.mxu0 0
        %1019 = vmatprep.subr.bf16.mxu0 0
        %1020 = vmatpush1.bf16.msra.mxu0 0
        %1021 = vmatprep.subr.bf16.mxu0 0
        %1022 = vmatpush1.bf16.msra.mxu0 0
        %1023 = vmatprep.subr.bf16.mxu0 0
        %1024 = vmatpush1.bf16.msra.mxu0 0
        %1025 = vmatprep.subr.bf16.mxu0 0
        %1026 = vmatpush1.bf16.msra.mxu0 0
        %1027 = vmatprep.subr.bf16.mxu0 0
        %1028 = vmatpush1.bf16.msra.mxu0 0
        %1029 = vmatprep.subr.bf16.mxu0 0
        %1030 = vmatpush1.bf16.msra.mxu0 0
        %1031 = vmatprep.subr.bf16.mxu0 0
        %1032 = vmatpush1.bf16.msra.mxu0 0
        %1033 = vmatprep.subr.bf16.mxu0 0
        %1034 = vmatpush1.bf16.msra.mxu0 0
        %1035 = vmatprep.subr.bf16.mxu0 0
        %1036 = vmatpush1.bf16.msra.mxu0 0
        %1037 = vmatprep.mubr.bf16.mxu0 0
        %1038 = vmatmul.mubr.bf16.gmra.mrb[0].mxu0 %v659
        %v1039 = vpop.f32.mrb[0].mxu0
        %v1040 = vadd.f32 0.0, %v1039
        %v1041 = vpop.f32.mrb[0].mxu0
        %v1042 = vadd.f32 0.0, %v1041
        %v1043 = vpop.f32.mrb[0].mxu0
        %v1044 = vadd.f32 0.0, %v1043
        %v1045 = vpop.f32.mrb[0].mxu0
        %v1046 = vadd.f32 0.0, %v1045
        %1047 = vdwg.mxu0
        %1048 = vmatprep.subr.bf16.mxu0 %v628
        %1049 = vmatpush1.bf16.msra.mxu0 %v627
        %1050 = vmatprep.subr.bf16.mxu0 0
        %1051 = vmatpush1.bf16.msra.mxu0 0
        %1052 = vmatprep.subr.bf16.mxu0 0
        %1053 = vmatpush1.bf16.msra.mxu0 0
        %1054 = vmatprep.subr.bf16.mxu0 0
        %1055 = vmatpush1.bf16.msra.mxu0 0
        %1056 = vmatprep.subr.bf16.mxu0 0
        %1057 = vmatpush1.bf16.msra.mxu0 0
        %1058 = vmatprep.subr.bf16.mxu0 0
        %1059 = vmatpush1.bf16.msra.mxu0 0
        %1060 = vmatprep.subr.bf16.mxu0 0
        %1061 = vmatpush1.bf16.msra.mxu0 0
        %1062 = vmatprep.subr.bf16.mxu0 0
        %1063 = vmatpush1.bf16.msra.mxu0 0
        %1064 = vmatprep.subr.bf16.mxu0 0
        %1065 = vmatpush1.bf16.msra.mxu0 0
        %1066 = vmatprep.subr.bf16.mxu0 0
        %1067 = vmatpush1.bf16.msra.mxu0 0
        %1068 = vmatprep.subr.bf16.mxu0 0
        %1069 = vmatpush1.bf16.msra.mxu0 0
        %1070 = vmatprep.subr.bf16.mxu0 0
        %1071 = vmatpush1.bf16.msra.mxu0 0
        %1072 = vmatprep.subr.bf16.mxu0 0
        %1073 = vmatpush1.bf16.msra.mxu0 0
        %1074 = vmatprep.subr.bf16.mxu0 0
        %1075 = vmatpush1.bf16.msra.mxu0 0
        %1076 = vmatprep.subr.bf16.mxu0 0
        %1077 = vmatpush1.bf16.msra.mxu0 0
        %1078 = vmatprep.subr.bf16.mxu0 0
        %1079 = vmatpush1.bf16.msra.mxu0 0
        %1080 = vmatprep.mubr.bf16.mxu0 0
        %1081 = vmatmul.mubr.bf16.gmra.mrb[0].mxu0 %v659
        %v1082 = vpop.f32.mrb[0].mxu0
        %v1083 = vadd.f32 0.0, %v1082
        %v1084 = vpop.f32.mrb[0].mxu0
        %v1085 = vadd.f32 0.0, %v1084
        %v1086 = vpop.f32.mrb[0].mxu0
        %v1087 = vadd.f32 0.0, %v1086
        %v1088 = vpop.f32.mrb[0].mxu0
        %v1089 = vadd.f32 0.0, %v1088
        %1090 = vdwg.mxu0
        %1091 = vmatprep.subr.bf16.mxu0 %v630
        %1092 = vmatpush1.bf16.msra.mxu0 %v629
        %1093 = vmatprep.subr.bf16.mxu0 0
        %1094 = vmatpush1.bf16.msra.mxu0 0
        %1095 = vmatprep.subr.bf16.mxu0 0
        %1096 = vmatpush1.bf16.msra.mxu0 0
        %1097 = vmatprep.subr.bf16.mxu0 0
        %1098 = vmatpush1.bf16.msra.mxu0 0
        %1099 = vmatprep.subr.bf16.mxu0 0
        %1100 = vmatpush1.bf16.msra.mxu0 0
        %1101 = vmatprep.subr.bf16.mxu0 0
        %1102 = vmatpush1.bf16.msra.mxu0 0
        %1103 = vmatprep.subr.bf16.mxu0 0
        %1104 = vmatpush1.bf16.msra.mxu0 0
        %1105 = vmatprep.subr.bf16.mxu0 0
        %1106 = vmatpush1.bf16.msra.mxu0 0
        %1107 = vmatprep.subr.bf16.mxu0 0
        %1108 = vmatpush1.bf16.msra.mxu0 0
        %1109 = vmatprep.subr.bf16.mxu0 0
        %1110 = vmatpush1.bf16.msra.mxu0 0
        %1111 = vmatprep.subr.bf16.mxu0 0
        %1112 = vmatpush1.bf16.msra.mxu0 0
        %1113 = vmatprep.subr.bf16.mxu0 0
        %1114 = vmatpush1.bf16.msra.mxu0 0
        %1115 = vmatprep.subr.bf16.mxu0 0
        %1116 = vmatpush1.bf16.msra.mxu0 0
        %1117 = vmatprep.subr.bf16.mxu0 0
        %1118 = vmatpush1.bf16.msra.mxu0 0
        %1119 = vmatprep.subr.bf16.mxu0 0
        %1120 = vmatpush1.bf16.msra.mxu0 0
        %1121 = vmatprep.subr.bf16.mxu0 0
        %1122 = vmatpush1.bf16.msra.mxu0 0
        %1123 = vmatprep.mubr.bf16.mxu0 0
        %1124 = vmatmul.mubr.bf16.gmra.mrb[0].mxu0 %v659
        %v1125 = vpop.f32.mrb[0].mxu0
        %v1126 = vadd.f32 0.0, %v1125
        %v1127 = vpop.f32.mrb[0].mxu0
        %v1128 = vadd.f32 0.0, %v1127
        %v1129 = vpop.f32.mrb[0].mxu0
        %v1130 = vadd.f32 0.0, %v1129
        %v1131 = vpop.f32.mrb[0].mxu0
        %v1132 = vadd.f32 0.0, %v1131
        %1133 = vdwg.mxu0
        %1134 = vmatprep.subr.bf16.mxu0 %v632
        %1135 = vmatpush1.bf16.msra.mxu0 %v631
        %1136 = vmatprep.subr.bf16.mxu0 0
        %1137 = vmatpush1.bf16.msra.mxu0 0
        %1138 = vmatprep.subr.bf16.mxu0 0
        %1139 = vmatpush1.bf16.msra.mxu0 0
        %1140 = vmatprep.subr.bf16.mxu0 0
        %1141 = vmatpush1.bf16.msra.mxu0 0
        %1142 = vmatprep.subr.bf16.mxu0 0
        %1143 = vmatpush1.bf16.msra.mxu0 0
        %1144 = vmatprep.subr.bf16.mxu0 0
        %1145 = vmatpush1.bf16.msra.mxu0 0
        %1146 = vmatprep.subr.bf16.mxu0 0
        %1147 = vmatpush1.bf16.msra.mxu0 0
        %1148 = vmatprep.subr.bf16.mxu0 0
        %1149 = vmatpush1.bf16.msra.mxu0 0
        %1150 = vmatprep.subr.bf16.mxu0 0
        %1151 = vmatpush1.bf16.msra.mxu0 0
        %1152 = vmatprep.subr.bf16.mxu0 0
        %1153 = vmatpush1.bf16.msra.mxu0 0
        %1154 = vmatprep.subr.bf16.mxu0 0
        %1155 = vmatpush1.bf16.msra.mxu0 0
        %1156 = vmatprep.subr.bf16.mxu0 0
        %1157 = vmatpush1.bf16.msra.mxu0 0
        %1158 = vmatprep.subr.bf16.mxu0 0
        %1159 = vmatpush1.bf16.msra.mxu0 0
        %1160 = vmatprep.subr.bf16.mxu0 0
        %1161 = vmatpush1.bf16.msra.mxu0 0
        %1162 = vmatprep.subr.bf16.mxu0 0
        %1163 = vmatpush1.bf16.msra.mxu0 0
        %1164 = vmatprep.subr.bf16.mxu0 0
        %1165 = vmatpush1.bf16.msra.mxu0 0
        %1166 = vmatprep.mubr.bf16.mxu0 0
        %1167 = vmatmul.mubr.bf16.gmra.mrb[0].mxu0 %v659
        %v1168 = vpop.f32.mrb[0].mxu0
        %v1169 = vadd.f32 0.0, %v1168
        %v1170 = vpop.f32.mrb[0].mxu0
        %v1171 = vadd.f32 0.0, %v1170
        %v1172 = vpop.f32.mrb[0].mxu0
        %v1173 = vadd.f32 0.0, %v1172
        %v1174 = vpop.f32.mrb[0].mxu0
        %v1175 = vadd.f32 0.0, %v1174
        %1176 = vdwg.mxu0
        %v1177 = vld [vmem:[#allocation8] sm:$0xff]
        %v1178 = vld [vmem:[#allocation8 + $0x8] sm:$0xff]
        %v1179 = vld [vmem:[#allocation8 + $0x10] sm:$0xff]
        %v1180 = vld [vmem:[#allocation8 + $0x18] sm:$0xff]
        %v1181 = vld [vmem:[#allocation8 + $0x20] sm:$0xff]
        %v1182 = vld [vmem:[#allocation8 + $0x28] sm:$0xff]
        %v1183 = vld [vmem:[#allocation8 + $0x30] sm:$0xff]
        %v1184 = vld [vmem:[#allocation8 + $0x38] sm:$0xff]
        %v1185 = vld [vmem:[#allocation8 + $0x40] sm:$0xff]
        %v1186 = vld [vmem:[#allocation8 + $0x48] sm:$0xff]
        %v1187 = vld [vmem:[#allocation8 + $0x50] sm:$0xff]
        %v1188 = vld [vmem:[#allocation8 + $0x58] sm:$0xff]
        %v1189 = vld [vmem:[#allocation8 + $0x60] sm:$0xff]
        %v1190 = vld [vmem:[#allocation8 + $0x68] sm:$0xff]
        %v1191 = vld [vmem:[#allocation8 + $0x70] sm:$0xff]
        %v1192 = vld [vmem:[#allocation8 + $0x78] sm:$0xff]
        %v1193 = vld [vmem:[#allocation8 + $0x80] sm:$0x1]
        %v1194 = vld [vmem:[#allocation8 + $0x88] sm:$0x1]
        %v1195 = vld [vmem:[#allocation8 + $0x90] sm:$0x1]
        %v1196 = vld [vmem:[#allocation8 + $0x98] sm:$0x1]
        %v1197 = vld [vmem:[#allocation8 + $0xa0] sm:$0x1]
        %v1198 = vld [vmem:[#allocation8 + $0xa8] sm:$0x1]
        %v1199 = vld [vmem:[#allocation8 + $0xb0] sm:$0x1]
        %v1200 = vld [vmem:[#allocation8 + $0xb8] sm:$0x1]
        %v1201 = vld [vmem:[#allocation8 + $0xc0] sm:$0x1]
        %v1202 = vld [vmem:[#allocation8 + $0xc8] sm:$0x1]
        %v1203 = vld [vmem:[#allocation8 + $0xd0] sm:$0x1]
        %v1204 = vld [vmem:[#allocation8 + $0xd8] sm:$0x1]
        %v1205 = vld [vmem:[#allocation8 + $0xe0] sm:$0x1]
        %v1206 = vld [vmem:[#allocation8 + $0xe8] sm:$0x1]
        %v1207 = vld [vmem:[#allocation8 + $0xf0] sm:$0x1]
        %v1208 = vld [vmem:[#allocation8 + $0xf8] sm:$0x1]
        %v1209 = vlaneseq
        %v1210 = vshrl.u32 %v1209, 7
        %v1211 = vsub.s32 0, %v1210
        %v1212 = vrot.slane %v1177, %v1211
        %v1213 = vlaneseq
        %v1214 = vshrl.u32 %v1213, 7
        %v1215 = vsub.s32 0, %v1214
        %v1216 = vrot.slane %v1178, %v1215
        %v1217 = vlaneseq
        %v1218 = vshrl.u32 %v1217, 7
        %v1219 = vsub.s32 0, %v1218
        %v1220 = vrot.slane %v1179, %v1219
        %v1221 = vlaneseq
        %v1222 = vshrl.u32 %v1221, 7
        %v1223 = vsub.s32 0, %v1222
        %v1224 = vrot.slane %v1180, %v1223
        %v1225 = vlaneseq
        %v1226 = vshrl.u32 %v1225, 7
        %v1227 = vsub.s32 0, %v1226
        %v1228 = vrot.slane %v1181, %v1227
        %v1229 = vlaneseq
        %v1230 = vshrl.u32 %v1229, 7
        %v1231 = vsub.s32 0, %v1230
        %v1232 = vrot.slane %v1182, %v1231
        %v1233 = vlaneseq
        %v1234 = vshrl.u32 %v1233, 7
        %v1235 = vsub.s32 0, %v1234
        %v1236 = vrot.slane %v1183, %v1235
        %v1237 = vlaneseq
        %v1238 = vshrl.u32 %v1237, 7
        %v1239 = vsub.s32 0, %v1238
        %v1240 = vrot.slane %v1184, %v1239
        %v1241 = vlaneseq
        %v1242 = vshrl.u32 %v1241, 7
        %v1243 = vsub.s32 0, %v1242
        %v1244 = vrot.slane %v1185, %v1243
        %v1245 = vlaneseq
        %v1246 = vshrl.u32 %v1245, 7
        %v1247 = vsub.s32 0, %v1246
        %v1248 = vrot.slane %v1186, %v1247
        %v1249 = vlaneseq
        %v1250 = vshrl.u32 %v1249, 7
        %v1251 = vsub.s32 0, %v1250
        %v1252 = vrot.slane %v1187, %v1251
        %v1253 = vlaneseq
        %v1254 = vshrl.u32 %v1253, 7
        %v1255 = vsub.s32 0, %v1254
        %v1256 = vrot.slane %v1188, %v1255
        %v1257 = vlaneseq
        %v1258 = vshrl.u32 %v1257, 7
        %v1259 = vsub.s32 0, %v1258
        %v1260 = vrot.slane %v1189, %v1259
        %v1261 = vlaneseq
        %v1262 = vshrl.u32 %v1261, 7
        %v1263 = vsub.s32 0, %v1262
        %v1264 = vrot.slane %v1190, %v1263
        %v1265 = vlaneseq
        %v1266 = vshrl.u32 %v1265, 7
        %v1267 = vsub.s32 0, %v1266
        %v1268 = vrot.slane %v1191, %v1267
        %v1269 = vlaneseq
        %v1270 = vshrl.u32 %v1269, 7
        %v1271 = vsub.s32 0, %v1270
        %v1272 = vrot.slane %v1192, %v1271
        %v1273 = vmul.f32 %v696, %v1212
        %v1274 = vmul.f32 %v698, %v1216
        %v1275 = vmul.f32 %v739, %v1220
        %v1276 = vmul.f32 %v741, %v1224
        %v1277 = vmul.f32 %v782, %v1228
        %v1278 = vmul.f32 %v784, %v1232
        %v1279 = vmul.f32 %v825, %v1236
        %v1280 = vmul.f32 %v827, %v1240
        %v1281 = vmul.f32 %v868, %v1244
        %v1282 = vmul.f32 %v870, %v1248
        %v1283 = vmul.f32 %v911, %v1252
        %v1284 = vmul.f32 %v913, %v1256
        %v1285 = vmul.f32 %v954, %v1260
        %v1286 = vmul.f32 %v956, %v1264
        %v1287 = vmul.f32 %v997, %v1268
        %v1288 = vmul.f32 %v999, %v1272
        %v1289 = vlaneseq
        %v1290 = vshrl.u32 %v1289, 7
        %v1291 = vsub.s32 1, %v1290
        %v1292 = vrot.slane %v1177, %v1291
        %v1293 = vlaneseq
        %v1294 = vshrl.u32 %v1293, 7
        %v1295 = vsub.s32 1, %v1294
        %v1296 = vrot.slane %v1178, %v1295
        %v1297 = vlaneseq
        %v1298 = vshrl.u32 %v1297, 7
        %v1299 = vsub.s32 1, %v1298
        %v1300 = vrot.slane %v1179, %v1299
        %v1301 = vlaneseq
        %v1302 = vshrl.u32 %v1301, 7
        %v1303 = vsub.s32 1, %v1302
        %v1304 = vrot.slane %v1180, %v1303
        %v1305 = vlaneseq
        %v1306 = vshrl.u32 %v1305, 7
        %v1307 = vsub.s32 1, %v1306
        %v1308 = vrot.slane %v1181, %v1307
        %v1309 = vlaneseq
        %v1310 = vshrl.u32 %v1309, 7
        %v1311 = vsub.s32 1, %v1310
        %v1312 = vrot.slane %v1182, %v1311
        %v1313 = vlaneseq
        %v1314 = vshrl.u32 %v1313, 7
        %v1315 = vsub.s32 1, %v1314
        %v1316 = vrot.slane %v1183, %v1315
        %v1317 = vlaneseq
        %v1318 = vshrl.u32 %v1317, 7
        %v1319 = vsub.s32 1, %v1318
        %v1320 = vrot.slane %v1184, %v1319
        %v1321 = vlaneseq
        %v1322 = vshrl.u32 %v1321, 7
        %v1323 = vsub.s32 1, %v1322
        %v1324 = vrot.slane %v1185, %v1323
        %v1325 = vlaneseq
        %v1326 = vshrl.u32 %v1325, 7
        %v1327 = vsub.s32 1, %v1326
        %v1328 = vrot.slane %v1186, %v1327
        %v1329 = vlaneseq
        %v1330 = vshrl.u32 %v1329, 7
        %v1331 = vsub.s32 1, %v1330
        %v1332 = vrot.slane %v1187, %v1331
        %v1333 = vlaneseq
        %v1334 = vshrl.u32 %v1333, 7
        %v1335 = vsub.s32 1, %v1334
        %v1336 = vrot.slane %v1188, %v1335
        %v1337 = vlaneseq
        %v1338 = vshrl.u32 %v1337, 7
        %v1339 = vsub.s32 1, %v1338
        %v1340 = vrot.slane %v1189, %v1339
        %v1341 = vlaneseq
        %v1342 = vshrl.u32 %v1341, 7
        %v1343 = vsub.s32 1, %v1342
        %v1344 = vrot.slane %v1190, %v1343
        %v1345 = vlaneseq
        %v1346 = vshrl.u32 %v1345, 7
        %v1347 = vsub.s32 1, %v1346
        %v1348 = vrot.slane %v1191, %v1347
        %v1349 = vlaneseq
        %v1350 = vshrl.u32 %v1349, 7
        %v1351 = vsub.s32 1, %v1350
        %v1352 = vrot.slane %v1192, %v1351
        %v1353 = vmul.f32 %v782, %v1292
        %v1354 = vmul.f32 %v784, %v1296
        %v1355 = vmul.f32 %v825, %v1300
        %v1356 = vmul.f32 %v827, %v1304
        %v1357 = vmul.f32 %v868, %v1308
        %v1358 = vmul.f32 %v870, %v1312
        %v1359 = vmul.f32 %v911, %v1316
        %v1360 = vmul.f32 %v913, %v1320
        %v1361 = vmul.f32 %v954, %v1324
        %v1362 = vmul.f32 %v956, %v1328
        %v1363 = vmul.f32 %v997, %v1332
        %v1364 = vmul.f32 %v999, %v1336
        %v1365 = vmul.f32 %v1040, %v1340
        %v1366 = vmul.f32 %v1042, %v1344
        %v1367 = vmul.f32 %v1083, %v1348
        %v1368 = vmul.f32 %v1085, %v1352
        %v1369 = vadd.f32 %v1273, %v1353
        %v1370 = vadd.f32 %v1274, %v1354
        %v1371 = vadd.f32 %v1275, %v1355
        %v1372 = vadd.f32 %v1276, %v1356
        %v1373 = vadd.f32 %v1277, %v1357
        %v1374 = vadd.f32 %v1278, %v1358
        %v1375 = vadd.f32 %v1279, %v1359
        %v1376 = vadd.f32 %v1280, %v1360
        %v1377 = vadd.f32 %v1281, %v1361
        %v1378 = vadd.f32 %v1282, %v1362
        %v1379 = vadd.f32 %v1283, %v1363
        %v1380 = vadd.f32 %v1284, %v1364
        %v1381 = vadd.f32 %v1285, %v1365
        %v1382 = vadd.f32 %v1286, %v1366
        %v1383 = vadd.f32 %v1287, %v1367
        %v1384 = vadd.f32 %v1288, %v1368
        %v1385 = vlaneseq
        %v1386 = vshrl.u32 %v1385, 7
        %v1387 = vsub.s32 2, %v1386
        %v1388 = vrot.slane %v1177, %v1387
        %v1389 = vlaneseq
        %v1390 = vshrl.u32 %v1389, 7
        %v1391 = vsub.s32 2, %v1390
        %v1392 = vrot.slane %v1178, %v1391
        %v1393 = vlaneseq
        %v1394 = vshrl.u32 %v1393, 7
        %v1395 = vsub.s32 2, %v1394
        %v1396 = vrot.slane %v1179, %v1395
        %v1397 = vlaneseq
        %v1398 = vshrl.u32 %v1397, 7
        %v1399 = vsub.s32 2, %v1398
        %v1400 = vrot.slane %v1180, %v1399
        %v1401 = vlaneseq
        %v1402 = vshrl.u32 %v1401, 7
        %v1403 = vsub.s32 2, %v1402
        %v1404 = vrot.slane %v1181, %v1403
        %v1405 = vlaneseq
        %v1406 = vshrl.u32 %v1405, 7
        %v1407 = vsub.s32 2, %v1406
        %v1408 = vrot.slane %v1182, %v1407
        %v1409 = vlaneseq
        %v1410 = vshrl.u32 %v1409, 7
        %v1411 = vsub.s32 2, %v1410
        %v1412 = vrot.slane %v1183, %v1411
        %v1413 = vlaneseq
        %v1414 = vshrl.u32 %v1413, 7
        %v1415 = vsub.s32 2, %v1414
        %v1416 = vrot.slane %v1184, %v1415
        %v1417 = vlaneseq
        %v1418 = vshrl.u32 %v1417, 7
        %v1419 = vsub.s32 2, %v1418
        %v1420 = vrot.slane %v1185, %v1419
        %v1421 = vlaneseq
        %v1422 = vshrl.u32 %v1421, 7
        %v1423 = vsub.s32 2, %v1422
        %v1424 = vrot.slane %v1186, %v1423
        %v1425 = vlaneseq
        %v1426 = vshrl.u32 %v1425, 7
        %v1427 = vsub.s32 2, %v1426
        %v1428 = vrot.slane %v1187, %v1427
        %v1429 = vlaneseq
        %v1430 = vshrl.u32 %v1429, 7
        %v1431 = vsub.s32 2, %v1430
        %v1432 = vrot.slane %v1188, %v1431
        %v1433 = vlaneseq
        %v1434 = vshrl.u32 %v1433, 7
        %v1435 = vsub.s32 2, %v1434
        %v1436 = vrot.slane %v1189, %v1435
        %v1437 = vlaneseq
        %v1438 = vshrl.u32 %v1437, 7
        %v1439 = vsub.s32 2, %v1438
        %v1440 = vrot.slane %v1190, %v1439
        %v1441 = vlaneseq
        %v1442 = vshrl.u32 %v1441, 7
        %v1443 = vsub.s32 2, %v1442
        %v1444 = vrot.slane %v1191, %v1443
        %v1445 = vlaneseq
        %v1446 = vshrl.u32 %v1445, 7
        %v1447 = vsub.s32 2, %v1446
        %v1448 = vrot.slane %v1192, %v1447
        %v1449 = vmul.f32 %v868, %v1388
        %v1450 = vmul.f32 %v870, %v1392
        %v1451 = vmul.f32 %v911, %v1396
        %v1452 = vmul.f32 %v913, %v1400
        %v1453 = vmul.f32 %v954, %v1404
        %v1454 = vmul.f32 %v956, %v1408
        %v1455 = vmul.f32 %v997, %v1412
        %v1456 = vmul.f32 %v999, %v1416
        %v1457 = vmul.f32 %v1040, %v1420
        %v1458 = vmul.f32 %v1042, %v1424
        %v1459 = vmul.f32 %v1083, %v1428
        %v1460 = vmul.f32 %v1085, %v1432
        %v1461 = vmul.f32 %v1126, %v1436
        %v1462 = vmul.f32 %v1128, %v1440
        %v1463 = vmul.f32 %v1169, %v1444
        %v1464 = vmul.f32 %v1171, %v1448
        %v1465 = vadd.f32 %v1369, %v1449
        %v1466 = vadd.f32 %v1370, %v1450
        %v1467 = vadd.f32 %v1371, %v1451
        %v1468 = vadd.f32 %v1372, %v1452
        %v1469 = vadd.f32 %v1373, %v1453
        %v1470 = vadd.f32 %v1374, %v1454
        %v1471 = vadd.f32 %v1375, %v1455
        %v1472 = vadd.f32 %v1376, %v1456
        %v1473 = vadd.f32 %v1377, %v1457
        %v1474 = vadd.f32 %v1378, %v1458
        %v1475 = vadd.f32 %v1379, %v1459
        %v1476 = vadd.f32 %v1380, %v1460
        %v1477 = vadd.f32 %v1381, %v1461
        %v1478 = vadd.f32 %v1382, %v1462
        %v1479 = vadd.f32 %v1383, %v1463
        %v1480 = vadd.f32 %v1384, %v1464
        %v1481 = vlaneseq
        %v1482 = vshrl.u32 %v1481, 7
        %v1483 = vsub.s32 3, %v1482
        %v1484 = vrot.slane %v1177, %v1483
        %v1485 = vlaneseq
        %v1486 = vshrl.u32 %v1485, 7
        %v1487 = vsub.s32 3, %v1486
        %v1488 = vrot.slane %v1178, %v1487
        %v1489 = vlaneseq
        %v1490 = vshrl.u32 %v1489, 7
        %v1491 = vsub.s32 3, %v1490
        %v1492 = vrot.slane %v1179, %v1491
        %v1493 = vlaneseq
        %v1494 = vshrl.u32 %v1493, 7
        %v1495 = vsub.s32 3, %v1494
        %v1496 = vrot.slane %v1180, %v1495
        %v1497 = vlaneseq
        %v1498 = vshrl.u32 %v1497, 7
        %v1499 = vsub.s32 3, %v1498
        %v1500 = vrot.slane %v1181, %v1499
        %v1501 = vlaneseq
        %v1502 = vshrl.u32 %v1501, 7
        %v1503 = vsub.s32 3, %v1502
        %v1504 = vrot.slane %v1182, %v1503
        %v1505 = vlaneseq
        %v1506 = vshrl.u32 %v1505, 7
        %v1507 = vsub.s32 3, %v1506
        %v1508 = vrot.slane %v1183, %v1507
        %v1509 = vlaneseq
        %v1510 = vshrl.u32 %v1509, 7
        %v1511 = vsub.s32 3, %v1510
        %v1512 = vrot.slane %v1184, %v1511
        %v1513 = vlaneseq
        %v1514 = vshrl.u32 %v1513, 7
        %v1515 = vsub.s32 3, %v1514
        %v1516 = vrot.slane %v1185, %v1515
        %v1517 = vlaneseq
        %v1518 = vshrl.u32 %v1517, 7
        %v1519 = vsub.s32 3, %v1518
        %v1520 = vrot.slane %v1186, %v1519
        %v1521 = vlaneseq
        %v1522 = vshrl.u32 %v1521, 7
        %v1523 = vsub.s32 3, %v1522
        %v1524 = vrot.slane %v1187, %v1523
        %v1525 = vlaneseq
        %v1526 = vshrl.u32 %v1525, 7
        %v1527 = vsub.s32 3, %v1526
        %v1528 = vrot.slane %v1188, %v1527
        %v1529 = vlaneseq
        %v1530 = vshrl.u32 %v1529, 7
        %v1531 = vsub.s32 3, %v1530
        %v1532 = vrot.slane %v1189, %v1531
        %v1533 = vlaneseq
        %v1534 = vshrl.u32 %v1533, 7
        %v1535 = vsub.s32 3, %v1534
        %v1536 = vrot.slane %v1190, %v1535
        %v1537 = vlaneseq
        %v1538 = vshrl.u32 %v1537, 7
        %v1539 = vsub.s32 3, %v1538
        %v1540 = vrot.slane %v1191, %v1539
        %v1541 = vlaneseq
        %v1542 = vshrl.u32 %v1541, 7
        %v1543 = vsub.s32 3, %v1542
        %v1544 = vrot.slane %v1192, %v1543
        %v1545 = vmul.f32 %v696, %v1484
        %v1546 = vmul.f32 %v698, %v1488
        %v1547 = vmul.f32 %v739, %v1492
        %v1548 = vmul.f32 %v741, %v1496
        %v1549 = vmul.f32 %v782, %v1500
        %v1550 = vmul.f32 %v784, %v1504
        %v1551 = vmul.f32 %v825, %v1508
        %v1552 = vmul.f32 %v827, %v1512
        %v1553 = vmul.f32 %v868, %v1516
        %v1554 = vmul.f32 %v870, %v1520
        %v1555 = vmul.f32 %v911, %v1524
        %v1556 = vmul.f32 %v913, %v1528
        %v1557 = vmul.f32 %v954, %v1532
        %v1558 = vmul.f32 %v956, %v1536
        %v1559 = vmul.f32 %v997, %v1540
        %v1560 = vmul.f32 %v999, %v1544
        %v1561 = vmul.f32 %v700, %v1484
        %v1562 = vmul.f32 %v702, %v1488
        %v1563 = vmul.f32 %v743, %v1492
        %v1564 = vmul.f32 %v745, %v1496
        %v1565 = vmul.f32 %v786, %v1500
        %v1566 = vmul.f32 %v788, %v1504
        %v1567 = vmul.f32 %v829, %v1508
        %v1568 = vmul.f32 %v831, %v1512
        %v1569 = vmul.f32 %v872, %v1516
        %v1570 = vmul.f32 %v874, %v1520
        %v1571 = vmul.f32 %v915, %v1524
        %v1572 = vmul.f32 %v917, %v1528
        %v1573 = vmul.f32 %v958, %v1532
        %v1574 = vmul.f32 %v960, %v1536
        %v1575 = vmul.f32 %v1001, %v1540
        %v1576 = vmul.f32 %v1003, %v1544
        %vm1609 = vcmask 1043456
        %v1610 = vrot.slane %v1545, 4
        %v1611 = vrot.slane %v1561, 4
        %v1612 = vsel %vm1609, %v1610, %v1611
        %v1613 = vrot.slane %v1546, 4
        %v1614 = vrot.slane %v1562, 4
        %v1615 = vsel %vm1609, %v1613, %v1614
        %v1616 = vrot.slane %v1547, 4
        %v1617 = vrot.slane %v1563, 4
        %v1618 = vsel %vm1609, %v1616, %v1617
        %v1619 = vrot.slane %v1548, 4
        %v1620 = vrot.slane %v1564, 4
        %v1621 = vsel %vm1609, %v1619, %v1620
        %v1622 = vrot.slane %v1549, 4
        %v1623 = vrot.slane %v1565, 4
        %v1624 = vsel %vm1609, %v1622, %v1623
        %v1625 = vrot.slane %v1550, 4
        %v1626 = vrot.slane %v1566, 4
        %v1627 = vsel %vm1609, %v1625, %v1626
        %v1628 = vrot.slane %v1551, 4
        %v1629 = vrot.slane %v1567, 4
        %v1630 = vsel %vm1609, %v1628, %v1629
        %v1631 = vrot.slane %v1552, 4
        %v1632 = vrot.slane %v1568, 4
        %v1633 = vsel %vm1609, %v1631, %v1632
        %v1634 = vrot.slane %v1553, 4
        %v1635 = vrot.slane %v1569, 4
        %v1636 = vsel %vm1609, %v1634, %v1635
        %v1637 = vrot.slane %v1554, 4
        %v1638 = vrot.slane %v1570, 4
        %v1639 = vsel %vm1609, %v1637, %v1638
        %v1640 = vrot.slane %v1555, 4
        %v1641 = vrot.slane %v1571, 4
        %v1642 = vsel %vm1609, %v1640, %v1641
        %v1643 = vrot.slane %v1556, 4
        %v1644 = vrot.slane %v1572, 4
        %v1645 = vsel %vm1609, %v1643, %v1644
        %v1646 = vrot.slane %v1557, 4
        %v1647 = vrot.slane %v1573, 4
        %v1648 = vsel %vm1609, %v1646, %v1647
        %v1649 = vrot.slane %v1558, 4
        %v1650 = vrot.slane %v1574, 4
        %v1651 = vsel %vm1609, %v1649, %v1650
        %v1652 = vrot.slane %v1559, 4
        %v1653 = vrot.slane %v1575, 4
        %v1654 = vsel %vm1609, %v1652, %v1653
        %v1655 = vrot.slane %v1560, 4
        %v1656 = vrot.slane %v1576, 4
        %v1657 = vsel %vm1609, %v1655, %v1656
        %v1674 = vadd.f32 %v1465, %v1612
        %v1675 = vadd.f32 %v1466, %v1615
        %v1676 = vadd.f32 %v1467, %v1618
        %v1677 = vadd.f32 %v1468, %v1621
        %v1678 = vadd.f32 %v1469, %v1624
        %v1679 = vadd.f32 %v1470, %v1627
        %v1680 = vadd.f32 %v1471, %v1630
        %v1681 = vadd.f32 %v1472, %v1633
        %v1682 = vadd.f32 %v1473, %v1636
        %v1683 = vadd.f32 %v1474, %v1639
        %v1684 = vadd.f32 %v1475, %v1642
        %v1685 = vadd.f32 %v1476, %v1645
        %v1686 = vadd.f32 %v1477, %v1648
        %v1687 = vadd.f32 %v1478, %v1651
        %v1688 = vadd.f32 %v1479, %v1654
        %v1689 = vadd.f32 %v1480, %v1657
        %v1690 = vlaneseq
        %v1691 = vshrl.u32 %v1690, 7
        %v1692 = vsub.s32 4, %v1691
        %v1693 = vrot.slane %v1177, %v1692
        %v1694 = vlaneseq
        %v1695 = vshrl.u32 %v1694, 7
        %v1696 = vsub.s32 4, %v1695
        %v1697 = vrot.slane %v1178, %v1696
        %v1698 = vlaneseq
        %v1699 = vshrl.u32 %v1698, 7
        %v1700 = vsub.s32 4, %v1699
        %v1701 = vrot.slane %v1179, %v1700
        %v1702 = vlaneseq
        %v1703 = vshrl.u32 %v1702, 7
        %v1704 = vsub.s32 4, %v1703
        %v1705 = vrot.slane %v1180, %v1704
        %v1706 = vlaneseq
        %v1707 = vshrl.u32 %v1706, 7
        %v1708 = vsub.s32 4, %v1707
        %v1709 = vrot.slane %v1181, %v1708
        %v1710 = vlaneseq
        %v1711 = vshrl.u32 %v1710, 7
        %v1712 = vsub.s32 4, %v1711
        %v1713 = vrot.slane %v1182, %v1712
        %v1714 = vlaneseq
        %v1715 = vshrl.u32 %v1714, 7
        %v1716 = vsub.s32 4, %v1715
        %v1717 = vrot.slane %v1183, %v1716
        %v1718 = vlaneseq
        %v1719 = vshrl.u32 %v1718, 7
        %v1720 = vsub.s32 4, %v1719
        %v1721 = vrot.slane %v1184, %v1720
        %v1722 = vlaneseq
        %v1723 = vshrl.u32 %v1722, 7
        %v1724 = vsub.s32 4, %v1723
        %v1725 = vrot.slane %v1185, %v1724
        %v1726 = vlaneseq
        %v1727 = vshrl.u32 %v1726, 7
        %v1728 = vsub.s32 4, %v1727
        %v1729 = vrot.slane %v1186, %v1728
        %v1730 = vlaneseq
        %v1731 = vshrl.u32 %v1730, 7
        %v1732 = vsub.s32 4, %v1731
        %v1733 = vrot.slane %v1187, %v1732
        %v1734 = vlaneseq
        %v1735 = vshrl.u32 %v1734, 7
        %v1736 = vsub.s32 4, %v1735
        %v1737 = vrot.slane %v1188, %v1736
        %v1738 = vlaneseq
        %v1739 = vshrl.u32 %v1738, 7
        %v1740 = vsub.s32 4, %v1739
        %v1741 = vrot.slane %v1189, %v1740
        %v1742 = vlaneseq
        %v1743 = vshrl.u32 %v1742, 7
        %v1744 = vsub.s32 4, %v1743
        %v1745 = vrot.slane %v1190, %v1744
        %v1746 = vlaneseq
        %v1747 = vshrl.u32 %v1746, 7
        %v1748 = vsub.s32 4, %v1747
        %v1749 = vrot.slane %v1191, %v1748
        %v1750 = vlaneseq
        %v1751 = vshrl.u32 %v1750, 7
        %v1752 = vsub.s32 4, %v1751
        %v1753 = vrot.slane %v1192, %v1752
        %v1754 = vmul.f32 %v782, %v1693
        %v1755 = vmul.f32 %v784, %v1697
        %v1756 = vmul.f32 %v825, %v1701
        %v1757 = vmul.f32 %v827, %v1705
        %v1758 = vmul.f32 %v868, %v1709
        %v1759 = vmul.f32 %v870, %v1713
        %v1760 = vmul.f32 %v911, %v1717
        %v1761 = vmul.f32 %v913, %v1721
        %v1762 = vmul.f32 %v954, %v1725
        %v1763 = vmul.f32 %v956, %v1729
        %v1764 = vmul.f32 %v997, %v1733
        %v1765 = vmul.f32 %v999, %v1737
        %v1766 = vmul.f32 %v1040, %v1741
        %v1767 = vmul.f32 %v1042, %v1745
        %v1768 = vmul.f32 %v1083, %v1749
        %v1769 = vmul.f32 %v1085, %v1753
        %v1770 = vmul.f32 %v786, %v1693
        %v1771 = vmul.f32 %v788, %v1697
        %v1772 = vmul.f32 %v829, %v1701
        %v1773 = vmul.f32 %v831, %v1705
        %v1774 = vmul.f32 %v872, %v1709
        %v1775 = vmul.f32 %v874, %v1713
        %v1776 = vmul.f32 %v915, %v1717
        %v1777 = vmul.f32 %v917, %v1721
        %v1778 = vmul.f32 %v958, %v1725
        %v1779 = vmul.f32 %v960, %v1729
        %v1780 = vmul.f32 %v1001, %v1733
        %v1781 = vmul.f32 %v1003, %v1737
        %v1782 = vmul.f32 %v1044, %v1741
        %v1783 = vmul.f32 %v1046, %v1745
        %v1784 = vmul.f32 %v1087, %v1749
        %v1785 = vmul.f32 %v1089, %v1753
        %v1818 = vrot.slane %v1754, 4
        %v1819 = vrot.slane %v1770, 4
        %v1820 = vsel %vm1609, %v1818, %v1819
        %v1821 = vrot.slane %v1755, 4
        %v1822 = vrot.slane %v1771, 4
        %v1823 = vsel %vm1609, %v1821, %v1822
        %v1824 = vrot.slane %v1756, 4
        %v1825 = vrot.slane %v1772, 4
        %v1826 = vsel %vm1609, %v1824, %v1825
        %v1827 = vrot.slane %v1757, 4
        %v1828 = vrot.slane %v1773, 4
        %v1829 = vsel %vm1609, %v1827, %v1828
        %v1830 = vrot.slane %v1758, 4
        %v1831 = vrot.slane %v1774, 4
        %v1832 = vsel %vm1609, %v1830, %v1831
        %v1833 = vrot.slane %v1759, 4
        %v1834 = vrot.slane %v1775, 4
        %v1835 = vsel %vm1609, %v1833, %v1834
        %v1836 = vrot.slane %v1760, 4
        %v1837 = vrot.slane %v1776, 4
        %v1838 = vsel %vm1609, %v1836, %v1837
        %v1839 = vrot.slane %v1761, 4
        %v1840 = vrot.slane %v1777, 4
        %v1841 = vsel %vm1609, %v1839, %v1840
        %v1842 = vrot.slane %v1762, 4
        %v1843 = vrot.slane %v1778, 4
        %v1844 = vsel %vm1609, %v1842, %v1843
        %v1845 = vrot.slane %v1763, 4
        %v1846 = vrot.slane %v1779, 4
        %v1847 = vsel %vm1609, %v1845, %v1846
        %v1848 = vrot.slane %v1764, 4
        %v1849 = vrot.slane %v1780, 4
        %v1850 = vsel %vm1609, %v1848, %v1849
        %v1851 = vrot.slane %v1765, 4
        %v1852 = vrot.slane %v1781, 4
        %v1853 = vsel %vm1609, %v1851, %v1852
        %v1854 = vrot.slane %v1766, 4
        %v1855 = vrot.slane %v1782, 4
        %v1856 = vsel %vm1609, %v1854, %v1855
        %v1857 = vrot.slane %v1767, 4
        %v1858 = vrot.slane %v1783, 4
        %v1859 = vsel %vm1609, %v1857, %v1858
        %v1860 = vrot.slane %v1768, 4
        %v1861 = vrot.slane %v1784, 4
        %v1862 = vsel %vm1609, %v1860, %v1861
        %v1863 = vrot.slane %v1769, 4
        %v1864 = vrot.slane %v1785, 4
        %v1865 = vsel %vm1609, %v1863, %v1864
        %v1882 = vadd.f32 %v1674, %v1820
        %v1883 = vadd.f32 %v1675, %v1823
        %v1884 = vadd.f32 %v1676, %v1826
        %v1885 = vadd.f32 %v1677, %v1829
        %v1886 = vadd.f32 %v1678, %v1832
        %v1887 = vadd.f32 %v1679, %v1835
        %v1888 = vadd.f32 %v1680, %v1838
        %v1889 = vadd.f32 %v1681, %v1841
        %v1890 = vadd.f32 %v1682, %v1844
        %v1891 = vadd.f32 %v1683, %v1847
        %v1892 = vadd.f32 %v1684, %v1850
        %v1893 = vadd.f32 %v1685, %v1853
        %v1894 = vadd.f32 %v1686, %v1856
        %v1895 = vadd.f32 %v1687, %v1859
        %v1896 = vadd.f32 %v1688, %v1862
        %v1897 = vadd.f32 %v1689, %v1865
        %v1898 = vlaneseq
        %v1899 = vshrl.u32 %v1898, 7
        %v1900 = vsub.s32 5, %v1899
        %v1901 = vrot.slane %v1177, %v1900
        %v1902 = vlaneseq
        %v1903 = vshrl.u32 %v1902, 7
        %v1904 = vsub.s32 5, %v1903
        %v1905 = vrot.slane %v1178, %v1904
        %v1906 = vlaneseq
        %v1907 = vshrl.u32 %v1906, 7
        %v1908 = vsub.s32 5, %v1907
        %v1909 = vrot.slane %v1179, %v1908
        %v1910 = vlaneseq
        %v1911 = vshrl.u32 %v1910, 7
        %v1912 = vsub.s32 5, %v1911
        %v1913 = vrot.slane %v1180, %v1912
        %v1914 = vlaneseq
        %v1915 = vshrl.u32 %v1914, 7
        %v1916 = vsub.s32 5, %v1915
        %v1917 = vrot.slane %v1181, %v1916
        %v1918 = vlaneseq
        %v1919 = vshrl.u32 %v1918, 7
        %v1920 = vsub.s32 5, %v1919
        %v1921 = vrot.slane %v1182, %v1920
        %v1922 = vlaneseq
        %v1923 = vshrl.u32 %v1922, 7
        %v1924 = vsub.s32 5, %v1923
        %v1925 = vrot.slane %v1183, %v1924
        %v1926 = vlaneseq
        %v1927 = vshrl.u32 %v1926, 7
        %v1928 = vsub.s32 5, %v1927
        %v1929 = vrot.slane %v1184, %v1928
        %v1930 = vlaneseq
        %v1931 = vshrl.u32 %v1930, 7
        %v1932 = vsub.s32 5, %v1931
        %v1933 = vrot.slane %v1185, %v1932
        %v1934 = vlaneseq
        %v1935 = vshrl.u32 %v1934, 7
        %v1936 = vsub.s32 5, %v1935
        %v1937 = vrot.slane %v1186, %v1936
        %v1938 = vlaneseq
        %v1939 = vshrl.u32 %v1938, 7
        %v1940 = vsub.s32 5, %v1939
        %v1941 = vrot.slane %v1187, %v1940
        %v1942 = vlaneseq
        %v1943 = vshrl.u32 %v1942, 7
        %v1944 = vsub.s32 5, %v1943
        %v1945 = vrot.slane %v1188, %v1944
        %v1946 = vlaneseq
        %v1947 = vshrl.u32 %v1946, 7
        %v1948 = vsub.s32 5, %v1947
        %v1949 = vrot.slane %v1189, %v1948
        %v1950 = vlaneseq
        %v1951 = vshrl.u32 %v1950, 7
        %v1952 = vsub.s32 5, %v1951
        %v1953 = vrot.slane %v1190, %v1952
        %v1954 = vlaneseq
        %v1955 = vshrl.u32 %v1954, 7
        %v1956 = vsub.s32 5, %v1955
        %v1957 = vrot.slane %v1191, %v1956
        %v1958 = vlaneseq
        %v1959 = vshrl.u32 %v1958, 7
        %v1960 = vsub.s32 5, %v1959
        %v1961 = vrot.slane %v1192, %v1960
        %v1962 = vmul.f32 %v868, %v1901
        %v1963 = vmul.f32 %v870, %v1905
        %v1964 = vmul.f32 %v911, %v1909
        %v1965 = vmul.f32 %v913, %v1913
        %v1966 = vmul.f32 %v954, %v1917
        %v1967 = vmul.f32 %v956, %v1921
        %v1968 = vmul.f32 %v997, %v1925
        %v1969 = vmul.f32 %v999, %v1929
        %v1970 = vmul.f32 %v1040, %v1933
        %v1971 = vmul.f32 %v1042, %v1937
        %v1972 = vmul.f32 %v1083, %v1941
        %v1973 = vmul.f32 %v1085, %v1945
        %v1974 = vmul.f32 %v1126, %v1949
        %v1975 = vmul.f32 %v1128, %v1953
        %v1976 = vmul.f32 %v1169, %v1957
        %v1977 = vmul.f32 %v1171, %v1961
        %v1978 = vmul.f32 %v872, %v1901
        %v1979 = vmul.f32 %v874, %v1905
        %v1980 = vmul.f32 %v915, %v1909
        %v1981 = vmul.f32 %v917, %v1913
        %v1982 = vmul.f32 %v958, %v1917
        %v1983 = vmul.f32 %v960, %v1921
        %v1984 = vmul.f32 %v1001, %v1925
        %v1985 = vmul.f32 %v1003, %v1929
        %v1986 = vmul.f32 %v1044, %v1933
        %v1987 = vmul.f32 %v1046, %v1937
        %v1988 = vmul.f32 %v1087, %v1941
        %v1989 = vmul.f32 %v1089, %v1945
        %v1990 = vmul.f32 %v1130, %v1949
        %v1991 = vmul.f32 %v1132, %v1953
        %v1992 = vmul.f32 %v1173, %v1957
        %v1993 = vmul.f32 %v1175, %v1961
        %v2026 = vrot.slane %v1962, 4
        %v2027 = vrot.slane %v1978, 4
        %v2028 = vsel %vm1609, %v2026, %v2027
        %v2029 = vrot.slane %v1963, 4
        %v2030 = vrot.slane %v1979, 4
        %v2031 = vsel %vm1609, %v2029, %v2030
        %v2032 = vrot.slane %v1964, 4
        %v2033 = vrot.slane %v1980, 4
        %v2034 = vsel %vm1609, %v2032, %v2033
        %v2035 = vrot.slane %v1965, 4
        %v2036 = vrot.slane %v1981, 4
        %v2037 = vsel %vm1609, %v2035, %v2036
        %v2038 = vrot.slane %v1966, 4
        %v2039 = vrot.slane %v1982, 4
        %v2040 = vsel %vm1609, %v2038, %v2039
        %v2041 = vrot.slane %v1967, 4
        %v2042 = vrot.slane %v1983, 4
        %v2043 = vsel %vm1609, %v2041, %v2042
        %v2044 = vrot.slane %v1968, 4
        %v2045 = vrot.slane %v1984, 4
        %v2046 = vsel %vm1609, %v2044, %v2045
        %v2047 = vrot.slane %v1969, 4
        %v2048 = vrot.slane %v1985, 4
        %v2049 = vsel %vm1609, %v2047, %v2048
        %v2050 = vrot.slane %v1970, 4
        %v2051 = vrot.slane %v1986, 4
        %v2052 = vsel %vm1609, %v2050, %v2051
        %v2053 = vrot.slane %v1971, 4
        %v2054 = vrot.slane %v1987, 4
        %v2055 = vsel %vm1609, %v2053, %v2054
        %v2056 = vrot.slane %v1972, 4
        %v2057 = vrot.slane %v1988, 4
        %v2058 = vsel %vm1609, %v2056, %v2057
        %v2059 = vrot.slane %v1973, 4
        %v2060 = vrot.slane %v1989, 4
        %v2061 = vsel %vm1609, %v2059, %v2060
        %v2062 = vrot.slane %v1974, 4
        %v2063 = vrot.slane %v1990, 4
        %v2064 = vsel %vm1609, %v2062, %v2063
        %v2065 = vrot.slane %v1975, 4
        %v2066 = vrot.slane %v1991, 4
        %v2067 = vsel %vm1609, %v2065, %v2066
        %v2068 = vrot.slane %v1976, 4
        %v2069 = vrot.slane %v1992, 4
        %v2070 = vsel %vm1609, %v2068, %v2069
        %v2071 = vrot.slane %v1977, 4
        %v2072 = vrot.slane %v1993, 4
        %v2073 = vsel %vm1609, %v2071, %v2072
        %v2090 = vadd.f32 %v1882, %v2028
        %v2091 = vadd.f32 %v1883, %v2031
        %v2092 = vadd.f32 %v1884, %v2034
        %v2093 = vadd.f32 %v1885, %v2037
        %v2094 = vadd.f32 %v1886, %v2040
        %v2095 = vadd.f32 %v1887, %v2043
        %v2096 = vadd.f32 %v1888, %v2046
        %v2097 = vadd.f32 %v1889, %v2049
        %v2098 = vadd.f32 %v1890, %v2052
        %v2099 = vadd.f32 %v1891, %v2055
        %v2100 = vadd.f32 %v1892, %v2058
        %v2101 = vadd.f32 %v1893, %v2061
        %v2102 = vadd.f32 %v1894, %v2064
        %v2103 = vadd.f32 %v1895, %v2067
        %v2104 = vadd.f32 %v1896, %v2070
        %v2105 = vadd.f32 %v1897, %v2073
        %v2106 = vlaneseq
        %v2107 = vshrl.u32 %v2106, 7
        %v2108 = vsub.s32 6, %v2107
        %v2109 = vrot.slane %v1177, %v2108
        %v2110 = vlaneseq
        %v2111 = vshrl.u32 %v2110, 7
        %v2112 = vsub.s32 6, %v2111
        %v2113 = vrot.slane %v1178, %v2112
        %v2114 = vlaneseq
        %v2115 = vshrl.u32 %v2114, 7
        %v2116 = vsub.s32 6, %v2115
        %v2117 = vrot.slane %v1179, %v2116
        %v2118 = vlaneseq
        %v2119 = vshrl.u32 %v2118, 7
        %v2120 = vsub.s32 6, %v2119
        %v2121 = vrot.slane %v1180, %v2120
        %v2122 = vlaneseq
        %v2123 = vshrl.u32 %v2122, 7
        %v2124 = vsub.s32 6, %v2123
        %v2125 = vrot.slane %v1181, %v2124
        %v2126 = vlaneseq
        %v2127 = vshrl.u32 %v2126, 7
        %v2128 = vsub.s32 6, %v2127
        %v2129 = vrot.slane %v1182, %v2128
        %v2130 = vlaneseq
        %v2131 = vshrl.u32 %v2130, 7
        %v2132 = vsub.s32 6, %v2131
        %v2133 = vrot.slane %v1183, %v2132
        %v2134 = vlaneseq
        %v2135 = vshrl.u32 %v2134, 7
        %v2136 = vsub.s32 6, %v2135
        %v2137 = vrot.slane %v1184, %v2136
        %v2138 = vlaneseq
        %v2139 = vshrl.u32 %v2138, 7
        %v2140 = vsub.s32 6, %v2139
        %v2141 = vrot.slane %v1185, %v2140
        %v2142 = vlaneseq
        %v2143 = vshrl.u32 %v2142, 7
        %v2144 = vsub.s32 6, %v2143
        %v2145 = vrot.slane %v1186, %v2144
        %v2146 = vlaneseq
        %v2147 = vshrl.u32 %v2146, 7
        %v2148 = vsub.s32 6, %v2147
        %v2149 = vrot.slane %v1187, %v2148
        %v2150 = vlaneseq
        %v2151 = vshrl.u32 %v2150, 7
        %v2152 = vsub.s32 6, %v2151
        %v2153 = vrot.slane %v1188, %v2152
        %v2154 = vlaneseq
        %v2155 = vshrl.u32 %v2154, 7
        %v2156 = vsub.s32 6, %v2155
        %v2157 = vrot.slane %v1189, %v2156
        %v2158 = vlaneseq
        %v2159 = vshrl.u32 %v2158, 7
        %v2160 = vsub.s32 6, %v2159
        %v2161 = vrot.slane %v1190, %v2160
        %v2162 = vlaneseq
        %v2163 = vshrl.u32 %v2162, 7
        %v2164 = vsub.s32 6, %v2163
        %v2165 = vrot.slane %v1191, %v2164
        %v2166 = vlaneseq
        %v2167 = vshrl.u32 %v2166, 7
        %v2168 = vsub.s32 6, %v2167
        %v2169 = vrot.slane %v1192, %v2168
        %v2170 = vmul.f32 %v700, %v2109
        %v2171 = vmul.f32 %v702, %v2113
        %v2172 = vmul.f32 %v743, %v2117
        %v2173 = vmul.f32 %v745, %v2121
        %v2174 = vmul.f32 %v786, %v2125
        %v2175 = vmul.f32 %v788, %v2129
        %v2176 = vmul.f32 %v829, %v2133
        %v2177 = vmul.f32 %v831, %v2137
        %v2178 = vmul.f32 %v872, %v2141
        %v2179 = vmul.f32 %v874, %v2145
        %v2180 = vmul.f32 %v915, %v2149
        %v2181 = vmul.f32 %v917, %v2153
        %v2182 = vmul.f32 %v958, %v2157
        %v2183 = vmul.f32 %v960, %v2161
        %v2184 = vmul.f32 %v1001, %v2165
        %v2185 = vmul.f32 %v1003, %v2169
        %v2186 = vadd.f32 %v2090, %v2170
        %v2187 = vadd.f32 %v2091, %v2171
        %v2188 = vadd.f32 %v2092, %v2172
        %v2189 = vadd.f32 %v2093, %v2173
        %v2190 = vadd.f32 %v2094, %v2174
        %v2191 = vadd.f32 %v2095, %v2175
        %v2192 = vadd.f32 %v2096, %v2176
        %v2193 = vadd.f32 %v2097, %v2177
        %v2194 = vadd.f32 %v2098, %v2178
        %v2195 = vadd.f32 %v2099, %v2179
        %v2196 = vadd.f32 %v2100, %v2180
        %v2197 = vadd.f32 %v2101, %v2181
        %v2198 = vadd.f32 %v2102, %v2182
        %v2199 = vadd.f32 %v2103, %v2183
        %v2200 = vadd.f32 %v2104, %v2184
        %v2201 = vadd.f32 %v2105, %v2185
        %v2202 = vlaneseq
        %v2203 = vshrl.u32 %v2202, 7
        %v2204 = vsub.s32 7, %v2203
        %v2205 = vrot.slane %v1177, %v2204
        %v2206 = vlaneseq
        %v2207 = vshrl.u32 %v2206, 7
        %v2208 = vsub.s32 7, %v2207
        %v2209 = vrot.slane %v1178, %v2208
        %v2210 = vlaneseq
        %v2211 = vshrl.u32 %v2210, 7
        %v2212 = vsub.s32 7, %v2211
        %v2213 = vrot.slane %v1179, %v2212
        %v2214 = vlaneseq
        %v2215 = vshrl.u32 %v2214, 7
        %v2216 = vsub.s32 7, %v2215
        %v2217 = vrot.slane %v1180, %v2216
        %v2218 = vlaneseq
        %v2219 = vshrl.u32 %v2218, 7
        %v2220 = vsub.s32 7, %v2219
        %v2221 = vrot.slane %v1181, %v2220
        %v2222 = vlaneseq
        %v2223 = vshrl.u32 %v2222, 7
        %v2224 = vsub.s32 7, %v2223
        %v2225 = vrot.slane %v1182, %v2224
        %v2226 = vlaneseq
        %v2227 = vshrl.u32 %v2226, 7
        %v2228 = vsub.s32 7, %v2227
        %v2229 = vrot.slane %v1183, %v2228
        %v2230 = vlaneseq
        %v2231 = vshrl.u32 %v2230, 7
        %v2232 = vsub.s32 7, %v2231
        %v2233 = vrot.slane %v1184, %v2232
        %v2234 = vlaneseq
        %v2235 = vshrl.u32 %v2234, 7
        %v2236 = vsub.s32 7, %v2235
        %v2237 = vrot.slane %v1185, %v2236
        %v2238 = vlaneseq
        %v2239 = vshrl.u32 %v2238, 7
        %v2240 = vsub.s32 7, %v2239
        %v2241 = vrot.slane %v1186, %v2240
        %v2242 = vlaneseq
        %v2243 = vshrl.u32 %v2242, 7
        %v2244 = vsub.s32 7, %v2243
        %v2245 = vrot.slane %v1187, %v2244
        %v2246 = vlaneseq
        %v2247 = vshrl.u32 %v2246, 7
        %v2248 = vsub.s32 7, %v2247
        %v2249 = vrot.slane %v1188, %v2248
        %v2250 = vlaneseq
        %v2251 = vshrl.u32 %v2250, 7
        %v2252 = vsub.s32 7, %v2251
        %v2253 = vrot.slane %v1189, %v2252
        %v2254 = vlaneseq
        %v2255 = vshrl.u32 %v2254, 7
        %v2256 = vsub.s32 7, %v2255
        %v2257 = vrot.slane %v1190, %v2256
        %v2258 = vlaneseq
        %v2259 = vshrl.u32 %v2258, 7
        %v2260 = vsub.s32 7, %v2259
        %v2261 = vrot.slane %v1191, %v2260
        %v2262 = vlaneseq
        %v2263 = vshrl.u32 %v2262, 7
        %v2264 = vsub.s32 7, %v2263
        %v2265 = vrot.slane %v1192, %v2264
        %v2266 = vmul.f32 %v786, %v2205
        %v2267 = vmul.f32 %v788, %v2209
        %v2268 = vmul.f32 %v829, %v2213
        %v2269 = vmul.f32 %v831, %v2217
        %v2270 = vmul.f32 %v872, %v2221
        %v2271 = vmul.f32 %v874, %v2225
        %v2272 = vmul.f32 %v915, %v2229
        %v2273 = vmul.f32 %v917, %v2233
        %v2274 = vmul.f32 %v958, %v2237
        %v2275 = vmul.f32 %v960, %v2241
        %v2276 = vmul.f32 %v1001, %v2245
        %v2277 = vmul.f32 %v1003, %v2249
        %v2278 = vmul.f32 %v1044, %v2253
        %v2279 = vmul.f32 %v1046, %v2257
        %v2280 = vmul.f32 %v1087, %v2261
        %v2281 = vmul.f32 %v1089, %v2265
        %v2282 = vadd.f32 %v2186, %v2266
        %v2283 = vadd.f32 %v2187, %v2267
        %v2284 = vadd.f32 %v2188, %v2268
        %v2285 = vadd.f32 %v2189, %v2269
        %v2286 = vadd.f32 %v2190, %v2270
        %v2287 = vadd.f32 %v2191, %v2271
        %v2288 = vadd.f32 %v2192, %v2272
        %v2289 = vadd.f32 %v2193, %v2273
        %v2290 = vadd.f32 %v2194, %v2274
        %v2291 = vadd.f32 %v2195, %v2275
        %v2292 = vadd.f32 %v2196, %v2276
        %v2293 = vadd.f32 %v2197, %v2277
        %v2294 = vadd.f32 %v2198, %v2278
        %v2295 = vadd.f32 %v2199, %v2279
        %v2296 = vadd.f32 %v2200, %v2280
        %v2297 = vadd.f32 %v2201, %v2281
        %v2298 = vlaneseq
        %v2299 = vshrl.u32 %v2298, 7
        %v2300 = vsub.s32 0, %v2299
        %v2301 = vrot.slane %v1193, %v2300
        %v2302 = vlaneseq
        %v2303 = vshrl.u32 %v2302, 7
        %v2304 = vsub.s32 0, %v2303
        %v2305 = vrot.slane %v1194, %v2304
        %v2306 = vlaneseq
        %v2307 = vshrl.u32 %v2306, 7
        %v2308 = vsub.s32 0, %v2307
        %v2309 = vrot.slane %v1195, %v2308
        %v2310 = vlaneseq
        %v2311 = vshrl.u32 %v2310, 7
        %v2312 = vsub.s32 0, %v2311
        %v2313 = vrot.slane %v1196, %v2312
        %v2314 = vlaneseq
        %v2315 = vshrl.u32 %v2314, 7
        %v2316 = vsub.s32 0, %v2315
        %v2317 = vrot.slane %v1197, %v2316
        %v2318 = vlaneseq
        %v2319 = vshrl.u32 %v2318, 7
        %v2320 = vsub.s32 0, %v2319
        %v2321 = vrot.slane %v1198, %v2320
        %v2322 = vlaneseq
        %v2323 = vshrl.u32 %v2322, 7
        %v2324 = vsub.s32 0, %v2323
        %v2325 = vrot.slane %v1199, %v2324
        %v2326 = vlaneseq
        %v2327 = vshrl.u32 %v2326, 7
        %v2328 = vsub.s32 0, %v2327
        %v2329 = vrot.slane %v1200, %v2328
        %v2330 = vlaneseq
        %v2331 = vshrl.u32 %v2330, 7
        %v2332 = vsub.s32 0, %v2331
        %v2333 = vrot.slane %v1201, %v2332
        %v2334 = vlaneseq
        %v2335 = vshrl.u32 %v2334, 7
        %v2336 = vsub.s32 0, %v2335
        %v2337 = vrot.slane %v1202, %v2336
        %v2338 = vlaneseq
        %v2339 = vshrl.u32 %v2338, 7
        %v2340 = vsub.s32 0, %v2339
        %v2341 = vrot.slane %v1203, %v2340
        %v2342 = vlaneseq
        %v2343 = vshrl.u32 %v2342, 7
        %v2344 = vsub.s32 0, %v2343
        %v2345 = vrot.slane %v1204, %v2344
        %v2346 = vlaneseq
        %v2347 = vshrl.u32 %v2346, 7
        %v2348 = vsub.s32 0, %v2347
        %v2349 = vrot.slane %v1205, %v2348
        %v2350 = vlaneseq
        %v2351 = vshrl.u32 %v2350, 7
        %v2352 = vsub.s32 0, %v2351
        %v2353 = vrot.slane %v1206, %v2352
        %v2354 = vlaneseq
        %v2355 = vshrl.u32 %v2354, 7
        %v2356 = vsub.s32 0, %v2355
        %v2357 = vrot.slane %v1207, %v2356
        %v2358 = vlaneseq
        %v2359 = vshrl.u32 %v2358, 7
        %v2360 = vsub.s32 0, %v2359
        %v2361 = vrot.slane %v1208, %v2360
        %v2362 = vmul.f32 %v872, %v2301
        %v2363 = vmul.f32 %v874, %v2305
        %v2364 = vmul.f32 %v915, %v2309
        %v2365 = vmul.f32 %v917, %v2313
        %v2366 = vmul.f32 %v958, %v2317
        %v2367 = vmul.f32 %v960, %v2321
        %v2368 = vmul.f32 %v1001, %v2325
        %v2369 = vmul.f32 %v1003, %v2329
        %v2370 = vmul.f32 %v1044, %v2333
        %v2371 = vmul.f32 %v1046, %v2337
        %v2372 = vmul.f32 %v1087, %v2341
        %v2373 = vmul.f32 %v1089, %v2345
        %v2374 = vmul.f32 %v1130, %v2349
        %v2375 = vmul.f32 %v1132, %v2353
        %v2376 = vmul.f32 %v1173, %v2357
        %v2377 = vmul.f32 %v1175, %v2361
        %v2378 = vadd.f32 %v2282, %v2362
        %v2379 = vadd.f32 %v2283, %v2363
        %v2380 = vadd.f32 %v2284, %v2364
        %v2381 = vadd.f32 %v2285, %v2365
        %v2382 = vadd.f32 %v2286, %v2366
        %v2383 = vadd.f32 %v2287, %v2367
        %v2384 = vadd.f32 %v2288, %v2368
        %v2385 = vadd.f32 %v2289, %v2369
        %v2386 = vadd.f32 %v2290, %v2370
        %v2387 = vadd.f32 %v2291, %v2371
        %v2388 = vadd.f32 %v2292, %v2372
        %v2389 = vadd.f32 %v2293, %v2373
        %v2390 = vadd.f32 %v2294, %v2374
        %v2391 = vadd.f32 %v2295, %v2375
        %v2392 = vadd.f32 %v2296, %v2376
        %v2393 = vadd.f32 %v2297, %v2377
        %v2394 = vld [vmem:[#allocation10] sm:$0xff]
        %v2395 = vld [vmem:[#allocation10 + $0x8] sm:$0xff]
        %v2398 = vlaneseq
        %v2399 = vshrl.u32 %v2398, 7
        %v2400 = vsub.s32 0, %v2399
        %v2401 = vrot.slane %v2394, %v2400
        %v2402 = vlaneseq
        %v2403 = vshrl.u32 %v2402, 7
        %v2404 = vsub.s32 1, %v2403
        %v2405 = vrot.slane %v2394, %v2404
        %v2406 = vlaneseq
        %v2407 = vshrl.u32 %v2406, 7
        %v2408 = vsub.s32 2, %v2407
        %v2409 = vrot.slane %v2394, %v2408
        %v2410 = vlaneseq
        %v2411 = vshrl.u32 %v2410, 7
        %v2412 = vsub.s32 3, %v2411
        %v2413 = vrot.slane %v2394, %v2412
        %v2414 = vlaneseq
        %v2415 = vshrl.u32 %v2414, 7
        %v2416 = vsub.s32 4, %v2415
        %v2417 = vrot.slane %v2394, %v2416
        %v2418 = vlaneseq
        %v2419 = vshrl.u32 %v2418, 7
        %v2420 = vsub.s32 5, %v2419
        %v2421 = vrot.slane %v2394, %v2420
        %v2422 = vlaneseq
        %v2423 = vshrl.u32 %v2422, 7
        %v2424 = vsub.s32 6, %v2423
        %v2425 = vrot.slane %v2394, %v2424
        %v2426 = vlaneseq
        %v2427 = vshrl.u32 %v2426, 7
        %v2428 = vsub.s32 7, %v2427
        %v2429 = vrot.slane %v2394, %v2428
        %v2430 = vlaneseq
        %v2431 = vshrl.u32 %v2430, 7
        %v2432 = vsub.s32 0, %v2431
        %v2433 = vrot.slane %v2395, %v2432
        %v2434 = vlaneseq
        %v2435 = vshrl.u32 %v2434, 7
        %v2436 = vsub.s32 1, %v2435
        %v2437 = vrot.slane %v2395, %v2436
        %v2438 = vlaneseq
        %v2439 = vshrl.u32 %v2438, 7
        %v2440 = vsub.s32 2, %v2439
        %v2441 = vrot.slane %v2395, %v2440
        %v2442 = vlaneseq
        %v2443 = vshrl.u32 %v2442, 7
        %v2444 = vsub.s32 3, %v2443
        %v2445 = vrot.slane %v2395, %v2444
        %v2446 = vlaneseq
        %v2447 = vshrl.u32 %v2446, 7
        %v2448 = vsub.s32 4, %v2447
        %v2449 = vrot.slane %v2395, %v2448
        %v2450 = vlaneseq
        %v2451 = vshrl.u32 %v2450, 7
        %v2452 = vsub.s32 5, %v2451
        %v2453 = vrot.slane %v2395, %v2452
        %v2454 = vlaneseq
        %v2455 = vshrl.u32 %v2454, 7
        %v2456 = vsub.s32 6, %v2455
        %v2457 = vrot.slane %v2395, %v2456
        %v2458 = vlaneseq
        %v2459 = vshrl.u32 %v2458, 7
        %v2460 = vsub.s32 7, %v2459
        %v2461 = vrot.slane %v2395, %v2460
        %v2478 = vadd.f32 %v2378, %v2401
        %v2479 = vadd.f32 %v2379, %v2405
        %v2480 = vadd.f32 %v2380, %v2409
        %v2481 = vadd.f32 %v2381, %v2413
        %v2482 = vadd.f32 %v2382, %v2417
        %v2483 = vadd.f32 %v2383, %v2421
        %v2484 = vadd.f32 %v2384, %v2425
        %v2485 = vadd.f32 %v2385, %v2429
        %v2486 = vadd.f32 %v2386, %v2433
        %v2487 = vadd.f32 %v2387, %v2437
        %v2488 = vadd.f32 %v2388, %v2441
        %v2489 = vadd.f32 %v2389, %v2445
        %v2490 = vadd.f32 %v2390, %v2449
        %v2491 = vadd.f32 %v2391, %v2453
        %v2492 = vadd.f32 %v2392, %v2457
        %v2493 = vadd.f32 %v2393, %v2461
        %v2494 = vmax.f32 %v2478, 0.0
        %v2495 = vmax.f32 %v2479, 0.0
        %v2496 = vmax.f32 %v2480, 0.0
        %v2497 = vmax.f32 %v2481, 0.0
        %v2498 = vmax.f32 %v2482, 0.0
        %v2499 = vmax.f32 %v2483, 0.0
        %v2500 = vmax.f32 %v2484, 0.0
        %v2501 = vmax.f32 %v2485, 0.0
        %v2502 = vmax.f32 %v2486, 0.0
        %v2503 = vmax.f32 %v2487, 0.0
        %v2504 = vmax.f32 %v2488, 0.0
        %v2505 = vmax.f32 %v2489, 0.0
        %v2506 = vmax.f32 %v2490, 0.0
        %v2507 = vmax.f32 %v2491, 0.0
        %v2508 = vmax.f32 %v2492, 0.0
        %v2509 = vmax.f32 %v2493, 0.0
        %v2526 = vcombine.low %v2494, %v2495
        %v2527 = vcombine.high %v2494, %v2495
        %v2528 = vcombine.low %v2496, %v2497
        %v2529 = vcombine.high %v2496, %v2497
        %v2530 = vcombine.low %v2498, %v2499
        %v2531 = vcombine.high %v2498, %v2499
        %v2532 = vcombine.low %v2500, %v2501
        %v2533 = vcombine.high %v2500, %v2501
        %v2535 = vunpack.c.l.s4 1966171168
        %v2536 = vunpack.c.0.s8 %v2535
        %v2537 = vlaneseq
        %v2538 = vshrl.u32 %v2537, 7
        %v2539 = vsub.s32 %v2536, %v2538
        %v2540 = vrot.slane %v2526, %v2539
        %v2542 = vunpack.c.l.s4 1966171168
        %v2543 = vunpack.c.0.s8 %v2542
        %v2544 = vlaneseq
        %v2545 = vshrl.u32 %v2544, 7
        %v2546 = vsub.s32 %v2543, %v2545
        %v2547 = vrot.slane %v2527, %v2546
        %v2549 = vunpack.c.l.s4 1966171168
        %v2550 = vunpack.c.0.s8 %v2549
        %v2551 = vlaneseq
        %v2552 = vshrl.u32 %v2551, 7
        %v2553 = vsub.s32 %v2550, %v2552
        %v2554 = vrot.slane %v2528, %v2553
        %v2556 = vunpack.c.l.s4 1966171168
        %v2557 = vunpack.c.0.s8 %v2556
        %v2558 = vlaneseq
        %v2559 = vshrl.u32 %v2558, 7
        %v2560 = vsub.s32 %v2557, %v2559
        %v2561 = vrot.slane %v2529, %v2560
        %v2563 = vunpack.c.l.s4 1966171168
        %v2564 = vunpack.c.0.s8 %v2563
        %v2565 = vlaneseq
        %v2566 = vshrl.u32 %v2565, 7
        %v2567 = vsub.s32 %v2564, %v2566
        %v2568 = vrot.slane %v2530, %v2567
        %v2570 = vunpack.c.l.s4 1966171168
        %v2571 = vunpack.c.0.s8 %v2570
        %v2572 = vlaneseq
        %v2573 = vshrl.u32 %v2572, 7
        %v2574 = vsub.s32 %v2571, %v2573
        %v2575 = vrot.slane %v2531, %v2574
        %v2577 = vunpack.c.l.s4 1966171168
        %v2578 = vunpack.c.0.s8 %v2577
        %v2579 = vlaneseq
        %v2580 = vshrl.u32 %v2579, 7
        %v2581 = vsub.s32 %v2578, %v2580
        %v2582 = vrot.slane %v2532, %v2581
        %v2584 = vunpack.c.l.s4 1966171168
        %v2585 = vunpack.c.0.s8 %v2584
        %v2586 = vlaneseq
        %v2587 = vshrl.u32 %v2586, 7
        %v2588 = vsub.s32 %v2585, %v2587
        %v2589 = vrot.slane %v2533, %v2588
        %v2590 = vcombine.low %v2540, %v2554
        %v2591 = vcombine.high %v2540, %v2554
        %v2592 = vcombine.low %v2547, %v2561
        %v2593 = vcombine.high %v2547, %v2561
        %v2594 = vcombine.low %v2568, %v2582
        %v2595 = vcombine.high %v2568, %v2582
        %v2596 = vcombine.low %v2575, %v2589
        %v2597 = vcombine.high %v2575, %v2589
        %v2599 = vunpack.c.l.s4 1966171168
        %v2600 = vunpack.c.0.s8 %v2599
        %v2601 = vlaneseq
        %v2602 = vshrl.u32 %v2601, 7
        %v2603 = vsub.s32 %v2600, %v2602
        %v2604 = vrot.slane %v2590, %v2603
        %v2606 = vunpack.c.l.s4 1966171168
        %v2607 = vunpack.c.0.s8 %v2606
        %v2608 = vlaneseq
        %v2609 = vshrl.u32 %v2608, 7
        %v2610 = vsub.s32 %v2607, %v2609
        %v2611 = vrot.slane %v2592, %v2610
        %v2613 = vunpack.c.l.s4 1966171168
        %v2614 = vunpack.c.0.s8 %v2613
        %v2615 = vlaneseq
        %v2616 = vshrl.u32 %v2615, 7
        %v2617 = vsub.s32 %v2614, %v2616
        %v2618 = vrot.slane %v2591, %v2617
        %v2620 = vunpack.c.l.s4 1966171168
        %v2621 = vunpack.c.0.s8 %v2620
        %v2622 = vlaneseq
        %v2623 = vshrl.u32 %v2622, 7
        %v2624 = vsub.s32 %v2621, %v2623
        %v2625 = vrot.slane %v2593, %v2624
        %v2627 = vunpack.c.l.s4 1966171168
        %v2628 = vunpack.c.0.s8 %v2627
        %v2629 = vlaneseq
        %v2630 = vshrl.u32 %v2629, 7
        %v2631 = vsub.s32 %v2628, %v2630
        %v2632 = vrot.slane %v2594, %v2631
        %v2634 = vunpack.c.l.s4 1966171168
        %v2635 = vunpack.c.0.s8 %v2634
        %v2636 = vlaneseq
        %v2637 = vshrl.u32 %v2636, 7
        %v2638 = vsub.s32 %v2635, %v2637
        %v2639 = vrot.slane %v2596, %v2638
        %v2641 = vunpack.c.l.s4 1966171168
        %v2642 = vunpack.c.0.s8 %v2641
        %v2643 = vlaneseq
        %v2644 = vshrl.u32 %v2643, 7
        %v2645 = vsub.s32 %v2642, %v2644
        %v2646 = vrot.slane %v2595, %v2645
        %v2648 = vunpack.c.l.s4 1966171168
        %v2649 = vunpack.c.0.s8 %v2648
        %v2650 = vlaneseq
        %v2651 = vshrl.u32 %v2650, 7
        %v2652 = vsub.s32 %v2649, %v2651
        %v2653 = vrot.slane %v2597, %v2652
        %v2654 = vcombine.low %v2604, %v2632
        %v2655 = vcombine.high %v2604, %v2632
        %v2656 = vcombine.low %v2611, %v2639
        %v2657 = vcombine.high %v2611, %v2639
        %v2658 = vcombine.low %v2618, %v2646
        %v2659 = vcombine.high %v2618, %v2646
        %v2660 = vcombine.low %v2625, %v2653
        %v2661 = vcombine.high %v2625, %v2653
        %v2662 = vcombine.low %v2502, %v2503
        %v2663 = vcombine.high %v2502, %v2503
        %v2664 = vcombine.low %v2504, %v2505
        %v2665 = vcombine.high %v2504, %v2505
        %v2666 = vcombine.low %v2506, %v2507
        %v2667 = vcombine.high %v2506, %v2507
        %v2668 = vcombine.low %v2508, %v2509
        %v2669 = vcombine.high %v2508, %v2509
        %v2671 = vunpack.c.l.s4 1966171168
        %v2672 = vunpack.c.0.s8 %v2671
        %v2673 = vlaneseq
        %v2674 = vshrl.u32 %v2673, 7
        %v2675 = vsub.s32 %v2672, %v2674
        %v2676 = vrot.slane %v2662, %v2675
        %v2678 = vunpack.c.l.s4 1966171168
        %v2679 = vunpack.c.0.s8 %v2678
        %v2680 = vlaneseq
        %v2681 = vshrl.u32 %v2680, 7
        %v2682 = vsub.s32 %v2679, %v2681
        %v2683 = vrot.slane %v2663, %v2682
        %v2685 = vunpack.c.l.s4 1966171168
        %v2686 = vunpack.c.0.s8 %v2685
        %v2687 = vlaneseq
        %v2688 = vshrl.u32 %v2687, 7
        %v2689 = vsub.s32 %v2686, %v2688
        %v2690 = vrot.slane %v2664, %v2689
        %v2692 = vunpack.c.l.s4 1966171168
        %v2693 = vunpack.c.0.s8 %v2692
        %v2694 = vlaneseq
        %v2695 = vshrl.u32 %v2694, 7
        %v2696 = vsub.s32 %v2693, %v2695
        %v2697 = vrot.slane %v2665, %v2696
        %v2699 = vunpack.c.l.s4 1966171168
        %v2700 = vunpack.c.0.s8 %v2699
        %v2701 = vlaneseq
        %v2702 = vshrl.u32 %v2701, 7
        %v2703 = vsub.s32 %v2700, %v2702
        %v2704 = vrot.slane %v2666, %v2703
        %v2706 = vunpack.c.l.s4 1966171168
        %v2707 = vunpack.c.0.s8 %v2706
        %v2708 = vlaneseq
        %v2709 = vshrl.u32 %v2708, 7
        %v2710 = vsub.s32 %v2707, %v2709
        %v2711 = vrot.slane %v2667, %v2710
        %v2713 = vunpack.c.l.s4 1966171168
        %v2714 = vunpack.c.0.s8 %v2713
        %v2715 = vlaneseq
        %v2716 = vshrl.u32 %v2715, 7
        %v2717 = vsub.s32 %v2714, %v2716
        %v2718 = vrot.slane %v2668, %v2717
        %v2720 = vunpack.c.l.s4 1966171168
        %v2721 = vunpack.c.0.s8 %v2720
        %v2722 = vlaneseq
        %v2723 = vshrl.u32 %v2722, 7
        %v2724 = vsub.s32 %v2721, %v2723
        %v2725 = vrot.slane %v2669, %v2724
        %v2726 = vcombine.low %v2676, %v2690
        %v2727 = vcombine.high %v2676, %v2690
        %v2728 = vcombine.low %v2683, %v2697
        %v2729 = vcombine.high %v2683, %v2697
        %v2730 = vcombine.low %v2704, %v2718
        %v2731 = vcombine.high %v2704, %v2718
        %v2732 = vcombine.low %v2711, %v2725
        %v2733 = vcombine.high %v2711, %v2725
        %v2735 = vunpack.c.l.s4 1966171168
        %v2736 = vunpack.c.0.s8 %v2735
        %v2737 = vlaneseq
        %v2738 = vshrl.u32 %v2737, 7
        %v2739 = vsub.s32 %v2736, %v2738
        %v2740 = vrot.slane %v2726, %v2739
        %v2742 = vunpack.c.l.s4 1966171168
        %v2743 = vunpack.c.0.s8 %v2742
        %v2744 = vlaneseq
        %v2745 = vshrl.u32 %v2744, 7
        %v2746 = vsub.s32 %v2743, %v2745
        %v2747 = vrot.slane %v2728, %v2746
        %v2749 = vunpack.c.l.s4 1966171168
        %v2750 = vunpack.c.0.s8 %v2749
        %v2751 = vlaneseq
        %v2752 = vshrl.u32 %v2751, 7
        %v2753 = vsub.s32 %v2750, %v2752
        %v2754 = vrot.slane %v2727, %v2753
        %v2756 = vunpack.c.l.s4 1966171168
        %v2757 = vunpack.c.0.s8 %v2756
        %v2758 = vlaneseq
        %v2759 = vshrl.u32 %v2758, 7
        %v2760 = vsub.s32 %v2757, %v2759
        %v2761 = vrot.slane %v2729, %v2760
        %v2763 = vunpack.c.l.s4 1966171168
        %v2764 = vunpack.c.0.s8 %v2763
        %v2765 = vlaneseq
        %v2766 = vshrl.u32 %v2765, 7
        %v2767 = vsub.s32 %v2764, %v2766
        %v2768 = vrot.slane %v2730, %v2767
        %v2770 = vunpack.c.l.s4 1966171168
        %v2771 = vunpack.c.0.s8 %v2770
        %v2772 = vlaneseq
        %v2773 = vshrl.u32 %v2772, 7
        %v2774 = vsub.s32 %v2771, %v2773
        %v2775 = vrot.slane %v2732, %v2774
        %v2777 = vunpack.c.l.s4 1966171168
        %v2778 = vunpack.c.0.s8 %v2777
        %v2779 = vlaneseq
        %v2780 = vshrl.u32 %v2779, 7
        %v2781 = vsub.s32 %v2778, %v2780
        %v2782 = vrot.slane %v2731, %v2781
        %v2784 = vunpack.c.l.s4 1966171168
        %v2785 = vunpack.c.0.s8 %v2784
        %v2786 = vlaneseq
        %v2787 = vshrl.u32 %v2786, 7
        %v2788 = vsub.s32 %v2785, %v2787
        %v2789 = vrot.slane %v2733, %v2788
        %v2790 = vcombine.low %v2740, %v2768
        %v2791 = vcombine.high %v2740, %v2768
        %v2792 = vcombine.low %v2747, %v2775
        %v2793 = vcombine.high %v2747, %v2775
        %v2794 = vcombine.low %v2754, %v2782
        %v2795 = vcombine.high %v2754, %v2782
        %v2796 = vcombine.low %v2761, %v2789
        %v2797 = vcombine.high %v2761, %v2789
        %v2814 = vpack.c.bf16 %v2790, %v2654
        %v2815 = vpack.c.bf16 %v2794, %v2658
        %v2816 = vpack.c.bf16 %v2791, %v2655
        %v2817 = vpack.c.bf16 %v2795, %v2659
        %v2818 = vpack.c.bf16 %v2792, %v2656
        %v2819 = vpack.c.bf16 %v2796, %v2660
        %v2820 = vpack.c.bf16 %v2793, %v2657
        %v2821 = vpack.c.bf16 %v2797, %v2661
        %v2822 = vld [vmem:[#allocation11] sm:$0xf]
        %v2823 = vld [vmem:[#allocation11 + $0x4] sm:$0xf]
        %v2824 = vld [vmem:[#allocation11 + $0x8] sm:$0xf]
        %v2825 = vld [vmem:[#allocation11 + $0xc] sm:$0xf]
        %v2826 = vld [vmem:[#allocation11 + $0x10] sm:$0xf]
        %v2827 = vld [vmem:[#allocation11 + $0x14] sm:$0xf]
        %v2828 = vld [vmem:[#allocation11 + $0x18] sm:$0xf]
        %v2829 = vld [vmem:[#allocation11 + $0x1c] sm:$0xf]
        %v2830 = vld [vmem:[#allocation11 + $0x20] sm:$0xf]
        %v2831 = vld [vmem:[#allocation11 + $0x24] sm:$0xf]
        %v2832 = vld [vmem:[#allocation11 + $0x28] sm:$0xf]
        %v2833 = vld [vmem:[#allocation11 + $0x2c] sm:$0xf]
        %v2834 = vld [vmem:[#allocation11 + $0x30] sm:$0xf]
        %v2835 = vld [vmem:[#allocation11 + $0x34] sm:$0xf]
        %v2836 = vld [vmem:[#allocation11 + $0x38] sm:$0xf]
        %v2837 = vld [vmem:[#allocation11 + $0x3c] sm:$0xf]
        %v2838 = vld [vmem:[%s6] sm:$0x1]
        %v2840 = vlaneseq
        %v2841 = vshrl.u32 %v2840, 7
        %v2842 = vsub.s32 0, %v2841
        %v2843 = vrot.slane %v2838, %v2842
        %v2861 = vunpack.c.l.b16 %v2822
        %v2862 = vunpack.c.l.b16 %v2823
        %v2863 = vunpack.c.l.b16 %v2824
        %v2864 = vunpack.c.l.b16 %v2825
        %v2865 = vunpack.c.l.b16 %v2826
        %v2866 = vunpack.c.l.b16 %v2827
        %v2867 = vunpack.c.l.b16 %v2828
        %v2868 = vunpack.c.l.b16 %v2829
        %v2869 = vunpack.c.l.b16 %v2830
        %v2870 = vunpack.c.l.b16 %v2831
        %v2871 = vunpack.c.l.b16 %v2832
        %v2872 = vunpack.c.l.b16 %v2833
        %v2873 = vunpack.c.l.b16 %v2834
        %v2874 = vunpack.c.l.b16 %v2835
        %v2875 = vunpack.c.l.b16 %v2836
        %v2876 = vunpack.c.l.b16 %v2837
        %v2877 = vpack.c.b16 %v2862, %v2861
        %v2878 = vpack.c.b16 %v2864, %v2863
        %v2879 = vpack.c.b16 %v2866, %v2865
        %v2880 = vpack.c.b16 %v2868, %v2867
        %v2881 = vpack.c.b16 %v2870, %v2869
        %v2882 = vpack.c.b16 %v2872, %v2871
        %v2883 = vpack.c.b16 %v2874, %v2873
        %v2884 = vpack.c.b16 %v2876, %v2875
        %2893 = vmatprep.subr.bf16.mxu0 0
        %2894 = vmatpush1.bf16.msra.mxu0 %v2877
        %2895 = vmatprep.subr.bf16.mxu0 0
        %2896 = vmatpush1.bf16.msra.mxu0 %v2878
        %2897 = vmatprep.subr.bf16.mxu0 0
        %2898 = vmatpush1.bf16.msra.mxu0 %v2879
        %2899 = vmatprep.subr.bf16.mxu0 0
        %2900 = vmatpush1.bf16.msra.mxu0 %v2880
        %2901 = vmatprep.subr.bf16.mxu0 0
        %2902 = vmatpush1.bf16.msra.mxu0 %v2881
        %2903 = vmatprep.subr.bf16.mxu0 0
        %2904 = vmatpush1.bf16.msra.mxu0 %v2882
        %2905 = vmatprep.subr.bf16.mxu0 0
        %2906 = vmatpush1.bf16.msra.mxu0 %v2883
        %2907 = vmatprep.subr.bf16.mxu0 0
        %2908 = vmatpush1.bf16.msra.mxu0 %v2884
        %2909 = vmatprep.subr.bf16.mxu0 0
        %2910 = vmatpush1.bf16.msra.mxu0 0
        %2911 = vmatprep.subr.bf16.mxu0 0
        %2912 = vmatpush1.bf16.msra.mxu0 0
        %2913 = vmatprep.subr.bf16.mxu0 0
        %2914 = vmatpush1.bf16.msra.mxu0 0
        %2915 = vmatprep.subr.bf16.mxu0 0
        %2916 = vmatpush1.bf16.msra.mxu0 0
        %2917 = vmatprep.subr.bf16.mxu0 0
        %2918 = vmatpush1.bf16.msra.mxu0 0
        %2919 = vmatprep.subr.bf16.mxu0 0
        %2920 = vmatpush1.bf16.msra.mxu0 0
        %2921 = vmatprep.subr.bf16.mxu0 0
        %2922 = vmatpush1.bf16.msra.mxu0 0
        %2923 = vmatprep.subr.bf16.mxu0 0
        %2924 = vmatpush1.bf16.msra.mxu0 0
        %2925 = vmatprep.mubr.bf16.mxu0 0
        %2926 = vmatmul.mubr.bf16.gmra.mrb[0].mxu0 %v2814
        %v2927 = vpop.f32.mrb[0].mxu0
        %v2928 = vadd.f32 %v2843, %v2927
        %v2929 = vpop.f32.mrb[0].mxu0
        %v2930 = vpop.f32.mrb[0].mxu0
        %v2931 = vadd.f32 %v2843, %v2930
        %v2932 = vpop.f32.mrb[0].mxu0
        %2933 = vmatprep.mubr.bf16.mxu0 0
        %2934 = vmatmul.mubr.bf16.gmra.mrb[0].mxu0 %v2815
        %v2935 = vpop.f32.mrb[0].mxu0
        %v2936 = vadd.f32 %v2843, %v2935
        %v2937 = vpop.f32.mrb[0].mxu0
        %v2938 = vpop.f32.mrb[0].mxu0
        %v2939 = vadd.f32 %v2843, %v2938
        %v2940 = vpop.f32.mrb[0].mxu0
        %2941 = vmatprep.mubr.bf16.mxu0 0
        %2942 = vmatmul.mubr.bf16.gmra.mrb[0].mxu0 %v2816
        %v2943 = vpop.f32.mrb[0].mxu0
        %v2944 = vadd.f32 %v2843, %v2943
        %v2945 = vpop.f32.mrb[0].mxu0
        %v2946 = vpop.f32.mrb[0].mxu0
        %v2947 = vadd.f32 %v2843, %v2946
        %v2948 = vpop.f32.mrb[0].mxu0
        %2949 = vmatprep.mubr.bf16.mxu0 0
        %2950 = vmatmul.mubr.bf16.gmra.mrb[0].mxu0 %v2817
        %v2951 = vpop.f32.mrb[0].mxu0
        %v2952 = vadd.f32 %v2843, %v2951
        %v2953 = vpop.f32.mrb[0].mxu0
        %v2954 = vpop.f32.mrb[0].mxu0
        %v2955 = vadd.f32 %v2843, %v2954
        %v2956 = vpop.f32.mrb[0].mxu0
        %2957 = vmatprep.mubr.bf16.mxu0 0
        %2958 = vmatmul.mubr.bf16.gmra.mrb[0].mxu0 %v2818
        %v2959 = vpop.f32.mrb[0].mxu0
        %v2960 = vadd.f32 %v2843, %v2959
        %v2961 = vpop.f32.mrb[0].mxu0
        %v2962 = vpop.f32.mrb[0].mxu0
        %v2963 = vadd.f32 %v2843, %v2962
        %v2964 = vpop.f32.mrb[0].mxu0
        %2965 = vmatprep.mubr.bf16.mxu0 0
        %2966 = vmatmul.mubr.bf16.gmra.mrb[0].mxu0 %v2819
        %v2967 = vpop.f32.mrb[0].mxu0
        %v2968 = vadd.f32 %v2843, %v2967
        %v2969 = vpop.f32.mrb[0].mxu0
        %v2970 = vpop.f32.mrb[0].mxu0
        %v2971 = vadd.f32 %v2843, %v2970
        %v2972 = vpop.f32.mrb[0].mxu0
        %2973 = vmatprep.mubr.bf16.mxu0 0
        %2974 = vmatmul.mubr.bf16.gmra.mrb[0].mxu0 %v2820
        %v2975 = vpop.f32.mrb[0].mxu0
        %v2976 = vadd.f32 %v2843, %v2975
        %v2977 = vpop.f32.mrb[0].mxu0
        %v2978 = vpop.f32.mrb[0].mxu0
        %v2979 = vadd.f32 %v2843, %v2978
        %v2980 = vpop.f32.mrb[0].mxu0
        %2981 = vmatprep.mubr.bf16.mxu0 0
        %2982 = vmatmul.mubr.bf16.gmra.mrb[0].mxu0 %v2821
        %v2983 = vpop.f32.mrb[0].mxu0
        %v2984 = vadd.f32 %v2843, %v2983
        %v2985 = vpop.f32.mrb[0].mxu0
        %v2986 = vpop.f32.mrb[0].mxu0
        %v2987 = vadd.f32 %v2843, %v2986
        %v2988 = vpop.f32.mrb[0].mxu0
        %2989 = vdwg.mxu0
        %v2990 = vld [vmem:[%s442] sm:$0xf]
        %v2991 = vld [vmem:[%s442 + $0x4] sm:$0xf]
        %v2992 = vld [vmem:[%s442 + $0x8] sm:$0xf]
        %v2993 = vld [vmem:[%s442 + $0xc] sm:$0xf]
        %v2994 = vld [vmem:[%s442 + $0x10] sm:$0xf]
        %v2995 = vld [vmem:[%s442 + $0x14] sm:$0xf]
        %v2996 = vld [vmem:[%s442 + $0x18] sm:$0xf]
        %v2997 = vld [vmem:[%s442 + $0x1c] sm:$0xf]
        %v2998 = vld [vmem:[%s442 + $0x20] sm:$0xf]
        %v2999 = vld [vmem:[%s442 + $0x24] sm:$0xf]
        %v3000 = vld [vmem:[%s442 + $0x28] sm:$0xf]
        %v3001 = vld [vmem:[%s442 + $0x2c] sm:$0xf]
        %v3002 = vld [vmem:[%s442 + $0x30] sm:$0xf]
        %v3003 = vld [vmem:[%s442 + $0x34] sm:$0xf]
        %v3004 = vld [vmem:[%s442 + $0x38] sm:$0xf]
        %v3005 = vld [vmem:[%s442 + $0x3c] sm:$0xf]
        %v3006 = vld [vmem:[#allocation13] sm:$0xf]
        %v3007 = vld [vmem:[#allocation13 + $0x4] sm:$0xf]
        %v3008 = vld [vmem:[#allocation13 + $0x8] sm:$0xf]
        %v3009 = vld [vmem:[#allocation13 + $0xc] sm:$0xf]
        %v3010 = vld [vmem:[#allocation13 + $0x10] sm:$0xf]
        %v3011 = vld [vmem:[#allocation13 + $0x14] sm:$0xf]
        %v3012 = vld [vmem:[#allocation13 + $0x18] sm:$0xf]
        %v3013 = vld [vmem:[#allocation13 + $0x1c] sm:$0xf]
        %v3014 = vld [vmem:[%s8] sm:$0x1]
        %v3016 = vlaneseq
        %v3017 = vshrl.u32 %v3016, 7
        %v3018 = vsub.s32 0, %v3017
        %v3019 = vrot.slane %v3014, %v3018
        %v3037 = vunpack.c.l.b16 %v2990
        %v3038 = vunpack.c.l.b16 %v2991
        %v3039 = vunpack.c.l.b16 %v2992
        %v3040 = vunpack.c.l.b16 %v2993
        %v3041 = vunpack.c.l.b16 %v2994
        %v3042 = vunpack.c.l.b16 %v2995
        %v3043 = vunpack.c.l.b16 %v2996
        %v3044 = vunpack.c.l.b16 %v2997
        %v3045 = vunpack.c.l.b16 %v2998
        %v3046 = vunpack.c.l.b16 %v2999
        %v3047 = vunpack.c.l.b16 %v3000
        %v3048 = vunpack.c.l.b16 %v3001
        %v3049 = vunpack.c.l.b16 %v3002
        %v3050 = vunpack.c.l.b16 %v3003
        %v3051 = vunpack.c.l.b16 %v3004
        %v3052 = vunpack.c.l.b16 %v3005
        %v3053 = vpack.c.b16 %v3038, %v3037
        %v3054 = vpack.c.b16 %v3040, %v3039
        %v3055 = vpack.c.b16 %v3042, %v3041
        %v3056 = vpack.c.b16 %v3044, %v3043
        %v3057 = vpack.c.b16 %v3046, %v3045
        %v3058 = vpack.c.b16 %v3048, %v3047
        %v3059 = vpack.c.b16 %v3050, %v3049
        %v3060 = vpack.c.b16 %v3052, %v3051
        %v3069 = vunpack.c.l.b16 %v3006
        %v3070 = vunpack.c.l.b16 %v3007
        %v3071 = vunpack.c.l.b16 %v3008
        %v3072 = vunpack.c.l.b16 %v3009
        %v3073 = vunpack.c.l.b16 %v3010
        %v3074 = vunpack.c.l.b16 %v3011
        %v3075 = vunpack.c.l.b16 %v3012
        %v3076 = vunpack.c.l.b16 %v3013
        %v3077 = vpack.c.b16 %v3070, %v3069
        %v3078 = vpack.c.b16 %v3072, %v3071
        %v3079 = vpack.c.b16 %v3074, %v3073
        %v3080 = vpack.c.b16 %v3076, %v3075
        %vm3085 = vcmask 523264
        %v3087 = vsel %vm3085, %v3053, 0
        %v3090 = vsel %vm3085, %v3054, 0
        %v3093 = vsel %vm3085, %v3055, 0
        %v3096 = vsel %vm3085, %v3056, 0
        %v3099 = vsel %vm3085, %v3057, 0
        %v3102 = vsel %vm3085, %v3058, 0
        %v3105 = vsel %vm3085, %v3059, 0
        %v3108 = vsel %vm3085, %v3060, 0
        %3110 = vmatprep.subr.bf16.mxu0 0
        %3111 = vmatpush1.bf16.msra.mxu0 %v3077
        %3112 = vmatprep.subr.bf16.mxu0 0
        %3113 = vmatpush1.bf16.msra.mxu0 %v3078
        %3114 = vmatprep.subr.bf16.mxu0 0
        %3115 = vmatpush1.bf16.msra.mxu0 %v3079
        %3116 = vmatprep.subr.bf16.mxu0 0
        %3117 = vmatpush1.bf16.msra.mxu0 %v3080
        %3118 = vmatprep.subr.bf16.mxu0 0
        %3119 = vmatpush1.bf16.msra.mxu0 0
        %3120 = vmatprep.subr.bf16.mxu0 0
        %3121 = vmatpush1.bf16.msra.mxu0 0
        %3122 = vmatprep.subr.bf16.mxu0 0
        %3123 = vmatpush1.bf16.msra.mxu0 0
        %3124 = vmatprep.subr.bf16.mxu0 0
        %3125 = vmatpush1.bf16.msra.mxu0 0
        %3126 = vmatprep.subr.bf16.mxu0 0
        %3127 = vmatpush1.bf16.msra.mxu0 0
        %3128 = vmatprep.subr.bf16.mxu0 0
        %3129 = vmatpush1.bf16.msra.mxu0 0
        %3130 = vmatprep.subr.bf16.mxu0 0
        %3131 = vmatpush1.bf16.msra.mxu0 0
        %3132 = vmatprep.subr.bf16.mxu0 0
        %3133 = vmatpush1.bf16.msra.mxu0 0
        %3134 = vmatprep.subr.bf16.mxu0 0
        %3135 = vmatpush1.bf16.msra.mxu0 0
        %3136 = vmatprep.subr.bf16.mxu0 0
        %3137 = vmatpush1.bf16.msra.mxu0 0
        %3138 = vmatprep.subr.bf16.mxu0 0
        %3139 = vmatpush1.bf16.msra.mxu0 0
        %3140 = vmatprep.subr.bf16.mxu0 0
        %3141 = vmatpush1.bf16.msra.mxu0 0
        %3142 = vmatprep.mubr.bf16.mxu0 0
        %3143 = vmatmul.mubr.bf16.gmra.mrb[0].mxu0 %v3087
        %v3144 = vpop.f32.mrb[0].mxu0
        %v3145 = vadd.f32 %v3019, %v3144
        %v3146 = vpop.f32.mrb[0].mxu0
        %v3147 = vpop.f32.mrb[0].mxu0
        %v3148 = vadd.f32 %v3019, %v3147
        %v3149 = vpop.f32.mrb[0].mxu0
        %3150 = vmatprep.mubr.bf16.mxu0 0
        %3151 = vmatmul.mubr.bf16.gmra.mrb[0].mxu0 %v3090
        %v3152 = vpop.f32.mrb[0].mxu0
        %v3153 = vadd.f32 %v3019, %v3152
        %v3154 = vpop.f32.mrb[0].mxu0
        %v3155 = vpop.f32.mrb[0].mxu0
        %v3156 = vadd.f32 %v3019, %v3155
        %v3157 = vpop.f32.mrb[0].mxu0
        %3158 = vmatprep.mubr.bf16.mxu0 0
        %3159 = vmatmul.mubr.bf16.gmra.mrb[0].mxu0 %v3093
        %v3160 = vpop.f32.mrb[0].mxu0
        %v3161 = vadd.f32 %v3019, %v3160
        %v3162 = vpop.f32.mrb[0].mxu0
        %v3163 = vpop.f32.mrb[0].mxu0
        %v3164 = vadd.f32 %v3019, %v3163
        %v3165 = vpop.f32.mrb[0].mxu0
        %3166 = vmatprep.mubr.bf16.mxu0 0
        %3167 = vmatmul.mubr.bf16.gmra.mrb[0].mxu0 %v3096
        %v3168 = vpop.f32.mrb[0].mxu0
        %v3169 = vadd.f32 %v3019, %v3168
        %v3170 = vpop.f32.mrb[0].mxu0
        %v3171 = vpop.f32.mrb[0].mxu0
        %v3172 = vadd.f32 %v3019, %v3171
        %v3173 = vpop.f32.mrb[0].mxu0
        %3174 = vmatprep.mubr.bf16.mxu0 0
        %3175 = vmatmul.mubr.bf16.gmra.mrb[0].mxu0 %v3099
        %v3176 = vpop.f32.mrb[0].mxu0
        %v3177 = vadd.f32 %v3019, %v3176
        %v3178 = vpop.f32.mrb[0].mxu0
        %v3179 = vpop.f32.mrb[0].mxu0
        %v3180 = vadd.f32 %v3019, %v3179
        %v3181 = vpop.f32.mrb[0].mxu0
        %3182 = vmatprep.mubr.bf16.mxu0 0
        %3183 = vmatmul.mubr.bf16.gmra.mrb[0].mxu0 %v3102
        %v3184 = vpop.f32.mrb[0].mxu0
        %v3185 = vadd.f32 %v3019, %v3184
        %v3186 = vpop.f32.mrb[0].mxu0
        %v3187 = vpop.f32.mrb[0].mxu0
        %v3188 = vadd.f32 %v3019, %v3187
        %v3189 = vpop.f32.mrb[0].mxu0
        %3190 = vmatprep.mubr.bf16.mxu0 0
        %3191 = vmatmul.mubr.bf16.gmra.mrb[0].mxu0 %v3105
        %v3192 = vpop.f32.mrb[0].mxu0
        %v3193 = vadd.f32 %v3019, %v3192
        %v3194 = vpop.f32.mrb[0].mxu0
        %v3195 = vpop.f32.mrb[0].mxu0
        %v3196 = vadd.f32 %v3019, %v3195
        %v3197 = vpop.f32.mrb[0].mxu0
        %3198 = vmatprep.mubr.bf16.mxu0 0
        %3199 = vmatmul.mubr.bf16.gmra.mrb[0].mxu0 %v3108
        %v3200 = vpop.f32.mrb[0].mxu0
        %v3201 = vadd.f32 %v3019, %v3200
        %v3202 = vpop.f32.mrb[0].mxu0
        %v3203 = vpop.f32.mrb[0].mxu0
        %v3204 = vadd.f32 %v3019, %v3203
        %v3205 = vpop.f32.mrb[0].mxu0
        %3206 = vdwg.mxu0
        %v3207 = vadd.f32 %v2928, %v3145
        %v3208 = vadd.f32 %v2931, %v3148
        %v3209 = vadd.f32 %v2936, %v3153
        %v3210 = vadd.f32 %v2939, %v3156
        %v3211 = vadd.f32 %v2944, %v3161
        %v3212 = vadd.f32 %v2947, %v3164
        %v3213 = vadd.f32 %v2952, %v3169
        %v3214 = vadd.f32 %v2955, %v3172
        %v3215 = vadd.f32 %v2960, %v3177
        %v3216 = vadd.f32 %v2963, %v3180
        %v3217 = vadd.f32 %v2968, %v3185
        %v3218 = vadd.f32 %v2971, %v3188
        %v3219 = vadd.f32 %v2976, %v3193
        %v3220 = vadd.f32 %v2979, %v3196
        %v3221 = vadd.f32 %v2984, %v3201
        %v3222 = vadd.f32 %v2987, %v3204
        %v3223 = vmax.f32 %v3207, 0.0
        %v3224 = vmax.f32 %v3208, 0.0
        %v3225 = vmax.f32 %v3209, 0.0
        %v3226 = vmax.f32 %v3210, 0.0
        %v3227 = vmax.f32 %v3211, 0.0
        %v3228 = vmax.f32 %v3212, 0.0
        %v3229 = vmax.f32 %v3213, 0.0
        %v3230 = vmax.f32 %v3214, 0.0
        %v3231 = vmax.f32 %v3215, 0.0
        %v3232 = vmax.f32 %v3216, 0.0
        %v3233 = vmax.f32 %v3217, 0.0
        %v3234 = vmax.f32 %v3218, 0.0
        %v3235 = vmax.f32 %v3219, 0.0
        %v3236 = vmax.f32 %v3220, 0.0
        %v3237 = vmax.f32 %v3221, 0.0
        %v3238 = vmax.f32 %v3222, 0.0
        %v3239 = vpack.c.bf16 %v3224, %v3223
        %v3240 = vpack.c.bf16 %v3226, %v3225
        %v3241 = vpack.c.bf16 %v3228, %v3227
        %v3242 = vpack.c.bf16 %v3230, %v3229
        %v3243 = vpack.c.bf16 %v3232, %v3231
        %v3244 = vpack.c.bf16 %v3234, %v3233
        %v3245 = vpack.c.bf16 %v3236, %v3235
        %v3246 = vpack.c.bf16 %v3238, %v3237
        %v3255 = vunpack.c.l.b16 %v3239
        %v3256 = vunpack.c.h.b16 %v3239
        %v3257 = vunpack.c.l.b16 %v3240
        %v3258 = vunpack.c.h.b16 %v3240
        %v3259 = vunpack.c.l.b16 %v3241
        %v3260 = vunpack.c.h.b16 %v3241
        %v3261 = vunpack.c.l.b16 %v3242
        %v3262 = vunpack.c.h.b16 %v3242
        %v3263 = vunpack.c.l.b16 %v3243
        %v3264 = vunpack.c.h.b16 %v3243
        %v3265 = vunpack.c.l.b16 %v3244
        %v3266 = vunpack.c.h.b16 %v3244
        %v3267 = vunpack.c.l.b16 %v3245
        %v3268 = vunpack.c.h.b16 %v3245
        %v3269 = vunpack.c.l.b16 %v3246
        %v3270 = vunpack.c.h.b16 %v3246
        %v3271 = vpack.c.b16 %v3255, %v3255
        %v3272 = vpack.c.b16 %v3256, %v3256
        %v3273 = vpack.c.b16 %v3257, %v3257
        %v3274 = vpack.c.b16 %v3258, %v3258
        %v3275 = vpack.c.b16 %v3259, %v3259
        %v3276 = vpack.c.b16 %v3260, %v3260
        %v3277 = vpack.c.b16 %v3261, %v3261
        %v3278 = vpack.c.b16 %v3262, %v3262
        %v3279 = vpack.c.b16 %v3263, %v3263
        %v3280 = vpack.c.b16 %v3264, %v3264
        %v3281 = vpack.c.b16 %v3265, %v3265
        %v3282 = vpack.c.b16 %v3266, %v3266
        %v3283 = vpack.c.b16 %v3267, %v3267
        %v3284 = vpack.c.b16 %v3268, %v3268
        %v3285 = vpack.c.b16 %v3269, %v3269
        %v3286 = vpack.c.b16 %v3270, %v3270
        %3303 = vst [vmem:[%s502] sm:$0xf] %v3271
        %3304 = vst [vmem:[%s502 + $0x4] sm:$0xf] %v3272
        %3305 = vst [vmem:[%s502 + $0x8] sm:$0xf] %v3273
        %3306 = vst [vmem:[%s502 + $0xc] sm:$0xf] %v3274
        %3307 = vst [vmem:[%s502 + $0x10] sm:$0xf] %v3275
        %3308 = vst [vmem:[%s502 + $0x14] sm:$0xf] %v3276
        %3309 = vst [vmem:[%s502 + $0x18] sm:$0xf] %v3277
        %3310 = vst [vmem:[%s502 + $0x1c] sm:$0xf] %v3278
        %3311 = vst [vmem:[%s502 + $0x20] sm:$0xf] %v3279
        %3312 = vst [vmem:[%s502 + $0x24] sm:$0xf] %v3280
        %3313 = vst [vmem:[%s502 + $0x28] sm:$0xf] %v3281
        %3314 = vst [vmem:[%s502 + $0x2c] sm:$0xf] %v3282
        %3315 = vst [vmem:[%s502 + $0x30] sm:$0xf] %v3283
        %3316 = vst [vmem:[%s502 + $0x34] sm:$0xf] %v3284
        %3317 = vst [vmem:[%s502 + $0x38] sm:$0xf] %v3285
        %3318 = vst [vmem:[%s502 + $0x3c] sm:$0xf] %v3286
        %s3319 = sand.u32 %s259, 1
        %s3320 = scalar_lea.sflag [#allocation4], %s3319
        %s3321 = sand.u32 %s259, 1
        %s3322 = smul.addr %s3321, 64
        %s3323 = scalar_lea.vmem [#allocation14], %s3322
        // Predicated region
        $region85: #{tpu_custom_call.1} parent=55 // pred_check
          %p3324 = pneg %p269
        $region86: #{tpu_custom_call.1} parent=55 // pred_check_branch
          %3326 = sbr.rel (%p3324) target = $region88
        $region87: #{tpu_custom_call.1} parent=55 // pred_region
          %s3327 = smul.u32 8, %s36
          %s3329 = ssub.s32 1024, 1024
          %3330 = vsyncadd %s3320, %s3329
          %s3331 = smul.addr %s3327, 2
          %s3332 = smul.addr %s35, 32
          %s3333 = sadd.s32 %s3331, %s3332
          %s3334 = smul.addr %s3333, 64
          %s3335 = scalar_lea.hbm %s9, %s3334
          %s3336 = sshll.u32 %s3323, 4
          %s3337 = int_to_ptr.vmem [resolvable:$true] %s3336
          %3342 = dma.vmem_to_hbm [thread:$0]  %s3337, 1024, %s3335, %s3320, 64, 64, 4
        $region88: #{tpu_custom_call.1} parent=55 // pred_fallthru
          _
      $region56: #{tpu_custom_call.1} parent=5 // pred_fallthru
        _
      %p3343 = scmp.le.s32.totalorder 2, %s26
      // Predicated region
      $region89: #{tpu_custom_call.1} parent=5 // pred_check
        %p3344 = pneg %p3343
      $region90: #{tpu_custom_call.1} parent=5 // pred_check_branch
        %3346 = sbr.rel (%p3344) target = $region92
      $region91: #{tpu_custom_call.1} parent=5 // pred_region
        %s3347 = ssub.s32 %s26, 2
        // Predicated region
        $region93: #{tpu_custom_call.1} parent=91 // pred_check
          %p3348 = pneg %p275
        $region94: #{tpu_custom_call.1} parent=91 // pred_check_branch
          %3350 = sbr.rel (%p3348) target = $region96
        $region95: #{tpu_custom_call.1} parent=91 // pred_region
          %s3351 = sand.u32 %s260, 1
          %s3352 = scalar_lea.sflag [#allocation4], %s3351
          %s3353 = sand.u32 %s260, 1
          %s3354 = smul.addr %s3353, 64
          %s3355 = scalar_lea.vmem [#allocation14], %s3354
          %3356 = dma.done %s3352, 1024
        $region96: #{tpu_custom_call.1} parent=91 // pred_fallthru
          _
      $region92: #{tpu_custom_call.1} parent=5 // pred_fallthru
        _
    $region6: #{tpu_custom_call.1} parent=1 // loop_footer
      %s30 = sadd.s32 1, %s26
    $region7: #{tpu_custom_call.1} parent=1 // loop_footer_branch
      %25 = sbr.rel target = $region3
    $region8: #{tpu_custom_call.1} parent=1 // loop_exit
      _
    %3357 = vsyncpa [#allocation3], 1
    %s3358 = scalar_lea.sflag [#allocation3], 1
    %3359 = vsyncpa %s3358, 1
    %3360 = vsyncpa [#allocation6], 1
    %s3361 = scalar_lea.sflag [#allocation6], 1
    %3362 = vsyncpa %s3361, 1
    %3363 = vsyncpa [#allocation9], 1
    %3364 = vsyncpa [#allocation12], 1
    %3365 = vsyncpa [#allocation4], 1
    %s3366 = scalar_lea.sflag [#allocation4], 1
    %3367 = vsyncpa %s3366, 1

</llo_original>
